<compile_context>
chip_gen: v6e
topology: v6e:2x2x1
jax: 0.10.0
libtpu: 0.0.40
codegen_flags: <defaults>
</compile_context>

<pallas_src>
import jax
import jax.numpy as jnp
from jax.experimental import pallas as pl
from jax.experimental.pallas import tpu as pltpu

HIDDEN = 512


# ------------------------------ Pallas kernel --------------------------------

def _fused_sampler_kernel(feat_ref, mult_ref,
                          w1_ref, b1_ref, w2_ref, b2_ref, w3_ref, b3_ref,
                          w4_ref, b4_ref, w5_ref, b5_ref,
                          o_ref, h1_acc_ref):
    """Whole sampler head in one kernel, grid = (num_k_tiles,) over w1 rows.

    feat_ref : (N, tk)      f32   K-tile of flattened [kspace_nhwc | mask]
    mult_ref : (N, 2*W)     f32   1 - [vertical_mask | horizontal_mask]
    w1_ref   : (tk, 512)    bf16  K-tile of layer-1 weight (rows in NHWC order)
    wK_ref   : (din, dout)  bf16  remaining Linear weights (x @ W layout)
    bK_ref   : (1, dout)    f32
    o_ref    : (N, 2*W)     f32
    h1_acc   : (N, 512)     f32   VMEM scratch: layer-1 pre-activation accumulator
    """
    k = pl.program_id(0)

    @pl.when(k == 0)
    def _init():
        h1_acc_ref[...] = jnp.zeros_like(h1_acc_ref)

    # Layer-1 partial matmul for this K tile: bf16 x bf16 on the MXU, f32 acc.
    h1_acc_ref[...] += jnp.dot(feat_ref[...].astype(jnp.bfloat16), w1_ref[...],
                               preferred_element_type=jnp.float32)

    @pl.when(k == pl.num_programs(0) - 1)
    def _finish():
        def dense(h_f32, w_ref, b_ref):
            # bf16 operands straight into the MXU, f32 accumulation + f32 bias.
            return jnp.dot(h_f32.astype(jnp.bfloat16), w_ref[...],
                           preferred_element_type=jnp.float32) + b_ref[...]

        h = jnp.maximum(h1_acc_ref[...] + b1_ref[...], 0.0)      # ReLU
        h = jnp.maximum(dense(h, w2_ref, b2_ref), 0.0)
        h = jnp.maximum(dense(h, w3_ref, b3_ref), 0.0)
        h = jnp.maximum(dense(h, w4_ref, b4_ref), 0.0)
        logits = dense(h, w5_ref, b5_ref)                        # (N, 2W)

        # Numerically stable softplus == F.softplus.
        sp = jnp.maximum(logits, 0.0) + jnp.log1p(jnp.exp(-jnp.abs(logits)))
        # Per-sample max normalisation; reciprocal on the EUP slot.
        mx = jnp.max(sp, axis=-1, keepdims=True)
        o_ref[...] = (sp * pl.reciprocal(mx, approx=True)) * mult_ref[...]


def _full_spec(arr):
    nd = arr.ndim
    return pl.BlockSpec(arr.shape, lambda k: (0,) * nd)


def _choose_k_tile(k_total, target=1024):
    """Largest multiple of 128 that divides k_total and is <= target."""
    if k_total <= target or k_total % 128 != 0:
        return k_total
    best = k_total
    t = 128
    while t <= target:
        if k_total % t == 0:
            best = t
        t += 128
    return best


def fused_sampler_head(feat, mult, p):
    n, k_total = feat.shape
    hidden = p["w1"].shape[1]
    out_dim = p["w5"].shape[1]
    tk = _choose_k_tile(k_total)
    num_k = k_total // tk

    args = (feat, mult,
            p["w1"], p["b1"], p["w2"], p["b2"], p["w3"], p["b3"],
            p["w4"], p["b4"], p["w5"], p["b5"])
    in_specs = [
        pl.BlockSpec((n, tk), lambda k: (0, k)),          # feat K-tile
        _full_spec(mult),
        pl.BlockSpec((tk, hidden), lambda k: (k, 0)),     # w1 K-tile
        _full_spec(p["b1"]),
        _full_spec(p["w2"]), _full_spec(p["b2"]),
        _full_spec(p["w3"]), _full_spec(p["b3"]),
        _full_spec(p["w4"]), _full_spec(p["b4"]),
        _full_spec(p["w5"]), _full_spec(p["b5"]),
    ]

    dims = [k_total, hidden, hidden, hidden, hidden, out_dim]
    flops = int(2 * n * sum(dims[i] * dims[i + 1] for i in range(5)))
    bytes_accessed = int(
        feat.size * feat.dtype.itemsize + mult.size * 4 + n * out_dim * 4
        + sum(int(p[f"w{i}"].size) * p[f"w{i}"].dtype.itemsize for i in range(1, 6))
        + sum(int(p[f"b{i}"].size) * 4 for i in range(1, 6)))

    return pl.pallas_call(
        _fused_sampler_kernel,
        out_shape=jax.ShapeDtypeStruct((n, out_dim), jnp.float32),
        grid=(num_k,),
        in_specs=in_specs,
        out_specs=pl.BlockSpec((n, out_dim), lambda k: (0, 0)),
        scratch_shapes=[pltpu.VMEM((n, hidden), jnp.float32)],
        compiler_params=pltpu.CompilerParams(
            dimension_semantics=("arbitrary",),
            vmem_limit_bytes=32 * 1024 * 1024),
        cost_estimate=pl.CostEstimate(
            flops=flops,
            transcendentals=int(2 * n * out_dim),
            bytes_accessed=bytes_accessed),
    )(*args)


# ------------------------------- JAX glue ------------------------------------

def bi_line_constrained_sampler_forward(kparams, kspace, mask):
    """kspace: (N, H, W, C) NHWC; mask: (N, 1, H, W).  Returns (N, 1, 1, 2*W).

    w1 rows were pre-permuted to NHWC-flatten order, so no transpose is needed
    here -- just reshapes of contiguous buffers and one concat.
    """
    n, c, h, w = mask.shape
    assert c == 1 and h == w

    feat = jnp.concatenate(
        [kspace.reshape(n, -1), mask.reshape(n, -1)], axis=-1
    ).astype(jnp.float32)                                              # (N, 5*H*W)

    # line masks (out_chans = 2*W != W  ->  bidirectional branch)
    m2 = mask[:, 0]                                                    # (N, H, W)
    vertical = (jnp.sum(m2, axis=-2) == h).astype(jnp.float32)         # (N, W)
    horizontal = (jnp.sum(m2, axis=-1) == w).astype(jnp.float32)       # (N, H)
    mult = jnp.concatenate([1.0 - vertical, 1.0 - horizontal], axis=-1)

    out = fused_sampler_head(feat, mult, kparams)                      # (N, 2W)
    return out.reshape(n, 1, 1, -1)


# --------------------------- parameters ---------------------------------------

def init_params(key, in_chans):
    """f32 params in the PyTorch layout: w rows follow the CHW feat order."""
    flatten_size = in_chans * in_chans * 5
    out_chans = in_chans * 2
    dims = [flatten_size, HIDDEN, HIDDEN, HIDDEN, HIDDEN, out_chans]
    ks = jax.random.split(key, 10)
    s = 0.05
    params = {}
    for i in range(5):
        din, dout = dims[i], dims[i + 1]
        params[f"w{i + 1}"] = jax.random.normal(ks[2 * i], (din, dout), jnp.float32) * s
        params[f"b{i + 1}"] = jax.random.normal(ks[2 * i + 1], (1, dout), jnp.float32) * s
    return params


def prepare_kernel_params(params_f32, in_chans, kspace_chans):
    """Offline prep: permute w1 rows from CHW (torch) to HWC (NHWC flatten)
    order for the kspace planes, and cast weights to bf16 (biases stay f32)."""
    h = w = in_chans
    ks_rows = kspace_chans * h * w
    w1 = params_f32["w1"]                                   # (5*H*W, 512)
    w1_ks = w1[:ks_rows].reshape(kspace_chans, h, w, -1)    # (C, H, W, 512)
    w1_ks = jnp.transpose(w1_ks, (1, 2, 0, 3)).reshape(ks_rows, -1)   # HWC rows
    w1_perm = jnp.concatenate([w1_ks, w1[ks_rows:]], axis=0)

    kp = {"w1": w1_perm.astype(jnp.bfloat16), "b1": params_f32["b1"]}
    for i in range(2, 6):
        kp[f"w{i}"] = params_f32[f"w{i}"].astype(jnp.bfloat16)
        kp[f"b{i}"] = params_f32[f"b{i}"]
    return kp


# ---------------------------- pure-JAX reference ------------------------------

def reference_forward(params_f32, kspace, mask):
    """Faithful PyTorch-order reference (permute+concat, f32 activations);
    weights quantised to bf16 to match the kernel's weight storage."""
    n, c, h, w = mask.shape
    feat = jnp.concatenate(
        [jnp.transpose(kspace, (0, 3, 1, 2)), mask], axis=1).reshape(n, -1)
    x = feat
    for i in range(1, 5):
        wi = params_f32[f"w{i}"].astype(jnp.bfloat16).astype(jnp.float32)
        x = jnp.maximum(
            jnp.dot(x, wi, precision=jax.lax.Precision.HIGHEST) + params_f32[f"b{i}"],
            0.0)
    w5 = params_f32["w5"].astype(jnp.bfloat16).astype(jnp.float32)
    logits = jnp.dot(x, w5, precision=jax.lax.Precision.HIGHEST) + params_f32["b5"]
    sp = jax.nn.softplus(logits)
    sp = sp / jnp.max(sp, axis=-1, keepdims=True)
    m2 = mask[:, 0]
    vertical = (jnp.sum(m2, axis=-2) == h).astype(jnp.float32)
    horizontal = (jnp.sum(m2, axis=-1) == w).astype(jnp.float32)
    mult = jnp.concatenate([1.0 - vertical, 1.0 - horizontal], axis=-1)
    return (sp * mult).reshape(n, 1, 1, -1)


# ----------------------------------- main -------------------------------------

if __name__ == "__main__":
    IN_CHANS = 16              # H = W = in_chans  (Linear input = 5 * in_chans**2)
    N = 2
    H = W = IN_CHANS
    KC = 4                     # kspace channels: 4 + 1 (mask) = 5 flattened planes

    key = jax.random.PRNGKey(0)
    kp, kk, kc, kr = jax.random.split(key, 4)

    params_f32 = init_params(kp, IN_CHANS)
    kernel_params = prepare_kernel_params(params_f32, IN_CHANS, KC)

    kspace = jax.random.normal(kk, (N, H, W, KC), jnp.float32)

    # previous sampling trajectory: some fully-sampled columns and rows
    cols = (jax.random.uniform(kc, (N, W)) < 0.35).astype(jnp.float32)
    rows = (jax.random.uniform(kr, (N, H)) < 0.25).astype(jnp.float32)
    mask = jnp.maximum(
        jnp.broadcast_to(cols[:, None, None, :], (N, 1, H, W)),
        jnp.broadcast_to(rows[:, None, :, None], (N, 1, H, W)),
    )

    fwd = jax.jit(lambda ks, m: bi_line_constrained_sampler_forward(kernel_params, ks, m))
    out = jax.block_until_ready(fwd(kspace, mask))

    assert out.shape == (N, 1, 1, 2 * IN_CHANS), out.shape
    assert bool(jnp.all(jnp.isfinite(out)))

    ref = reference_forward(params_f32, kspace, mask)
    max_err = float(jnp.max(jnp.abs(out - ref)))
    # bf16 activations into the MXU + approx reciprocal widen error vs the f32
    # reference; tolerance relaxed accordingly (output is [0,1]-normalised).
    assert max_err < 3e-2, f"mismatch vs reference, max abs err = {max_err}"

    print("KERNEL_OK")
</pallas_src>

<mosaic_0001>
module attributes {stable_mosaic.version = 11 : i64} {
  func.func @_fused_sampler_kernel(%arg0: i32, %arg1: memref<2x640xf32, #tpu.memory_space<vmem>>, %arg2: memref<2x32xf32, #tpu.memory_space<vmem>>, %arg3: memref<640x512xbf16, #tpu.memory_space<vmem>>, %arg4: memref<1x512xf32, #tpu.memory_space<vmem>>, %arg5: memref<512x512xbf16, #tpu.memory_space<vmem>>, %arg6: memref<1x512xf32, #tpu.memory_space<vmem>>, %arg7: memref<512x512xbf16, #tpu.memory_space<vmem>>, %arg8: memref<1x512xf32, #tpu.memory_space<vmem>>, %arg9: memref<512x512xbf16, #tpu.memory_space<vmem>>, %arg10: memref<1x512xf32, #tpu.memory_space<vmem>>, %arg11: memref<512x32xbf16, #tpu.memory_space<vmem>>, %arg12: memref<1x32xf32, #tpu.memory_space<vmem>>, %arg13: memref<2x32xf32, #tpu.memory_space<vmem>>, %arg14: memref<2x512xf32, #tpu.memory_space<vmem>>) attributes {dimension_semantics = [#tpu.dimension_semantics<arbitrary>], iteration_bounds = array<i64: 2>, scalar_prefetch = 0 : i64, scratch_operands = 1 : i64, tpu.core_type = #tpu.core_type<tc>, window_params = [{transform_indices = @transform_0, window_bounds = array<i64: 2, 640>}, {pipeline_mode = #tpu.pipeline_mode<synchronous>, transform_indices = @transform_1, window_bounds = array<i64: 2, 32>}, {transform_indices = @transform_2, window_bounds = array<i64: 640, 512>}, {pipeline_mode = #tpu.pipeline_mode<synchronous>, transform_indices = @transform_3, window_bounds = array<i64: 1, 512>}, {pipeline_mode = #tpu.pipeline_mode<synchronous>, transform_indices = @transform_4, window_bounds = array<i64: 512, 512>}, {pipeline_mode = #tpu.pipeline_mode<synchronous>, transform_indices = @transform_5, window_bounds = array<i64: 1, 512>}, {pipeline_mode = #tpu.pipeline_mode<synchronous>, transform_indices = @transform_6, window_bounds = array<i64: 512, 512>}, {pipeline_mode = #tpu.pipeline_mode<synchronous>, transform_indices = @transform_7, window_bounds = array<i64: 1, 512>}, {pipeline_mode = #tpu.pipeline_mode<synchronous>, transform_indices = @transform_8, window_bounds = array<i64: 512, 512>}, {pipeline_mode = #tpu.pipeline_mode<synchronous>, transform_indices = @transform_9, window_bounds = array<i64: 1, 512>}, {pipeline_mode = #tpu.pipeline_mode<synchronous>, transform_indices = @transform_10, window_bounds = array<i64: 512, 32>}, {pipeline_mode = #tpu.pipeline_mode<synchronous>, transform_indices = @transform_11, window_bounds = array<i64: 1, 32>}, {pipeline_mode = #tpu.pipeline_mode<synchronous>, transform_indices = @transform_12, window_bounds = array<i64: 2, 32>}]} {
    %c0_i32 = arith.constant 0 : i32
    %0 = arith.cmpi eq, %arg0, %c0_i32 : i32
    %1 = arith.extui %0 : i1 to i32
    %c0_i32_0 = arith.constant 0 : i32
    %2 = arith.cmpi ne, %1, %c0_i32_0 : i32
    scf.if %2 {
      %cst_9 = arith.constant 0.000000e+00 : f32
      %13 = vector.broadcast %cst_9 : f32 to vector<2x512xf32>
      %c0_10 = arith.constant 0 : index
      %c0_11 = arith.constant 0 : index
      %14 = vector.load %arg14[%c0_10, %c0_11] : memref<2x512xf32, #tpu.memory_space<vmem>>, vector<2x512xf32>
      tpu.vector_store %arg14[%c0_10, %c0_11], %13 {strides = array<i32>} : memref<2x512xf32, #tpu.memory_space<vmem>>, vector<2x512xf32>,
    } else {
    }
    %c0 = arith.constant 0 : index
    %c0_1 = arith.constant 0 : index
    %3 = vector.load %arg14[%c0, %c0_1] : memref<2x512xf32, #tpu.memory_space<vmem>>, vector<2x512xf32>
    %c0_2 = arith.constant 0 : index
    %c0_3 = arith.constant 0 : index
    %4 = vector.load %arg1[%c0_2, %c0_3] : memref<2x640xf32, #tpu.memory_space<vmem>>, vector<2x640xf32>
    %5 = arith.truncf %4 : vector<2x640xf32> to vector<2x640xbf16>
    %c0_4 = arith.constant 0 : index
    %c0_5 = arith.constant 0 : index
    %6 = vector.load %arg3[%c0_4, %c0_5] : memref<640x512xbf16, #tpu.memory_space<vmem>>, vector<640x512xbf16>
    %cst = arith.constant dense<0.000000e+00> : vector<2x512xf32>
    %7 = tpu.matmul %5, %6, %cst {dimension_numbers = #tpu.dot_dimension_numbers<[1], [0], [0], [1], [0, 0, 1, 1], [], []>} : vector<2x640xbf16>, vector<640x512xbf16>, vector<2x512xf32> -> vector<2x512xf32>
    %8 = arith.addf %3, %7 : vector<2x512xf32>
    %c0_6 = arith.constant 0 : index
    %c0_7 = arith.constant 0 : index
    %9 = vector.load %arg14[%c0_6, %c0_7] : memref<2x512xf32, #tpu.memory_space<vmem>>, vector<2x512xf32>
    tpu.vector_store %arg14[%c0_6, %c0_7], %8 {strides = array<i32>} : memref<2x512xf32, #tpu.memory_space<vmem>>, vector<2x512xf32>,
    %c1_i32 = arith.constant 1 : i32
    %10 = arith.cmpi eq, %arg0, %c1_i32 : i32
    %11 = arith.extui %10 : i1 to i32
    %c0_i32_8 = arith.constant 0 : i32
    %12 = arith.cmpi ne, %11, %c0_i32_8 : i32
    scf.if %12 {
      %c0_9 = arith.constant 0 : index
      %c0_10 = arith.constant 0 : index
      %13 = vector.load %arg14[%c0_9, %c0_10] : memref<2x512xf32, #tpu.memory_space<vmem>>, vector<2x512xf32>
      %c0_11 = arith.constant 0 : index
      %c0_12 = arith.constant 0 : index
      %14 = vector.load %arg4[%c0_11, %c0_12] : memref<1x512xf32, #tpu.memory_space<vmem>>, vector<1x512xf32>
      %15 = vector.broadcast %14 : vector<1x512xf32> to vector<2x512xf32>
      %16 = arith.addf %13, %15 : vector<2x512xf32>
      %cst_13 = arith.constant 0.000000e+00 : f32
      %17 = vector.broadcast %cst_13 : f32 to vector<2x512xf32>
      %18 = arith.maximumf %16, %17 : vector<2x512xf32>
      %19 = arith.truncf %18 : vector<2x512xf32> to vector<2x512xbf16>
      %c0_14 = arith.constant 0 : index
      %c0_15 = arith.constant 0 : index
      %20 = vector.load %arg5[%c0_14, %c0_15] : memref<512x512xbf16, #tpu.memory_space<vmem>>, vector<512x512xbf16>
      %cst_16 = arith.constant dense<0.000000e+00> : vector<2x512xf32>
      %21 = tpu.matmul %19, %20, %cst_16 {dimension_numbers = #tpu.dot_dimension_numbers<[1], [0], [0], [1], [0, 0, 1, 1], [], []>} : vector<2x512xbf16>, vector<512x512xbf16>, vector<2x512xf32> -> vector<2x512xf32>
      %c0_17 = arith.constant 0 : index
      %c0_18 = arith.constant 0 : index
      %22 = vector.load %arg6[%c0_17, %c0_18] : memref<1x512xf32, #tpu.memory_space<vmem>>, vector<1x512xf32>
      %23 = vector.broadcast %22 : vector<1x512xf32> to vector<2x512xf32>
      %24 = arith.addf %21, %23 : vector<2x512xf32>
      %cst_19 = arith.constant 0.000000e+00 : f32
      %25 = vector.broadcast %cst_19 : f32 to vector<2x512xf32>
      %26 = arith.maximumf %24, %25 : vector<2x512xf32>
      %27 = arith.truncf %26 : vector<2x512xf32> to vector<2x512xbf16>
      %c0_20 = arith.constant 0 : index
      %c0_21 = arith.constant 0 : index
      %28 = vector.load %arg7[%c0_20, %c0_21] : memref<512x512xbf16, #tpu.memory_space<vmem>>, vector<512x512xbf16>
      %cst_22 = arith.constant dense<0.000000e+00> : vector<2x512xf32>
      %29 = tpu.matmul %27, %28, %cst_22 {dimension_numbers = #tpu.dot_dimension_numbers<[1], [0], [0], [1], [0, 0, 1, 1], [], []>} : vector<2x512xbf16>, vector<512x512xbf16>, vector<2x512xf32> -> vector<2x512xf32>
      %c0_23 = arith.constant 0 : index
      %c0_24 = arith.constant 0 : index
      %30 = vector.load %arg8[%c0_23, %c0_24] : memref<1x512xf32, #tpu.memory_space<vmem>>, vector<1x512xf32>
      %31 = vector.broadcast %30 : vector<1x512xf32> to vector<2x512xf32>
      %32 = arith.addf %29, %31 : vector<2x512xf32>
      %cst_25 = arith.constant 0.000000e+00 : f32
      %33 = vector.broadcast %cst_25 : f32 to vector<2x512xf32>
      %34 = arith.maximumf %32, %33 : vector<2x512xf32>
      %35 = arith.truncf %34 : vector<2x512xf32> to vector<2x512xbf16>
      %c0_26 = arith.constant 0 : index
      %c0_27 = arith.constant 0 : index
      %36 = vector.load %arg9[%c0_26, %c0_27] : memref<512x512xbf16, #tpu.memory_space<vmem>>, vector<512x512xbf16>
      %cst_28 = arith.constant dense<0.000000e+00> : vector<2x512xf32>
      %37 = tpu.matmul %35, %36, %cst_28 {dimension_numbers = #tpu.dot_dimension_numbers<[1], [0], [0], [1], [0, 0, 1, 1], [], []>} : vector<2x512xbf16>, vector<512x512xbf16>, vector<2x512xf32> -> vector<2x512xf32>
      %c0_29 = arith.constant 0 : index
      %c0_30 = arith.constant 0 : index
      %38 = vector.load %arg10[%c0_29, %c0_30] : memref<1x512xf32, #tpu.memory_space<vmem>>, vector<1x512xf32>
      %39 = vector.broadcast %38 : vector<1x512xf32> to vector<2x512xf32>
      %40 = arith.addf %37, %39 : vector<2x512xf32>
      %cst_31 = arith.constant 0.000000e+00 : f32
      %41 = vector.broadcast %cst_31 : f32 to vector<2x512xf32>
      %42 = arith.maximumf %40, %41 : vector<2x512xf32>
      %43 = arith.truncf %42 : vector<2x512xf32> to vector<2x512xbf16>
      %c0_32 = arith.constant 0 : index
      %c0_33 = arith.constant 0 : index
      %44 = vector.load %arg11[%c0_32, %c0_33] : memref<512x32xbf16, #tpu.memory_space<vmem>>, vector<512x32xbf16>
      %cst_34 = arith.constant dense<0.000000e+00> : vector<2x32xf32>
      %45 = tpu.matmul %43, %44, %cst_34 {dimension_numbers = #tpu.dot_dimension_numbers<[1], [0], [0], [1], [0, 0, 1, 1], [], []>} : vector<2x512xbf16>, vector<512x32xbf16>, vector<2x32xf32> -> vector<2x32xf32>
      %c0_35 = arith.constant 0 : index
      %c0_36 = arith.constant 0 : index
      %46 = vector.load %arg12[%c0_35, %c0_36] : memref<1x32xf32, #tpu.memory_space<vmem>>, vector<1x32xf32>
      %47 = vector.broadcast %46 : vector<1x32xf32> to vector<2x32xf32>
      %48 = arith.addf %45, %47 : vector<2x32xf32>
      %cst_37 = arith.constant 0.000000e+00 : f32
      %49 = vector.broadcast %cst_37 : f32 to vector<2x32xf32>
      %50 = arith.maximumf %48, %49 : vector<2x32xf32>
      %51 = math.absf %48 : vector<2x32xf32>
      %cst_38 = arith.constant 0.000000e+00 : f32
      %52 = vector.broadcast %cst_38 : f32 to vector<2x32xf32>
      %53 = arith.subf %52, %51 : vector<2x32xf32>
      %54 = math.exp %53 : vector<2x32xf32>
      %55 = math.log1p %54 : vector<2x32xf32>
      %56 = arith.addf %50, %55 : vector<2x32xf32>
      %cst_39 = arith.constant dense<0xFF800000> : vector<2xf32>
      %57 = vector.multi_reduction <maximumf>, %56, %cst_39 [1] : vector<2x32xf32> to vector<2xf32>
      %58 = vector.shape_cast %57 : vector<2xf32> to vector<2x1xf32>
      %59 = tpu.reciprocal %58 {approx = true} : vector<2x1xf32> -> vector<2x1xf32>
      %60 = vector.broadcast %59 : vector<2x1xf32> to vector<2x32xf32>
      %61 = arith.mulf %56, %60 : vector<2x32xf32>
      %c0_40 = arith.constant 0 : index
      %c0_41 = arith.constant 0 : index
      %62 = vector.load %arg2[%c0_40, %c0_41] : memref<2x32xf32, #tpu.memory_space<vmem>>, vector<2x32xf32>
      %63 = arith.mulf %61, %62 : vector<2x32xf32>
      %c0_42 = arith.constant 0 : index
      %c0_43 = arith.constant 0 : index
      %64 = vector.load %arg13[%c0_42, %c0_43] : memref<2x32xf32, #tpu.memory_space<vmem>>, vector<2x32xf32>
      tpu.vector_store %arg13[%c0_42, %c0_43], %63 {strides = array<i32>} : memref<2x32xf32, #tpu.memory_space<vmem>>, vector<2x32xf32>,
    } else {
    }
    return
  }
  func.func @transform_0(%arg0: i32) -> (i32, i32) {
    %c0_i32 = arith.constant 0 : i32
    %c0_i32_0 = arith.constant 0 : i32
    return %c0_i32, %arg0 : i32, i32
  }
  func.func @transform_1(%arg0: i32) -> (i32, i32) {
    %c0_i32 = arith.constant 0 : i32
    %c0_i32_0 = arith.constant 0 : i32
    %c0_i32_1 = arith.constant 0 : i32
    return %c0_i32, %c0_i32_0 : i32, i32
  }
  func.func @transform_2(%arg0: i32) -> (i32, i32) {
    %c0_i32 = arith.constant 0 : i32
    %c0_i32_0 = arith.constant 0 : i32
    return %arg0, %c0_i32 : i32, i32
  }
  func.func @transform_3(%arg0: i32) -> (i32, i32) {
    %c0_i32 = arith.constant 0 : i32
    %c0_i32_0 = arith.constant 0 : i32
    %c0_i32_1 = arith.constant 0 : i32
    return %c0_i32, %c0_i32_0 : i32, i32
  }
  func.func @transform_4(%arg0: i32) -> (i32, i32) {
    %c0_i32 = arith.constant 0 : i32
    %c0_i32_0 = arith.constant 0 : i32
    %c0_i32_1 = arith.constant 0 : i32
    return %c0_i32, %c0_i32_0 : i32, i32
  }
  func.func @transform_5(%arg0: i32) -> (i32, i32) {
    %c0_i32 = arith.constant 0 : i32
    %c0_i32_0 = arith.constant 0 : i32
    %c0_i32_1 = arith.constant 0 : i32
    return %c0_i32, %c0_i32_0 : i32, i32
  }
  func.func @transform_6(%arg0: i32) -> (i32, i32) {
    %c0_i32 = arith.constant 0 : i32
    %c0_i32_0 = arith.constant 0 : i32
    %c0_i32_1 = arith.constant 0 : i32
    return %c0_i32, %c0_i32_0 : i32, i32
  }
  func.func @transform_7(%arg0: i32) -> (i32, i32) {
    %c0_i32 = arith.constant 0 : i32
    %c0_i32_0 = arith.constant 0 : i32
    %c0_i32_1 = arith.constant 0 : i32
    return %c0_i32, %c0_i32_0 : i32, i32
  }
  func.func @transform_8(%arg0: i32) -> (i32, i32) {
    %c0_i32 = arith.constant 0 : i32
    %c0_i32_0 = arith.constant 0 : i32
    %c0_i32_1 = arith.constant 0 : i32
    return %c0_i32, %c0_i32_0 : i32, i32
  }
  func.func @transform_9(%arg0: i32) -> (i32, i32) {
    %c0_i32 = arith.constant 0 : i32
    %c0_i32_0 = arith.constant 0 : i32
    %c0_i32_1 = arith.constant 0 : i32
    return %c0_i32, %c0_i32_0 : i32, i32
  }
  func.func @transform_10(%arg0: i32) -> (i32, i32) {
    %c0_i32 = arith.constant 0 : i32
    %c0_i32_0 = arith.constant 0 : i32
    %c0_i32_1 = arith.constant 0 : i32
    return %c0_i32, %c0_i32_0 : i32, i32
  }
  func.func @transform_11(%arg0: i32) -> (i32, i32) {
    %c0_i32 = arith.constant 0 : i32
    %c0_i32_0 = arith.constant 0 : i32
    %c0_i32_1 = arith.constant 0 : i32
    return %c0_i32, %c0_i32_0 : i32, i32
  }
  func.func @transform_12(%arg0: i32) -> (i32, i32) {
    %c0_i32 = arith.constant 0 : i32
    %c0_i32_0 = arith.constant 0 : i32
    %c0_i32_1 = arith.constant 0 : i32
    return %c0_i32, %c0_i32_0 : i32, i32
  }
}

</mosaic_0001>

<llo_original>
// kernel: _lambda_.1
$region0: #{_lambda_.1}
  #allocation0 [shape = 'u32[]', space=smem, size = 0x4, offset = 0x4, fixed_abs, tag = 'smem constant byte address 0x4 - core index']
  #allocation1 [shape = 'u32[144,128]{1,0:T(1,128)}', space=vmem, size = 0x12000, scoped, tag = 'internal scratch']
  #allocation2 [shape = 'f32[2,512]{1,0:T(2,128)}', space=vmem, size = 0x1000, scoped, tag = 'scratch operand']
  %s0 = inlined_call_operand.vmem [shape: f32[2,1280], index: 0, kind: input, shape index: {}]
  %s1 = inlined_call_operand.vmem [shape: f32[2,32], index: 1, kind: input, shape index: {}]
  %s2 = inlined_call_operand.hbm [shape: bf16[1280,512], index: 2, kind: input, shape index: {}]
  %s3 = inlined_call_operand.hbm [shape: f32[1,512], index: 3, kind: input, shape index: {}]
  %s4 = inlined_call_operand.hbm [shape: bf16[512,512], index: 4, kind: input, shape index: {}]
  %s5 = inlined_call_operand.hbm [shape: f32[1,512], index: 5, kind: input, shape index: {}]
  %s6 = inlined_call_operand.hbm [shape: bf16[512,512], index: 6, kind: input, shape index: {}]
  %s7 = inlined_call_operand.hbm [shape: f32[1,512], index: 7, kind: input, shape index: {}]
  %s8 = inlined_call_operand.hbm [shape: bf16[512,512], index: 8, kind: input, shape index: {}]
  %s9 = inlined_call_operand.hbm [shape: f32[1,512], index: 9, kind: input, shape index: {}]
  %s10 = inlined_call_operand.hbm [shape: bf16[512,32], index: 10, kind: input, shape index: {}]
  %s11 = inlined_call_operand.hbm [shape: f32[1,32], index: 11, kind: input, shape index: {}]
  %s12 = inlined_call_operand.hbm [shape: f32[2,32], index: 12, kind: output, shape index: {}]
  %s13 = sld [smem:[#allocation0]]
  $region129: #{_lambda_.1} parent=0
    _
  %s15 = ssub.s32 1, %s13
  %s16 = scalar_select 0, %s15, %s13
  $region1: #{_lambda_.1} parent=0
    #allocation3 [shape = 'u8[1310720]{0}', space=vmem, size = 0x140000, scoped, tag = 'input window, operand 2']
    #allocation4 [shape = 's32[2]{0}', space=sflag, size = 0x8, scoped, tag = 'scoped memory for _lambda_.1']
    #allocation5 [shape = 's32[2]{0}', space=sflag, size = 0x8, scoped, tag = 'scoped memory for _lambda_.1']
    #allocation6 [shape = 'u8[2048]{0}', space=vmem, size = 0x800, scoped, tag = 'input window, operand 3, single buffered']
    #allocation7 [shape = 's32[1]{0}', space=sflag, size = 0x4, scoped, tag = 'scoped memory for _lambda_.1']
    #allocation8 [shape = 'u8[524288]{0}', space=vmem, size = 0x80000, scoped, tag = 'input window, operand 4, single buffered']
    #allocation9 [shape = 'u8[2048]{0}', space=vmem, size = 0x800, scoped, tag = 'input window, operand 5, single buffered']
    #allocation10 [shape = 's32[1]{0}', space=sflag, size = 0x4, scoped, tag = 'scoped memory for _lambda_.1']
    #allocation11 [shape = 'u8[524288]{0}', space=vmem, size = 0x80000, scoped, tag = 'input window, operand 6, single buffered']
    #allocation12 [shape = 'u8[2048]{0}', space=vmem, size = 0x800, scoped, tag = 'input window, operand 7, single buffered']
    #allocation13 [shape = 's32[1]{0}', space=sflag, size = 0x4, scoped, tag = 'scoped memory for _lambda_.1']
    #allocation14 [shape = 'u8[524288]{0}', space=vmem, size = 0x80000, scoped, tag = 'input window, operand 8, single buffered']
    #allocation15 [shape = 'u8[2048]{0}', space=vmem, size = 0x800, scoped, tag = 'input window, operand 9, single buffered']
    #allocation16 [shape = 's32[1]{0}', space=sflag, size = 0x4, scoped, tag = 'scoped memory for _lambda_.1']
    #allocation17 [shape = 'u8[131072]{0}', space=vmem, size = 0x20000, scoped, tag = 'input window, operand 10, single buffered']
    #allocation18 [shape = 'u8[512]{0}', space=vmem, size = 0x400, scoped, tag = 'input window, operand 11, single buffered']
    #allocation19 [shape = 's32[1]{0}', space=sflag, size = 0x4, scoped, tag = 'scoped memory for _lambda_.1']
    #allocation20 [shape = 'u8[1024]{0}', space=vmem, size = 0x400, scoped, tag = 'output window, operand 0, single buffered']
    %17 = vsyncpa [#allocation4], 0
    %s18 = scalar_lea.sflag [#allocation4], 1
    %19 = vsyncpa %s18, 0
    %20 = vsyncpa [#allocation7], 0
    %21 = vsyncpa [#allocation10], 0
    %22 = vsyncpa [#allocation13], 0
    %23 = vsyncpa [#allocation16], 0
    %24 = vsyncpa [#allocation19], 0
    %25 = vsyncpa [#allocation5], 0
    loop: start=0, step=1, limit=4
    $region2: #{_lambda_.1} parent=1 // loop_pre_header
      _
    $region3: #{_lambda_.1} parent=1 // loop_header
      %s27 = sphi 0, %s31
      %p28 = scmp.ge.s32.totalorder %s27, 4
      %s37 = sphi 0, %s39
      %s40 = sphi 0, %s37
      %s41 = sphi 0, %s40
      %s57 = sphi 0, %s41
      %s61 = sphi 0, %s61
      %s63 = sphi 0, %s61
      %s64 = sphi 0, %s63
      %s78 = sphi 0, %s64
      %s84 = sphi 0, %s86
      %s87 = sphi 0, %s84
      %s88 = sphi 0, %s87
      %s104 = sphi 0, %s88
      %s108 = sphi 0, %s108
      %s110 = sphi 0, %s108
      %s111 = sphi 0, %s110
      %s125 = sphi 0, %s111
      %s129 = sphi 0, %s129
      %s131 = sphi 0, %s129
      %s132 = sphi 0, %s131
      %s146 = sphi 0, %s132
      %s150 = sphi 0, %s150
      %s152 = sphi 0, %s150
      %s153 = sphi 0, %s152
      %s167 = sphi 0, %s153
      %s171 = sphi 0, %s171
      %s173 = sphi 0, %s171
      %s174 = sphi 0, %s173
      %s188 = sphi 0, %s174
      %s192 = sphi 0, %s192
      %s194 = sphi 0, %s192
      %s195 = sphi 0, %s194
      %s209 = sphi 0, %s195
      %s213 = sphi 0, %s213
      %s215 = sphi 0, %s213
      %s216 = sphi 0, %s215
      %s230 = sphi 0, %s216
      %s234 = sphi 0, %s234
      %s236 = sphi 0, %s234
      %s237 = sphi 0, %s236
      %s251 = sphi 0, %s237
      %s255 = sphi 0, %s255
      %s257 = sphi 0, %s255
      %s258 = sphi 0, %s257
      %s272 = sphi 0, %s258
      %s276 = sphi 0, %s276
      %s278 = sphi 0, %s276
      %s279 = sphi 0, %s278
      %s293 = sphi 0, %s279
      %s297 = sphi 0, %s297
      %s299 = sphi 0, %s297
      %s300 = sphi 0, %s299
      %s314 = sphi 0, %s300
    $region4: #{_lambda_.1} parent=1 // loop_header_branch
      %30 = sbr.rel (%p28) target = $region8
    $region5: #{_lambda_.1} parent=1 // loop_body
      %s32 = ssub.s32 %s27, 1
      %s33 = ssub.s32 %s27, 2
      %s34 = sadd.s32 %s27, 1
      %s35 = ssub.s32 %s27, %s34
      %p36 = scmp.eq.s32.totalorder %s35, 0
      %s38 = sadd.s32 %s37, 1
      %s39 = scalar_select %p36, %s37, %s38
      %p42 = pneg %p36
      %p43 = scmp.eq.s32.totalorder %s27, 1
      %p44 = por %p42, %p43
      %p45 = scmp.ne.s32.totalorder %s37, %s40
      %p46 = scmp.eq.s32.totalorder %s27, 0
      %p47 = por %p45, %p46
      %p48 = scmp.ne.s32.totalorder %s37, %s40
      %p49 = scmp.eq.s32.totalorder %s32, 1
      %p50 = por %p48, %p49
      %p51 = scmp.ne.s32.totalorder %s40, %s41
      %p52 = scmp.eq.s32.totalorder %s32, 0
      %p53 = por %p51, %p52
      %p54 = scmp.ne.s32.totalorder %s40, %s41
      %p55 = scmp.eq.s32.totalorder %s33, 1
      %p56 = por %p54, %p55
      %p58 = scmp.ne.s32.totalorder %s41, %s57
      %p59 = scmp.eq.s32.totalorder %s33, 0
      %p60 = por %p58, %p59
      %s62 = sadd.s32 %s61, 1
      %p65 = scmp.eq.s32.totalorder %s27, 1
      %p66 = scmp.ne.s32.totalorder %s61, %s63
      %p67 = scmp.eq.s32.totalorder %s27, 0
      %p68 = por %p66, %p67
      %p69 = scmp.ne.s32.totalorder %s61, %s63
      %p70 = scmp.eq.s32.totalorder %s32, 1
      %p71 = por %p69, %p70
      %p72 = scmp.ne.s32.totalorder %s63, %s64
      %p73 = scmp.eq.s32.totalorder %s32, 0
      %p74 = por %p72, %p73
      %p75 = scmp.ne.s32.totalorder %s63, %s64
      %p76 = scmp.eq.s32.totalorder %s33, 1
      %p77 = por %p75, %p76
      %p79 = scmp.ne.s32.totalorder %s64, %s78
      %p80 = scmp.eq.s32.totalorder %s33, 0
      %p81 = por %p79, %p80
      %s82 = ssub.s32 %s27, %s34
      %p83 = scmp.eq.s32.totalorder %s82, 0
      %s85 = sadd.s32 %s84, 1
      %s86 = scalar_select %p83, %s84, %s85
      %p89 = pneg %p83
      %p90 = scmp.eq.s32.totalorder %s27, 1
      %p91 = por %p89, %p90
      %p92 = scmp.ne.s32.totalorder %s84, %s87
      %p93 = scmp.eq.s32.totalorder %s27, 0
      %p94 = por %p92, %p93
      %p95 = scmp.ne.s32.totalorder %s84, %s87
      %p96 = scmp.eq.s32.totalorder %s32, 1
      %p97 = por %p95, %p96
      %p98 = scmp.ne.s32.totalorder %s87, %s88
      %p99 = scmp.eq.s32.totalorder %s32, 0
      %p100 = por %p98, %p99
      %p101 = scmp.ne.s32.totalorder %s87, %s88
      %p102 = scmp.eq.s32.totalorder %s33, 1
      %p103 = por %p101, %p102
      %p105 = scmp.ne.s32.totalorder %s88, %s104
      %p106 = scmp.eq.s32.totalorder %s33, 0
      %p107 = por %p105, %p106
      %s109 = sadd.s32 %s108, 1
      %p112 = scmp.eq.s32.totalorder %s27, 1
      %p113 = scmp.ne.s32.totalorder %s108, %s110
      %p114 = scmp.eq.s32.totalorder %s27, 0
      %p115 = por %p113, %p114
      %p116 = scmp.ne.s32.totalorder %s108, %s110
      %p117 = scmp.eq.s32.totalorder %s32, 1
      %p118 = por %p116, %p117
      %p119 = scmp.ne.s32.totalorder %s110, %s111
      %p120 = scmp.eq.s32.totalorder %s32, 0
      %p121 = por %p119, %p120
      %p122 = scmp.ne.s32.totalorder %s110, %s111
      %p123 = scmp.eq.s32.totalorder %s33, 1
      %p124 = por %p122, %p123
      %p126 = scmp.ne.s32.totalorder %s111, %s125
      %p127 = scmp.eq.s32.totalorder %s33, 0
      %p128 = por %p126, %p127
      %s130 = sadd.s32 %s129, 1
      %p133 = scmp.eq.s32.totalorder %s27, 1
      %p134 = scmp.ne.s32.totalorder %s129, %s131
      %p135 = scmp.eq.s32.totalorder %s27, 0
      %p136 = por %p134, %p135
      %p137 = scmp.ne.s32.totalorder %s129, %s131
      %p138 = scmp.eq.s32.totalorder %s32, 1
      %p139 = por %p137, %p138
      %p140 = scmp.ne.s32.totalorder %s131, %s132
      %p141 = scmp.eq.s32.totalorder %s32, 0
      %p142 = por %p140, %p141
      %p143 = scmp.ne.s32.totalorder %s131, %s132
      %p144 = scmp.eq.s32.totalorder %s33, 1
      %p145 = por %p143, %p144
      %p147 = scmp.ne.s32.totalorder %s132, %s146
      %p148 = scmp.eq.s32.totalorder %s33, 0
      %p149 = por %p147, %p148
      %s151 = sadd.s32 %s150, 1
      %p154 = scmp.eq.s32.totalorder %s27, 1
      %p155 = scmp.ne.s32.totalorder %s150, %s152
      %p156 = scmp.eq.s32.totalorder %s27, 0
      %p157 = por %p155, %p156
      %p158 = scmp.ne.s32.totalorder %s150, %s152
      %p159 = scmp.eq.s32.totalorder %s32, 1
      %p160 = por %p158, %p159
      %p161 = scmp.ne.s32.totalorder %s152, %s153
      %p162 = scmp.eq.s32.totalorder %s32, 0
      %p163 = por %p161, %p162
      %p164 = scmp.ne.s32.totalorder %s152, %s153
      %p165 = scmp.eq.s32.totalorder %s33, 1
      %p166 = por %p164, %p165
      %p168 = scmp.ne.s32.totalorder %s153, %s167
      %p169 = scmp.eq.s32.totalorder %s33, 0
      %p170 = por %p168, %p169
      %s172 = sadd.s32 %s171, 1
      %p175 = scmp.eq.s32.totalorder %s27, 1
      %p176 = scmp.ne.s32.totalorder %s171, %s173
      %p177 = scmp.eq.s32.totalorder %s27, 0
      %p178 = por %p176, %p177
      %p179 = scmp.ne.s32.totalorder %s171, %s173
      %p180 = scmp.eq.s32.totalorder %s32, 1
      %p181 = por %p179, %p180
      %p182 = scmp.ne.s32.totalorder %s173, %s174
      %p183 = scmp.eq.s32.totalorder %s32, 0
      %p184 = por %p182, %p183
      %p185 = scmp.ne.s32.totalorder %s173, %s174
      %p186 = scmp.eq.s32.totalorder %s33, 1
      %p187 = por %p185, %p186
      %p189 = scmp.ne.s32.totalorder %s174, %s188
      %p190 = scmp.eq.s32.totalorder %s33, 0
      %p191 = por %p189, %p190
      %s193 = sadd.s32 %s192, 1
      %p196 = scmp.eq.s32.totalorder %s27, 1
      %p197 = scmp.ne.s32.totalorder %s192, %s194
      %p198 = scmp.eq.s32.totalorder %s27, 0
      %p199 = por %p197, %p198
      %p200 = scmp.ne.s32.totalorder %s192, %s194
      %p201 = scmp.eq.s32.totalorder %s32, 1
      %p202 = por %p200, %p201
      %p203 = scmp.ne.s32.totalorder %s194, %s195
      %p204 = scmp.eq.s32.totalorder %s32, 0
      %p205 = por %p203, %p204
      %p206 = scmp.ne.s32.totalorder %s194, %s195
      %p207 = scmp.eq.s32.totalorder %s33, 1
      %p208 = por %p206, %p207
      %p210 = scmp.ne.s32.totalorder %s195, %s209
      %p211 = scmp.eq.s32.totalorder %s33, 0
      %p212 = por %p210, %p211
      %s214 = sadd.s32 %s213, 1
      %p217 = scmp.eq.s32.totalorder %s27, 1
      %p218 = scmp.ne.s32.totalorder %s213, %s215
      %p219 = scmp.eq.s32.totalorder %s27, 0
      %p220 = por %p218, %p219
      %p221 = scmp.ne.s32.totalorder %s213, %s215
      %p222 = scmp.eq.s32.totalorder %s32, 1
      %p223 = por %p221, %p222
      %p224 = scmp.ne.s32.totalorder %s215, %s216
      %p225 = scmp.eq.s32.totalorder %s32, 0
      %p226 = por %p224, %p225
      %p227 = scmp.ne.s32.totalorder %s215, %s216
      %p228 = scmp.eq.s32.totalorder %s33, 1
      %p229 = por %p227, %p228
      %p231 = scmp.ne.s32.totalorder %s216, %s230
      %p232 = scmp.eq.s32.totalorder %s33, 0
      %p233 = por %p231, %p232
      %s235 = sadd.s32 %s234, 1
      %p238 = scmp.eq.s32.totalorder %s27, 1
      %p239 = scmp.ne.s32.totalorder %s234, %s236
      %p240 = scmp.eq.s32.totalorder %s27, 0
      %p241 = por %p239, %p240
      %p242 = scmp.ne.s32.totalorder %s234, %s236
      %p243 = scmp.eq.s32.totalorder %s32, 1
      %p244 = por %p242, %p243
      %p245 = scmp.ne.s32.totalorder %s236, %s237
      %p246 = scmp.eq.s32.totalorder %s32, 0
      %p247 = por %p245, %p246
      %p248 = scmp.ne.s32.totalorder %s236, %s237
      %p249 = scmp.eq.s32.totalorder %s33, 1
      %p250 = por %p248, %p249
      %p252 = scmp.ne.s32.totalorder %s237, %s251
      %p253 = scmp.eq.s32.totalorder %s33, 0
      %p254 = por %p252, %p253
      %s256 = sadd.s32 %s255, 1
      %p259 = scmp.eq.s32.totalorder %s27, 1
      %p260 = scmp.ne.s32.totalorder %s255, %s257
      %p261 = scmp.eq.s32.totalorder %s27, 0
      %p262 = por %p260, %p261
      %p263 = scmp.ne.s32.totalorder %s255, %s257
      %p264 = scmp.eq.s32.totalorder %s32, 1
      %p265 = por %p263, %p264
      %p266 = scmp.ne.s32.totalorder %s257, %s258
      %p267 = scmp.eq.s32.totalorder %s32, 0
      %p268 = por %p266, %p267
      %p269 = scmp.ne.s32.totalorder %s257, %s258
      %p270 = scmp.eq.s32.totalorder %s33, 1
      %p271 = por %p269, %p270
      %p273 = scmp.ne.s32.totalorder %s258, %s272
      %p274 = scmp.eq.s32.totalorder %s33, 0
      %p275 = por %p273, %p274
      %s277 = sadd.s32 %s276, 1
      %p280 = scmp.eq.s32.totalorder %s27, 1
      %p281 = scmp.ne.s32.totalorder %s276, %s278
      %p282 = scmp.eq.s32.totalorder %s27, 0
      %p283 = por %p281, %p282
      %p284 = scmp.ne.s32.totalorder %s276, %s278
      %p285 = scmp.eq.s32.totalorder %s32, 1
      %p286 = por %p284, %p285
      %p287 = scmp.ne.s32.totalorder %s278, %s279
      %p288 = scmp.eq.s32.totalorder %s32, 0
      %p289 = por %p287, %p288
      %p290 = scmp.ne.s32.totalorder %s278, %s279
      %p291 = scmp.eq.s32.totalorder %s33, 1
      %p292 = por %p290, %p291
      %p294 = scmp.ne.s32.totalorder %s279, %s293
      %p295 = scmp.eq.s32.totalorder %s33, 0
      %p296 = por %p294, %p295
      %s298 = sadd.s32 %s297, 1
      %p301 = scmp.eq.s32.totalorder %s27, 1
      %p302 = scmp.ne.s32.totalorder %s297, %s299
      %p303 = scmp.eq.s32.totalorder %s27, 0
      %p304 = por %p302, %p303
      %p305 = scmp.ne.s32.totalorder %s297, %s299
      %p306 = scmp.eq.s32.totalorder %s32, 1
      %p307 = por %p305, %p306
      %p308 = scmp.ne.s32.totalorder %s299, %s300
      %p309 = scmp.eq.s32.totalorder %s32, 0
      %p310 = por %p308, %p309
      %p311 = scmp.ne.s32.totalorder %s299, %s300
      %p312 = scmp.eq.s32.totalorder %s33, 1
      %p313 = por %p311, %p312
      %p315 = scmp.ne.s32.totalorder %s300, %s314
      %p316 = scmp.eq.s32.totalorder %s33, 0
      %p317 = por %p315, %p316
      %p318 = scmp.le.s32.totalorder 1, %s27
      %p319 = scmp.lt.s32.totalorder %s27, 3
      %p320 = pnand %p318, %p319
      %p321 = pneg %p320
      // Predicated region
      $region9: #{_lambda_.1} parent=5 // pred_check
        _
      $region10: #{_lambda_.1} parent=5 // pred_check_branch
        %323 = sbr.rel (%p320) target = $region12
      $region11: #{_lambda_.1} parent=5 // pred_region
        %s324 = ssub.s32 %s27, 1
        // Predicated region
        $region13: #{_lambda_.1} parent=11 // pred_check
          %p325 = pneg %p74
        $region14: #{_lambda_.1} parent=11 // pred_check_branch
          %327 = sbr.rel (%p325) target = $region16
        $region15: #{_lambda_.1} parent=11 // pred_region
          _
        $region16: #{_lambda_.1} parent=11 // pred_fallthru
          _
        // Predicated region
        $region17: #{_lambda_.1} parent=11 // pred_check
          %p328 = pneg %p121
        $region18: #{_lambda_.1} parent=11 // pred_check_branch
          %330 = sbr.rel (%p328) target = $region20
        $region19: #{_lambda_.1} parent=11 // pred_region
          %s332 = ssub.s32 64, 64
          %333 = vsyncadd [#allocation7], %s332
          %s335 = sshll.u32 [#allocation6], 4
          %s336 = int_to_ptr.vmem [resolvable:$true] %s335
          %338 = dma.hbm_to_vmem [thread:$0]  %s3, 64, %s336, [#allocation7]
        $region20: #{_lambda_.1} parent=11 // pred_fallthru
          _
        // Predicated region
        $region21: #{_lambda_.1} parent=11 // pred_check
          %p339 = pneg %p142
        $region22: #{_lambda_.1} parent=11 // pred_check_branch
          %341 = sbr.rel (%p339) target = $region24
        $region23: #{_lambda_.1} parent=11 // pred_region
          %s343 = ssub.s32 16384, 16384
          %344 = vsyncadd [#allocation7], %s343
          %s345 = sshll.u32 [#allocation8], 4
          %s346 = int_to_ptr.vmem [resolvable:$true] %s345
          %351 = dma.hbm_to_vmem [thread:$0]  %s4, 16384, %s346, [#allocation7], 256, 256, 16
        $region24: #{_lambda_.1} parent=11 // pred_fallthru
          _
        // Predicated region
        $region25: #{_lambda_.1} parent=11 // pred_check
          %p352 = pneg %p163
        $region26: #{_lambda_.1} parent=11 // pred_check_branch
          %354 = sbr.rel (%p352) target = $region28
        $region27: #{_lambda_.1} parent=11 // pred_region
          %s356 = ssub.s32 64, 64
          %357 = vsyncadd [#allocation10], %s356
          %s359 = sshll.u32 [#allocation9], 4
          %s360 = int_to_ptr.vmem [resolvable:$true] %s359
          %362 = dma.hbm_to_vmem [thread:$0]  %s5, 64, %s360, [#allocation10]
        $region28: #{_lambda_.1} parent=11 // pred_fallthru
          _
        // Predicated region
        $region29: #{_lambda_.1} parent=11 // pred_check
          %p363 = pneg %p184
        $region30: #{_lambda_.1} parent=11 // pred_check_branch
          %365 = sbr.rel (%p363) target = $region32
        $region31: #{_lambda_.1} parent=11 // pred_region
          %s367 = ssub.s32 16384, 16384
          %368 = vsyncadd [#allocation10], %s367
          %s369 = sshll.u32 [#allocation11], 4
          %s370 = int_to_ptr.vmem [resolvable:$true] %s369
          %375 = dma.hbm_to_vmem [thread:$0]  %s6, 16384, %s370, [#allocation10], 256, 256, 16
        $region32: #{_lambda_.1} parent=11 // pred_fallthru
          _
        // Predicated region
        $region33: #{_lambda_.1} parent=11 // pred_check
          %p376 = pneg %p205
        $region34: #{_lambda_.1} parent=11 // pred_check_branch
          %378 = sbr.rel (%p376) target = $region36
        $region35: #{_lambda_.1} parent=11 // pred_region
          %s380 = ssub.s32 64, 64
          %381 = vsyncadd [#allocation13], %s380
          %s383 = sshll.u32 [#allocation12], 4
          %s384 = int_to_ptr.vmem [resolvable:$true] %s383
          %386 = dma.hbm_to_vmem [thread:$0]  %s7, 64, %s384, [#allocation13]
        $region36: #{_lambda_.1} parent=11 // pred_fallthru
          _
        // Predicated region
        $region37: #{_lambda_.1} parent=11 // pred_check
          %p387 = pneg %p226
        $region38: #{_lambda_.1} parent=11 // pred_check_branch
          %389 = sbr.rel (%p387) target = $region40
        $region39: #{_lambda_.1} parent=11 // pred_region
          %s391 = ssub.s32 16384, 16384
          %392 = vsyncadd [#allocation13], %s391
          %s393 = sshll.u32 [#allocation14], 4
          %s394 = int_to_ptr.vmem [resolvable:$true] %s393
          %399 = dma.hbm_to_vmem [thread:$0]  %s8, 16384, %s394, [#allocation13], 256, 256, 16
        $region40: #{_lambda_.1} parent=11 // pred_fallthru
          _
        // Predicated region
        $region41: #{_lambda_.1} parent=11 // pred_check
          %p400 = pneg %p247
        $region42: #{_lambda_.1} parent=11 // pred_check_branch
          %402 = sbr.rel (%p400) target = $region44
        $region43: #{_lambda_.1} parent=11 // pred_region
          %s404 = ssub.s32 64, 64
          %405 = vsyncadd [#allocation16], %s404
          %s407 = sshll.u32 [#allocation15], 4
          %s408 = int_to_ptr.vmem [resolvable:$true] %s407
          %410 = dma.hbm_to_vmem [thread:$0]  %s9, 64, %s408, [#allocation16]
        $region44: #{_lambda_.1} parent=11 // pred_fallthru
          _
        // Predicated region
        $region45: #{_lambda_.1} parent=11 // pred_check
          %p411 = pneg %p268
        $region46: #{_lambda_.1} parent=11 // pred_check_branch
          %413 = sbr.rel (%p411) target = $region48
        $region47: #{_lambda_.1} parent=11 // pred_region
          %s415 = ssub.s32 4096, 4096
          %416 = vsyncadd [#allocation16], %s415
          %s417 = sshll.u32 [#allocation17], 4
          %s418 = int_to_ptr.vmem [resolvable:$true] %s417
          %423 = dma.hbm_to_vmem [thread:$0]  %s10, 4096, %s418, [#allocation16], 64, 64, 4
        $region48: #{_lambda_.1} parent=11 // pred_fallthru
          _
        // Predicated region
        $region49: #{_lambda_.1} parent=11 // pred_check
          %p424 = pneg %p289
        $region50: #{_lambda_.1} parent=11 // pred_check_branch
          %426 = sbr.rel (%p424) target = $region52
        $region51: #{_lambda_.1} parent=11 // pred_region
          %s428 = ssub.s32 16, 16
          %429 = vsyncadd [#allocation19], %s428
          %s431 = sshll.u32 [#allocation18], 4
          %s432 = int_to_ptr.vmem [resolvable:$true] %s431
          %434 = dma.hbm_to_vmem [thread:$0]  %s11, 16, %s432, [#allocation19]
        $region52: #{_lambda_.1} parent=11 // pred_fallthru
          _
      $region12: #{_lambda_.1} parent=5 // pred_fallthru
        _
      %p435 = scmp.lt.s32.totalorder %s27, 2
      // Predicated region
      $region53: #{_lambda_.1} parent=5 // pred_check
        %p436 = pneg %p435
      $region54: #{_lambda_.1} parent=5 // pred_check_branch
        %438 = sbr.rel (%p436) target = $region56
      $region55: #{_lambda_.1} parent=5 // pred_region
        // Predicated region
        $region57: #{_lambda_.1} parent=55 // pred_check
          %p439 = pneg %p47
        $region58: #{_lambda_.1} parent=55 // pred_check_branch
          %441 = sbr.rel (%p439) target = $region60
        $region59: #{_lambda_.1} parent=55 // pred_region
          %s442 = smul.u32 5, %s27
          %p443 = scmp.lt.s32.totalorder %s442, 9
          %s444 = scalar_select %p443, %s442, 9
          %s445 = smul.addr %s444, 2
          %s446 = scalar_lea.vmem %s0, %s445
          %s447 = smul.u32 5, %s27
        $region60: #{_lambda_.1} parent=55 // pred_fallthru
          _
        // Predicated region
        $region61: #{_lambda_.1} parent=55 // pred_check
          %p448 = pneg %p94
        $region62: #{_lambda_.1} parent=55 // pred_check_branch
          %450 = sbr.rel (%p448) target = $region64
        $region63: #{_lambda_.1} parent=55 // pred_region
          %s451 = sand.u32 %s84, 1
          %s452 = scalar_lea.sflag [#allocation4], %s451
          %s453 = sand.u32 %s84, 1
          %s454 = smul.addr %s453, 1280
          %s455 = scalar_lea.vmem [#allocation3], %s454
          %s456 = smul.u32 80, %s27
          %s458 = ssub.s32 20480, 20480
          %459 = vsyncadd %s452, %s458
          %s460 = smul.addr %s456, 4
          %s461 = smul.addr %s460, 64
          %s462 = scalar_lea.hbm %s2, %s461
          %s463 = sshll.u32 %s455, 4
          %s464 = int_to_ptr.vmem [resolvable:$true] %s463
          %469 = dma.hbm_to_vmem [thread:$0]  %s462, 20480, %s464, %s452, 256, 256, 16
        $region64: #{_lambda_.1} parent=55 // pred_fallthru
          _
      $region56: #{_lambda_.1} parent=5 // pred_fallthru
        _
      %p470 = scmp.le.s32.totalorder 1, %s27
      %p471 = scmp.lt.s32.totalorder %s27, 3
      %p472 = pnand %p470, %p471
      %p473 = pneg %p472
      // Predicated region
      $region65: #{_lambda_.1} parent=5 // pred_check
        _
      $region66: #{_lambda_.1} parent=5 // pred_check_branch
        %475 = sbr.rel (%p472) target = $region68
      $region67: #{_lambda_.1} parent=5 // pred_region
        %s476 = ssub.s32 %s27, 1
        %s477 = sand.u32 %s87, 1
        %s478 = scalar_lea.sflag [#allocation4], %s477
        %s479 = sand.u32 %s87, 1
        %s480 = smul.addr %s479, 1280
        %s481 = scalar_lea.vmem [#allocation3], %s480
        // Predicated region
        $region69: #{_lambda_.1} parent=67 // pred_check
          %p482 = pneg %p100
        $region70: #{_lambda_.1} parent=67 // pred_check_branch
          %484 = sbr.rel (%p482) target = $region72
        $region71: #{_lambda_.1} parent=67 // pred_region
          %485 = dma.done %s478, 20480
        $region72: #{_lambda_.1} parent=67 // pred_fallthru
          _
        // Predicated region
        $region73: #{_lambda_.1} parent=67 // pred_check
          %p486 = pneg %p121
        $region74: #{_lambda_.1} parent=67 // pred_check_branch
          %488 = sbr.rel (%p486) target = $region76
        $region75: #{_lambda_.1} parent=67 // pred_region
          %489 = dma.done [#allocation7], 64
        $region76: #{_lambda_.1} parent=67 // pred_fallthru
          _
        // Predicated region
        $region77: #{_lambda_.1} parent=67 // pred_check
          %p490 = pneg %p142
        $region78: #{_lambda_.1} parent=67 // pred_check_branch
          %492 = sbr.rel (%p490) target = $region80
        $region79: #{_lambda_.1} parent=67 // pred_region
          %493 = dma.done [#allocation7], 16384
        $region80: #{_lambda_.1} parent=67 // pred_fallthru
          _
        // Predicated region
        $region81: #{_lambda_.1} parent=67 // pred_check
          %p494 = pneg %p163
        $region82: #{_lambda_.1} parent=67 // pred_check_branch
          %496 = sbr.rel (%p494) target = $region84
        $region83: #{_lambda_.1} parent=67 // pred_region
          %497 = dma.done [#allocation10], 64
        $region84: #{_lambda_.1} parent=67 // pred_fallthru
          _
        // Predicated region
        $region85: #{_lambda_.1} parent=67 // pred_check
          %p498 = pneg %p184
        $region86: #{_lambda_.1} parent=67 // pred_check_branch
          %500 = sbr.rel (%p498) target = $region88
        $region87: #{_lambda_.1} parent=67 // pred_region
          %501 = dma.done [#allocation10], 16384
        $region88: #{_lambda_.1} parent=67 // pred_fallthru
          _
        // Predicated region
        $region89: #{_lambda_.1} parent=67 // pred_check
          %p502 = pneg %p205
        $region90: #{_lambda_.1} parent=67 // pred_check_branch
          %504 = sbr.rel (%p502) target = $region92
        $region91: #{_lambda_.1} parent=67 // pred_region
          %505 = dma.done [#allocation13], 64
        $region92: #{_lambda_.1} parent=67 // pred_fallthru
          _
        // Predicated region
        $region93: #{_lambda_.1} parent=67 // pred_check
          %p506 = pneg %p226
        $region94: #{_lambda_.1} parent=67 // pred_check_branch
          %508 = sbr.rel (%p506) target = $region96
        $region95: #{_lambda_.1} parent=67 // pred_region
          %509 = dma.done [#allocation13], 16384
        $region96: #{_lambda_.1} parent=67 // pred_fallthru
          _
        // Predicated region
        $region97: #{_lambda_.1} parent=67 // pred_check
          %p510 = pneg %p247
        $region98: #{_lambda_.1} parent=67 // pred_check_branch
          %512 = sbr.rel (%p510) target = $region100
        $region99: #{_lambda_.1} parent=67 // pred_region
          %513 = dma.done [#allocation16], 64
        $region100: #{_lambda_.1} parent=67 // pred_fallthru
          _
        // Predicated region
        $region101: #{_lambda_.1} parent=67 // pred_check
          %p514 = pneg %p268
        $region102: #{_lambda_.1} parent=67 // pred_check_branch
          %516 = sbr.rel (%p514) target = $region104
        $region103: #{_lambda_.1} parent=67 // pred_region
          %517 = dma.done [#allocation16], 4096
        $region104: #{_lambda_.1} parent=67 // pred_fallthru
          _
        // Predicated region
        $region105: #{_lambda_.1} parent=67 // pred_check
          %p518 = pneg %p289
        $region106: #{_lambda_.1} parent=67 // pred_check_branch
          %520 = sbr.rel (%p518) target = $region108
        $region107: #{_lambda_.1} parent=67 // pred_region
          %521 = dma.done [#allocation19], 16
        $region108: #{_lambda_.1} parent=67 // pred_fallthru
          _
        %s522 = smul.u32 5, %s32
        %p523 = scmp.lt.s32.totalorder %s522, 9
        %s524 = scalar_select %p523, %s522, 9
        %s525 = smul.addr %s524, 2
        %s526 = scalar_lea.vmem %s0, %s525
        %p527 = pneg %p53
        %p528 = pneg %p50
        %p529 = pneg %p74
        %p530 = pneg %p71
        %s531 = sand.u32 %s87, 1
        %s532 = scalar_lea.sflag [#allocation4], %s531
        %s533 = sand.u32 %s87, 1
        %s534 = smul.addr %s533, 1280
        %s535 = scalar_lea.vmem [#allocation3], %s534
        %p536 = pneg %p100
        %p537 = pneg %p97
        %p538 = pneg %p121
        %p539 = pneg %p118
        %p540 = pneg %p142
        %p541 = pneg %p139
        %p542 = pneg %p163
        %p543 = pneg %p160
        %p544 = pneg %p184
        %p545 = pneg %p181
        %p546 = pneg %p205
        %p547 = pneg %p202
        %p548 = pneg %p226
        %p549 = pneg %p223
        %p550 = pneg %p247
        %p551 = pneg %p244
        %p552 = pneg %p268
        %p553 = pneg %p265
        %p554 = pneg %p289
        %p555 = pneg %p286
        %p556 = pneg %p310
        %p557 = pneg %p307
        %s558 = smul.u32 5, %s32
        %p559 = scmp.lt.s32.totalorder %s558, 9
        %s560 = scalar_select %p559, %s558, 9
        %s561 = smul.addr %s560, 2
        %s562 = scalar_lea.vmem %s0, %s561
        %s563 = smul.u32 5, %s32
        %s564 = smul.u32 80, %s32
        %p566 = scmp.eq.s32.totalorder %s32, 0
        // Predicated region
        $region109: #{_lambda_.1} parent=67 // pred_check
          %p567 = pneg %p566
        $region110: #{_lambda_.1} parent=67 // pred_check_branch
          %569 = sbr.rel (%p567) target = $region112
        $region111: #{_lambda_.1} parent=67 // pred_region
          %570 = vst [vmem:[#allocation2] sm:$0xff] 0.0
        $region112: #{_lambda_.1} parent=67 // pred_fallthru
          _
        %v571 = vld [vmem:[#allocation2] sm:$0xff]
        %v572 = vld [vmem:[%s562] sm:$0xff]
        %v573 = vld [vmem:[%s562 + $0x8] sm:$0x3]
        %v576 = vcombine.high %v572, %v572
        %v578 = vunpack.c.l.s4 1983009808
        %v579 = vunpack.c.0.s8 %v578
        %v580 = vlaneseq
        %v581 = vshrl.u32 %v580, 7
        %v582 = vsub.s32 %v579, %v581
        %v583 = vrot.slane %v572, %v582
        %v585 = vunpack.c.l.s4 1983009808
        %v586 = vunpack.c.0.s8 %v585
        %v587 = vlaneseq
        %v588 = vshrl.u32 %v587, 7
        %v589 = vsub.s32 %v586, %v588
        %v590 = vrot.slane %v576, %v589
        %v591 = vcombine.high %v583, %v583
        %v592 = vcombine.high %v590, %v590
        %v594 = vunpack.c.l.s4 1983009808
        %v595 = vunpack.c.0.s8 %v594
        %v596 = vlaneseq
        %v597 = vshrl.u32 %v596, 7
        %v598 = vsub.s32 %v595, %v597
        %v599 = vrot.slane %v573, %v598
        %v605 = vpack.c.bf16 %v583, %v583
        %v606 = vpack.c.bf16 %v591, %v591
        %v607 = vpack.c.bf16 %v590, %v590
        %v608 = vpack.c.bf16 %v592, %v592
        %v609 = vpack.c.bf16 %v599, %v599
        %v610 = vld [vmem:[%s481] sm:$0xff]
        %v611 = vld [vmem:[%s481 + $0x8] sm:$0xff]
        %v612 = vld [vmem:[%s481 + $0x10] sm:$0xff]
        %v613 = vld [vmem:[%s481 + $0x18] sm:$0xff]
        %v614 = vld [vmem:[%s481 + $0x20] sm:$0xff]
        %v615 = vld [vmem:[%s481 + $0x28] sm:$0xff]
        %v616 = vld [vmem:[%s481 + $0x30] sm:$0xff]
        %v617 = vld [vmem:[%s481 + $0x38] sm:$0xff]
        %v618 = vld [vmem:[%s481 + $0x40] sm:$0xff]
        %v619 = vld [vmem:[%s481 + $0x48] sm:$0xff]
        %v620 = vld [vmem:[%s481 + $0x50] sm:$0xff]
        %v621 = vld [vmem:[%s481 + $0x58] sm:$0xff]
        %v622 = vld [vmem:[%s481 + $0x60] sm:$0xff]
        %v623 = vld [vmem:[%s481 + $0x68] sm:$0xff]
        %v624 = vld [vmem:[%s481 + $0x70] sm:$0xff]
        %v625 = vld [vmem:[%s481 + $0x78] sm:$0xff]
        %v626 = vld [vmem:[%s481 + $0x80] sm:$0xff]
        %v627 = vld [vmem:[%s481 + $0x88] sm:$0xff]
        %v628 = vld [vmem:[%s481 + $0x90] sm:$0xff]
        %v629 = vld [vmem:[%s481 + $0x98] sm:$0xff]
        %v630 = vld [vmem:[%s481 + $0xa0] sm:$0xff]
        %v631 = vld [vmem:[%s481 + $0xa8] sm:$0xff]
        %v632 = vld [vmem:[%s481 + $0xb0] sm:$0xff]
        %v633 = vld [vmem:[%s481 + $0xb8] sm:$0xff]
        %v634 = vld [vmem:[%s481 + $0xc0] sm:$0xff]
        %v635 = vld [vmem:[%s481 + $0xc8] sm:$0xff]
        %v636 = vld [vmem:[%s481 + $0xd0] sm:$0xff]
        %v637 = vld [vmem:[%s481 + $0xd8] sm:$0xff]
        %v638 = vld [vmem:[%s481 + $0xe0] sm:$0xff]
        %v639 = vld [vmem:[%s481 + $0xe8] sm:$0xff]
        %v640 = vld [vmem:[%s481 + $0xf0] sm:$0xff]
        %v641 = vld [vmem:[%s481 + $0xf8] sm:$0xff]
        %v642 = vld [vmem:[%s481 + $0x100] sm:$0xff]
        %v643 = vld [vmem:[%s481 + $0x108] sm:$0xff]
        %v644 = vld [vmem:[%s481 + $0x110] sm:$0xff]
        %v645 = vld [vmem:[%s481 + $0x118] sm:$0xff]
        %v646 = vld [vmem:[%s481 + $0x120] sm:$0xff]
        %v647 = vld [vmem:[%s481 + $0x128] sm:$0xff]
        %v648 = vld [vmem:[%s481 + $0x130] sm:$0xff]
        %v649 = vld [vmem:[%s481 + $0x138] sm:$0xff]
        %v650 = vld [vmem:[%s481 + $0x140] sm:$0xff]
        %v651 = vld [vmem:[%s481 + $0x148] sm:$0xff]
        %v652 = vld [vmem:[%s481 + $0x150] sm:$0xff]
        %v653 = vld [vmem:[%s481 + $0x158] sm:$0xff]
        %v654 = vld [vmem:[%s481 + $0x160] sm:$0xff]
        %v655 = vld [vmem:[%s481 + $0x168] sm:$0xff]
        %v656 = vld [vmem:[%s481 + $0x170] sm:$0xff]
        %v657 = vld [vmem:[%s481 + $0x178] sm:$0xff]
        %v658 = vld [vmem:[%s481 + $0x180] sm:$0xff]
        %v659 = vld [vmem:[%s481 + $0x188] sm:$0xff]
        %v660 = vld [vmem:[%s481 + $0x190] sm:$0xff]
        %v661 = vld [vmem:[%s481 + $0x198] sm:$0xff]
        %v662 = vld [vmem:[%s481 + $0x1a0] sm:$0xff]
        %v663 = vld [vmem:[%s481 + $0x1a8] sm:$0xff]
        %v664 = vld [vmem:[%s481 + $0x1b0] sm:$0xff]
        %v665 = vld [vmem:[%s481 + $0x1b8] sm:$0xff]
        %v666 = vld [vmem:[%s481 + $0x1c0] sm:$0xff]
        %v667 = vld [vmem:[%s481 + $0x1c8] sm:$0xff]
        %v668 = vld [vmem:[%s481 + $0x1d0] sm:$0xff]
        %v669 = vld [vmem:[%s481 + $0x1d8] sm:$0xff]
        %v670 = vld [vmem:[%s481 + $0x1e0] sm:$0xff]
        %v671 = vld [vmem:[%s481 + $0x1e8] sm:$0xff]
        %v672 = vld [vmem:[%s481 + $0x1f0] sm:$0xff]
        %v673 = vld [vmem:[%s481 + $0x1f8] sm:$0xff]
        %v674 = vld [vmem:[%s481 + $0x200] sm:$0xff]
        %v675 = vld [vmem:[%s481 + $0x208] sm:$0xff]
        %v676 = vld [vmem:[%s481 + $0x210] sm:$0xff]
        %v677 = vld [vmem:[%s481 + $0x218] sm:$0xff]
        %v678 = vld [vmem:[%s481 + $0x220] sm:$0xff]
        %v679 = vld [vmem:[%s481 + $0x228] sm:$0xff]
        %v680 = vld [vmem:[%s481 + $0x230] sm:$0xff]
        %v681 = vld [vmem:[%s481 + $0x238] sm:$0xff]
        %v682 = vld [vmem:[%s481 + $0x240] sm:$0xff]
        %v683 = vld [vmem:[%s481 + $0x248] sm:$0xff]
        %v684 = vld [vmem:[%s481 + $0x250] sm:$0xff]
        %v685 = vld [vmem:[%s481 + $0x258] sm:$0xff]
        %v686 = vld [vmem:[%s481 + $0x260] sm:$0xff]
        %v687 = vld [vmem:[%s481 + $0x268] sm:$0xff]
        %v688 = vld [vmem:[%s481 + $0x270] sm:$0xff]
        %v689 = vld [vmem:[%s481 + $0x278] sm:$0xff]
        %v690 = vld [vmem:[%s481 + $0x280] sm:$0xff]
        %v691 = vld [vmem:[%s481 + $0x288] sm:$0xff]
        %v692 = vld [vmem:[%s481 + $0x290] sm:$0xff]
        %v693 = vld [vmem:[%s481 + $0x298] sm:$0xff]
        %v694 = vld [vmem:[%s481 + $0x2a0] sm:$0xff]
        %v695 = vld [vmem:[%s481 + $0x2a8] sm:$0xff]
        %v696 = vld [vmem:[%s481 + $0x2b0] sm:$0xff]
        %v697 = vld [vmem:[%s481 + $0x2b8] sm:$0xff]
        %v698 = vld [vmem:[%s481 + $0x2c0] sm:$0xff]
        %v699 = vld [vmem:[%s481 + $0x2c8] sm:$0xff]
        %v700 = vld [vmem:[%s481 + $0x2d0] sm:$0xff]
        %v701 = vld [vmem:[%s481 + $0x2d8] sm:$0xff]
        %v702 = vld [vmem:[%s481 + $0x2e0] sm:$0xff]
        %v703 = vld [vmem:[%s481 + $0x2e8] sm:$0xff]
        %v704 = vld [vmem:[%s481 + $0x2f0] sm:$0xff]
        %v705 = vld [vmem:[%s481 + $0x2f8] sm:$0xff]
        %v706 = vld [vmem:[%s481 + $0x300] sm:$0xff]
        %v707 = vld [vmem:[%s481 + $0x308] sm:$0xff]
        %v708 = vld [vmem:[%s481 + $0x310] sm:$0xff]
        %v709 = vld [vmem:[%s481 + $0x318] sm:$0xff]
        %v710 = vld [vmem:[%s481 + $0x320] sm:$0xff]
        %v711 = vld [vmem:[%s481 + $0x328] sm:$0xff]
        %v712 = vld [vmem:[%s481 + $0x330] sm:$0xff]
        %v713 = vld [vmem:[%s481 + $0x338] sm:$0xff]
        %v714 = vld [vmem:[%s481 + $0x340] sm:$0xff]
        %v715 = vld [vmem:[%s481 + $0x348] sm:$0xff]
        %v716 = vld [vmem:[%s481 + $0x350] sm:$0xff]
        %v717 = vld [vmem:[%s481 + $0x358] sm:$0xff]
        %v718 = vld [vmem:[%s481 + $0x360] sm:$0xff]
        %v719 = vld [vmem:[%s481 + $0x368] sm:$0xff]
        %v720 = vld [vmem:[%s481 + $0x370] sm:$0xff]
        %v721 = vld [vmem:[%s481 + $0x378] sm:$0xff]
        %v722 = vld [vmem:[%s481 + $0x380] sm:$0xff]
        %v723 = vld [vmem:[%s481 + $0x388] sm:$0xff]
        %v724 = vld [vmem:[%s481 + $0x390] sm:$0xff]
        %v725 = vld [vmem:[%s481 + $0x398] sm:$0xff]
        %v726 = vld [vmem:[%s481 + $0x3a0] sm:$0xff]
        %v727 = vld [vmem:[%s481 + $0x3a8] sm:$0xff]
        %v728 = vld [vmem:[%s481 + $0x3b0] sm:$0xff]
        %v729 = vld [vmem:[%s481 + $0x3b8] sm:$0xff]
        %v730 = vld [vmem:[%s481 + $0x3c0] sm:$0xff]
        %v731 = vld [vmem:[%s481 + $0x3c8] sm:$0xff]
        %v732 = vld [vmem:[%s481 + $0x3d0] sm:$0xff]
        %v733 = vld [vmem:[%s481 + $0x3d8] sm:$0xff]
        %v734 = vld [vmem:[%s481 + $0x3e0] sm:$0xff]
        %v735 = vld [vmem:[%s481 + $0x3e8] sm:$0xff]
        %v736 = vld [vmem:[%s481 + $0x3f0] sm:$0xff]
        %v737 = vld [vmem:[%s481 + $0x3f8] sm:$0xff]
        %v738 = vld [vmem:[%s481 + $0x400] sm:$0xff]
        %v739 = vld [vmem:[%s481 + $0x408] sm:$0xff]
        %v740 = vld [vmem:[%s481 + $0x410] sm:$0xff]
        %v741 = vld [vmem:[%s481 + $0x418] sm:$0xff]
        %v742 = vld [vmem:[%s481 + $0x420] sm:$0xff]
        %v743 = vld [vmem:[%s481 + $0x428] sm:$0xff]
        %v744 = vld [vmem:[%s481 + $0x430] sm:$0xff]
        %v745 = vld [vmem:[%s481 + $0x438] sm:$0xff]
        %v746 = vld [vmem:[%s481 + $0x440] sm:$0xff]
        %v747 = vld [vmem:[%s481 + $0x448] sm:$0xff]
        %v748 = vld [vmem:[%s481 + $0x450] sm:$0xff]
        %v749 = vld [vmem:[%s481 + $0x458] sm:$0xff]
        %v750 = vld [vmem:[%s481 + $0x460] sm:$0xff]
        %v751 = vld [vmem:[%s481 + $0x468] sm:$0xff]
        %v752 = vld [vmem:[%s481 + $0x470] sm:$0xff]
        %v753 = vld [vmem:[%s481 + $0x478] sm:$0xff]
        %v754 = vld [vmem:[%s481 + $0x480] sm:$0xff]
        %v755 = vld [vmem:[%s481 + $0x488] sm:$0xff]
        %v756 = vld [vmem:[%s481 + $0x490] sm:$0xff]
        %v757 = vld [vmem:[%s481 + $0x498] sm:$0xff]
        %v758 = vld [vmem:[%s481 + $0x4a0] sm:$0xff]
        %v759 = vld [vmem:[%s481 + $0x4a8] sm:$0xff]
        %v760 = vld [vmem:[%s481 + $0x4b0] sm:$0xff]
        %v761 = vld [vmem:[%s481 + $0x4b8] sm:$0xff]
        %v762 = vld [vmem:[%s481 + $0x4c0] sm:$0xff]
        %v763 = vld [vmem:[%s481 + $0x4c8] sm:$0xff]
        %v764 = vld [vmem:[%s481 + $0x4d0] sm:$0xff]
        %v765 = vld [vmem:[%s481 + $0x4d8] sm:$0xff]
        %v766 = vld [vmem:[%s481 + $0x4e0] sm:$0xff]
        %v767 = vld [vmem:[%s481 + $0x4e8] sm:$0xff]
        %v768 = vld [vmem:[%s481 + $0x4f0] sm:$0xff]
        %v769 = vld [vmem:[%s481 + $0x4f8] sm:$0xff]
        %v930 = vunpack.c.l.b16 %v610
        %v931 = vunpack.c.h.b16 %v610
        %v932 = vunpack.c.l.b16 %v611
        %v933 = vunpack.c.h.b16 %v611
        %v934 = vunpack.c.l.b16 %v612
        %v935 = vunpack.c.h.b16 %v612
        %v936 = vunpack.c.l.b16 %v613
        %v937 = vunpack.c.h.b16 %v613
        %v938 = vunpack.c.l.b16 %v614
        %v939 = vunpack.c.h.b16 %v614
        %v940 = vunpack.c.l.b16 %v615
        %v941 = vunpack.c.h.b16 %v615
        %v942 = vunpack.c.l.b16 %v616
        %v943 = vunpack.c.h.b16 %v616
        %v944 = vunpack.c.l.b16 %v617
        %v945 = vunpack.c.h.b16 %v617
        %v946 = vunpack.c.l.b16 %v618
        %v947 = vunpack.c.h.b16 %v618
        %v948 = vunpack.c.l.b16 %v619
        %v949 = vunpack.c.h.b16 %v619
        %v950 = vunpack.c.l.b16 %v620
        %v951 = vunpack.c.h.b16 %v620
        %v952 = vunpack.c.l.b16 %v621
        %v953 = vunpack.c.h.b16 %v621
        %v954 = vunpack.c.l.b16 %v622
        %v955 = vunpack.c.h.b16 %v622
        %v956 = vunpack.c.l.b16 %v623
        %v957 = vunpack.c.h.b16 %v623
        %v958 = vunpack.c.l.b16 %v624
        %v959 = vunpack.c.h.b16 %v624
        %v960 = vunpack.c.l.b16 %v625
        %v961 = vunpack.c.h.b16 %v625
        %v962 = vunpack.c.l.b16 %v626
        %v963 = vunpack.c.h.b16 %v626
        %v964 = vunpack.c.l.b16 %v627
        %v965 = vunpack.c.h.b16 %v627
        %v966 = vunpack.c.l.b16 %v628
        %v967 = vunpack.c.h.b16 %v628
        %v968 = vunpack.c.l.b16 %v629
        %v969 = vunpack.c.h.b16 %v629
        %v970 = vunpack.c.l.b16 %v630
        %v971 = vunpack.c.h.b16 %v630
        %v972 = vunpack.c.l.b16 %v631
        %v973 = vunpack.c.h.b16 %v631
        %v974 = vunpack.c.l.b16 %v632
        %v975 = vunpack.c.h.b16 %v632
        %v976 = vunpack.c.l.b16 %v633
        %v977 = vunpack.c.h.b16 %v633
        %v978 = vunpack.c.l.b16 %v634
        %v979 = vunpack.c.h.b16 %v634
        %v980 = vunpack.c.l.b16 %v635
        %v981 = vunpack.c.h.b16 %v635
        %v982 = vunpack.c.l.b16 %v636
        %v983 = vunpack.c.h.b16 %v636
        %v984 = vunpack.c.l.b16 %v637
        %v985 = vunpack.c.h.b16 %v637
        %v986 = vunpack.c.l.b16 %v638
        %v987 = vunpack.c.h.b16 %v638
        %v988 = vunpack.c.l.b16 %v639
        %v989 = vunpack.c.h.b16 %v639
        %v990 = vunpack.c.l.b16 %v640
        %v991 = vunpack.c.h.b16 %v640
        %v992 = vunpack.c.l.b16 %v641
        %v993 = vunpack.c.h.b16 %v641
        %v994 = vunpack.c.l.b16 %v642
        %v995 = vunpack.c.h.b16 %v642
        %v996 = vunpack.c.l.b16 %v643
        %v997 = vunpack.c.h.b16 %v643
        %v998 = vunpack.c.l.b16 %v644
        %v999 = vunpack.c.h.b16 %v644
        %v1000 = vunpack.c.l.b16 %v645
        %v1001 = vunpack.c.h.b16 %v645
        %v1002 = vunpack.c.l.b16 %v646
        %v1003 = vunpack.c.h.b16 %v646
        %v1004 = vunpack.c.l.b16 %v647
        %v1005 = vunpack.c.h.b16 %v647
        %v1006 = vunpack.c.l.b16 %v648
        %v1007 = vunpack.c.h.b16 %v648
        %v1008 = vunpack.c.l.b16 %v649
        %v1009 = vunpack.c.h.b16 %v649
        %v1010 = vunpack.c.l.b16 %v650
        %v1011 = vunpack.c.h.b16 %v650
        %v1012 = vunpack.c.l.b16 %v651
        %v1013 = vunpack.c.h.b16 %v651
        %v1014 = vunpack.c.l.b16 %v652
        %v1015 = vunpack.c.h.b16 %v652
        %v1016 = vunpack.c.l.b16 %v653
        %v1017 = vunpack.c.h.b16 %v653
        %v1018 = vunpack.c.l.b16 %v654
        %v1019 = vunpack.c.h.b16 %v654
        %v1020 = vunpack.c.l.b16 %v655
        %v1021 = vunpack.c.h.b16 %v655
        %v1022 = vunpack.c.l.b16 %v656
        %v1023 = vunpack.c.h.b16 %v656
        %v1024 = vunpack.c.l.b16 %v657
        %v1025 = vunpack.c.h.b16 %v657
        %v1026 = vunpack.c.l.b16 %v658
        %v1027 = vunpack.c.h.b16 %v658
        %v1028 = vunpack.c.l.b16 %v659
        %v1029 = vunpack.c.h.b16 %v659
        %v1030 = vunpack.c.l.b16 %v660
        %v1031 = vunpack.c.h.b16 %v660
        %v1032 = vunpack.c.l.b16 %v661
        %v1033 = vunpack.c.h.b16 %v661
        %v1034 = vunpack.c.l.b16 %v662
        %v1035 = vunpack.c.h.b16 %v662
        %v1036 = vunpack.c.l.b16 %v663
        %v1037 = vunpack.c.h.b16 %v663
        %v1038 = vunpack.c.l.b16 %v664
        %v1039 = vunpack.c.h.b16 %v664
        %v1040 = vunpack.c.l.b16 %v665
        %v1041 = vunpack.c.h.b16 %v665
        %v1042 = vunpack.c.l.b16 %v666
        %v1043 = vunpack.c.h.b16 %v666
        %v1044 = vunpack.c.l.b16 %v667
        %v1045 = vunpack.c.h.b16 %v667
        %v1046 = vunpack.c.l.b16 %v668
        %v1047 = vunpack.c.h.b16 %v668
        %v1048 = vunpack.c.l.b16 %v669
        %v1049 = vunpack.c.h.b16 %v669
        %v1050 = vunpack.c.l.b16 %v670
        %v1051 = vunpack.c.h.b16 %v670
        %v1052 = vunpack.c.l.b16 %v671
        %v1053 = vunpack.c.h.b16 %v671
        %v1054 = vunpack.c.l.b16 %v672
        %v1055 = vunpack.c.h.b16 %v672
        %v1056 = vunpack.c.l.b16 %v673
        %v1057 = vunpack.c.h.b16 %v673
        %v1058 = vunpack.c.l.b16 %v674
        %v1059 = vunpack.c.h.b16 %v674
        %v1060 = vunpack.c.l.b16 %v675
        %v1061 = vunpack.c.h.b16 %v675
        %v1062 = vunpack.c.l.b16 %v676
        %v1063 = vunpack.c.h.b16 %v676
        %v1064 = vunpack.c.l.b16 %v677
        %v1065 = vunpack.c.h.b16 %v677
        %v1066 = vunpack.c.l.b16 %v678
        %v1067 = vunpack.c.h.b16 %v678
        %v1068 = vunpack.c.l.b16 %v679
        %v1069 = vunpack.c.h.b16 %v679
        %v1070 = vunpack.c.l.b16 %v680
        %v1071 = vunpack.c.h.b16 %v680
        %v1072 = vunpack.c.l.b16 %v681
        %v1073 = vunpack.c.h.b16 %v681
        %v1074 = vunpack.c.l.b16 %v682
        %v1075 = vunpack.c.h.b16 %v682
        %v1076 = vunpack.c.l.b16 %v683
        %v1077 = vunpack.c.h.b16 %v683
        %v1078 = vunpack.c.l.b16 %v684
        %v1079 = vunpack.c.h.b16 %v684
        %v1080 = vunpack.c.l.b16 %v685
        %v1081 = vunpack.c.h.b16 %v685
        %v1082 = vunpack.c.l.b16 %v686
        %v1083 = vunpack.c.h.b16 %v686
        %v1084 = vunpack.c.l.b16 %v687
        %v1085 = vunpack.c.h.b16 %v687
        %v1086 = vunpack.c.l.b16 %v688
        %v1087 = vunpack.c.h.b16 %v688
        %v1088 = vunpack.c.l.b16 %v689
        %v1089 = vunpack.c.h.b16 %v689
        %v1090 = vunpack.c.l.b16 %v690
        %v1091 = vunpack.c.h.b16 %v690
        %v1092 = vunpack.c.l.b16 %v691
        %v1093 = vunpack.c.h.b16 %v691
        %v1094 = vunpack.c.l.b16 %v692
        %v1095 = vunpack.c.h.b16 %v692
        %v1096 = vunpack.c.l.b16 %v693
        %v1097 = vunpack.c.h.b16 %v693
        %v1098 = vunpack.c.l.b16 %v694
        %v1099 = vunpack.c.h.b16 %v694
        %v1100 = vunpack.c.l.b16 %v695
        %v1101 = vunpack.c.h.b16 %v695
        %v1102 = vunpack.c.l.b16 %v696
        %v1103 = vunpack.c.h.b16 %v696
        %v1104 = vunpack.c.l.b16 %v697
        %v1105 = vunpack.c.h.b16 %v697
        %v1106 = vunpack.c.l.b16 %v698
        %v1107 = vunpack.c.h.b16 %v698
        %v1108 = vunpack.c.l.b16 %v699
        %v1109 = vunpack.c.h.b16 %v699
        %v1110 = vunpack.c.l.b16 %v700
        %v1111 = vunpack.c.h.b16 %v700
        %v1112 = vunpack.c.l.b16 %v701
        %v1113 = vunpack.c.h.b16 %v701
        %v1114 = vunpack.c.l.b16 %v702
        %v1115 = vunpack.c.h.b16 %v702
        %v1116 = vunpack.c.l.b16 %v703
        %v1117 = vunpack.c.h.b16 %v703
        %v1118 = vunpack.c.l.b16 %v704
        %v1119 = vunpack.c.h.b16 %v704
        %v1120 = vunpack.c.l.b16 %v705
        %v1121 = vunpack.c.h.b16 %v705
        %v1122 = vunpack.c.l.b16 %v706
        %v1123 = vunpack.c.h.b16 %v706
        %v1124 = vunpack.c.l.b16 %v707
        %v1125 = vunpack.c.h.b16 %v707
        %v1126 = vunpack.c.l.b16 %v708
        %v1127 = vunpack.c.h.b16 %v708
        %v1128 = vunpack.c.l.b16 %v709
        %v1129 = vunpack.c.h.b16 %v709
        %v1130 = vunpack.c.l.b16 %v710
        %v1131 = vunpack.c.h.b16 %v710
        %v1132 = vunpack.c.l.b16 %v711
        %v1133 = vunpack.c.h.b16 %v711
        %v1134 = vunpack.c.l.b16 %v712
        %v1135 = vunpack.c.h.b16 %v712
        %v1136 = vunpack.c.l.b16 %v713
        %v1137 = vunpack.c.h.b16 %v713
        %v1138 = vunpack.c.l.b16 %v714
        %v1139 = vunpack.c.h.b16 %v714
        %v1140 = vunpack.c.l.b16 %v715
        %v1141 = vunpack.c.h.b16 %v715
        %v1142 = vunpack.c.l.b16 %v716
        %v1143 = vunpack.c.h.b16 %v716
        %v1144 = vunpack.c.l.b16 %v717
        %v1145 = vunpack.c.h.b16 %v717
        %v1146 = vunpack.c.l.b16 %v718
        %v1147 = vunpack.c.h.b16 %v718
        %v1148 = vunpack.c.l.b16 %v719
        %v1149 = vunpack.c.h.b16 %v719
        %v1150 = vunpack.c.l.b16 %v720
        %v1151 = vunpack.c.h.b16 %v720
        %v1152 = vunpack.c.l.b16 %v721
        %v1153 = vunpack.c.h.b16 %v721
        %v1154 = vunpack.c.l.b16 %v722
        %v1155 = vunpack.c.h.b16 %v722
        %v1156 = vunpack.c.l.b16 %v723
        %v1157 = vunpack.c.h.b16 %v723
        %v1158 = vunpack.c.l.b16 %v724
        %v1159 = vunpack.c.h.b16 %v724
        %v1160 = vunpack.c.l.b16 %v725
        %v1161 = vunpack.c.h.b16 %v725
        %v1162 = vunpack.c.l.b16 %v726
        %v1163 = vunpack.c.h.b16 %v726
        %v1164 = vunpack.c.l.b16 %v727
        %v1165 = vunpack.c.h.b16 %v727
        %v1166 = vunpack.c.l.b16 %v728
        %v1167 = vunpack.c.h.b16 %v728
        %v1168 = vunpack.c.l.b16 %v729
        %v1169 = vunpack.c.h.b16 %v729
        %v1170 = vunpack.c.l.b16 %v730
        %v1171 = vunpack.c.h.b16 %v730
        %v1172 = vunpack.c.l.b16 %v731
        %v1173 = vunpack.c.h.b16 %v731
        %v1174 = vunpack.c.l.b16 %v732
        %v1175 = vunpack.c.h.b16 %v732
        %v1176 = vunpack.c.l.b16 %v733
        %v1177 = vunpack.c.h.b16 %v733
        %v1178 = vunpack.c.l.b16 %v734
        %v1179 = vunpack.c.h.b16 %v734
        %v1180 = vunpack.c.l.b16 %v735
        %v1181 = vunpack.c.h.b16 %v735
        %v1182 = vunpack.c.l.b16 %v736
        %v1183 = vunpack.c.h.b16 %v736
        %v1184 = vunpack.c.l.b16 %v737
        %v1185 = vunpack.c.h.b16 %v737
        %v1186 = vunpack.c.l.b16 %v738
        %v1187 = vunpack.c.h.b16 %v738
        %v1188 = vunpack.c.l.b16 %v739
        %v1189 = vunpack.c.h.b16 %v739
        %v1190 = vunpack.c.l.b16 %v740
        %v1191 = vunpack.c.h.b16 %v740
        %v1192 = vunpack.c.l.b16 %v741
        %v1193 = vunpack.c.h.b16 %v741
        %v1194 = vunpack.c.l.b16 %v742
        %v1195 = vunpack.c.h.b16 %v742
        %v1196 = vunpack.c.l.b16 %v743
        %v1197 = vunpack.c.h.b16 %v743
        %v1198 = vunpack.c.l.b16 %v744
        %v1199 = vunpack.c.h.b16 %v744
        %v1200 = vunpack.c.l.b16 %v745
        %v1201 = vunpack.c.h.b16 %v745
        %v1202 = vunpack.c.l.b16 %v746
        %v1203 = vunpack.c.h.b16 %v746
        %v1204 = vunpack.c.l.b16 %v747
        %v1205 = vunpack.c.h.b16 %v747
        %v1206 = vunpack.c.l.b16 %v748
        %v1207 = vunpack.c.h.b16 %v748
        %v1208 = vunpack.c.l.b16 %v749
        %v1209 = vunpack.c.h.b16 %v749
        %v1210 = vunpack.c.l.b16 %v750
        %v1211 = vunpack.c.h.b16 %v750
        %v1212 = vunpack.c.l.b16 %v751
        %v1213 = vunpack.c.h.b16 %v751
        %v1214 = vunpack.c.l.b16 %v752
        %v1215 = vunpack.c.h.b16 %v752
        %v1216 = vunpack.c.l.b16 %v753
        %v1217 = vunpack.c.h.b16 %v753
        %v1218 = vunpack.c.l.b16 %v754
        %v1219 = vunpack.c.h.b16 %v754
        %v1220 = vunpack.c.l.b16 %v755
        %v1221 = vunpack.c.h.b16 %v755
        %v1222 = vunpack.c.l.b16 %v756
        %v1223 = vunpack.c.h.b16 %v756
        %v1224 = vunpack.c.l.b16 %v757
        %v1225 = vunpack.c.h.b16 %v757
        %v1226 = vunpack.c.l.b16 %v758
        %v1227 = vunpack.c.h.b16 %v758
        %v1228 = vunpack.c.l.b16 %v759
        %v1229 = vunpack.c.h.b16 %v759
        %v1230 = vunpack.c.l.b16 %v760
        %v1231 = vunpack.c.h.b16 %v760
        %v1232 = vunpack.c.l.b16 %v761
        %v1233 = vunpack.c.h.b16 %v761
        %v1234 = vunpack.c.l.b16 %v762
        %v1235 = vunpack.c.h.b16 %v762
        %v1236 = vunpack.c.l.b16 %v763
        %v1237 = vunpack.c.h.b16 %v763
        %v1238 = vunpack.c.l.b16 %v764
        %v1239 = vunpack.c.h.b16 %v764
        %v1240 = vunpack.c.l.b16 %v765
        %v1241 = vunpack.c.h.b16 %v765
        %v1242 = vunpack.c.l.b16 %v766
        %v1243 = vunpack.c.h.b16 %v766
        %v1244 = vunpack.c.l.b16 %v767
        %v1245 = vunpack.c.h.b16 %v767
        %v1246 = vunpack.c.l.b16 %v768
        %v1247 = vunpack.c.h.b16 %v768
        %v1248 = vunpack.c.l.b16 %v769
        %v1249 = vunpack.c.h.b16 %v769
        %v1250 = vpack.c.b16 %v934, %v930
        %v1251 = vpack.c.b16 %v935, %v931
        %v1252 = vpack.c.b16 %v936, %v932
        %v1253 = vpack.c.b16 %v937, %v933
        %v1254 = vpack.c.b16 %v942, %v938
        %v1255 = vpack.c.b16 %v943, %v939
        %v1256 = vpack.c.b16 %v944, %v940
        %v1257 = vpack.c.b16 %v945, %v941
        %v1258 = vpack.c.b16 %v950, %v946
        %v1259 = vpack.c.b16 %v951, %v947
        %v1260 = vpack.c.b16 %v952, %v948
        %v1261 = vpack.c.b16 %v953, %v949
        %v1262 = vpack.c.b16 %v958, %v954
        %v1263 = vpack.c.b16 %v959, %v955
        %v1264 = vpack.c.b16 %v960, %v956
        %v1265 = vpack.c.b16 %v961, %v957
        %v1266 = vpack.c.b16 %v966, %v962
        %v1267 = vpack.c.b16 %v967, %v963
        %v1268 = vpack.c.b16 %v968, %v964
        %v1269 = vpack.c.b16 %v969, %v965
        %v1270 = vpack.c.b16 %v974, %v970
        %v1271 = vpack.c.b16 %v975, %v971
        %v1272 = vpack.c.b16 %v976, %v972
        %v1273 = vpack.c.b16 %v977, %v973
        %v1274 = vpack.c.b16 %v982, %v978
        %v1275 = vpack.c.b16 %v983, %v979
        %v1276 = vpack.c.b16 %v984, %v980
        %v1277 = vpack.c.b16 %v985, %v981
        %v1278 = vpack.c.b16 %v990, %v986
        %v1279 = vpack.c.b16 %v991, %v987
        %v1280 = vpack.c.b16 %v992, %v988
        %v1281 = vpack.c.b16 %v993, %v989
        %v1282 = vpack.c.b16 %v998, %v994
        %v1283 = vpack.c.b16 %v999, %v995
        %v1284 = vpack.c.b16 %v1000, %v996
        %v1285 = vpack.c.b16 %v1001, %v997
        %v1286 = vpack.c.b16 %v1006, %v1002
        %v1287 = vpack.c.b16 %v1007, %v1003
        %v1288 = vpack.c.b16 %v1008, %v1004
        %v1289 = vpack.c.b16 %v1009, %v1005
        %v1290 = vpack.c.b16 %v1014, %v1010
        %v1291 = vpack.c.b16 %v1015, %v1011
        %v1292 = vpack.c.b16 %v1016, %v1012
        %v1293 = vpack.c.b16 %v1017, %v1013
        %v1294 = vpack.c.b16 %v1022, %v1018
        %v1295 = vpack.c.b16 %v1023, %v1019
        %v1296 = vpack.c.b16 %v1024, %v1020
        %v1297 = vpack.c.b16 %v1025, %v1021
        %v1298 = vpack.c.b16 %v1030, %v1026
        %v1299 = vpack.c.b16 %v1031, %v1027
        %v1300 = vpack.c.b16 %v1032, %v1028
        %v1301 = vpack.c.b16 %v1033, %v1029
        %v1302 = vpack.c.b16 %v1038, %v1034
        %v1303 = vpack.c.b16 %v1039, %v1035
        %v1304 = vpack.c.b16 %v1040, %v1036
        %v1305 = vpack.c.b16 %v1041, %v1037
        %v1306 = vpack.c.b16 %v1046, %v1042
        %v1307 = vpack.c.b16 %v1047, %v1043
        %v1308 = vpack.c.b16 %v1048, %v1044
        %v1309 = vpack.c.b16 %v1049, %v1045
        %v1310 = vpack.c.b16 %v1054, %v1050
        %v1311 = vpack.c.b16 %v1055, %v1051
        %v1312 = vpack.c.b16 %v1056, %v1052
        %v1313 = vpack.c.b16 %v1057, %v1053
        %v1314 = vpack.c.b16 %v1062, %v1058
        %v1315 = vpack.c.b16 %v1063, %v1059
        %v1316 = vpack.c.b16 %v1064, %v1060
        %v1317 = vpack.c.b16 %v1065, %v1061
        %v1318 = vpack.c.b16 %v1070, %v1066
        %v1319 = vpack.c.b16 %v1071, %v1067
        %v1320 = vpack.c.b16 %v1072, %v1068
        %v1321 = vpack.c.b16 %v1073, %v1069
        %v1322 = vpack.c.b16 %v1078, %v1074
        %v1323 = vpack.c.b16 %v1079, %v1075
        %v1324 = vpack.c.b16 %v1080, %v1076
        %v1325 = vpack.c.b16 %v1081, %v1077
        %v1326 = vpack.c.b16 %v1086, %v1082
        %v1327 = vpack.c.b16 %v1087, %v1083
        %v1328 = vpack.c.b16 %v1088, %v1084
        %v1329 = vpack.c.b16 %v1089, %v1085
        %v1330 = vpack.c.b16 %v1094, %v1090
        %v1331 = vpack.c.b16 %v1095, %v1091
        %v1332 = vpack.c.b16 %v1096, %v1092
        %v1333 = vpack.c.b16 %v1097, %v1093
        %v1334 = vpack.c.b16 %v1102, %v1098
        %v1335 = vpack.c.b16 %v1103, %v1099
        %v1336 = vpack.c.b16 %v1104, %v1100
        %v1337 = vpack.c.b16 %v1105, %v1101
        %v1338 = vpack.c.b16 %v1110, %v1106
        %v1339 = vpack.c.b16 %v1111, %v1107
        %v1340 = vpack.c.b16 %v1112, %v1108
        %v1341 = vpack.c.b16 %v1113, %v1109
        %v1342 = vpack.c.b16 %v1118, %v1114
        %v1343 = vpack.c.b16 %v1119, %v1115
        %v1344 = vpack.c.b16 %v1120, %v1116
        %v1345 = vpack.c.b16 %v1121, %v1117
        %v1346 = vpack.c.b16 %v1126, %v1122
        %v1347 = vpack.c.b16 %v1127, %v1123
        %v1348 = vpack.c.b16 %v1128, %v1124
        %v1349 = vpack.c.b16 %v1129, %v1125
        %v1350 = vpack.c.b16 %v1134, %v1130
        %v1351 = vpack.c.b16 %v1135, %v1131
        %v1352 = vpack.c.b16 %v1136, %v1132
        %v1353 = vpack.c.b16 %v1137, %v1133
        %v1354 = vpack.c.b16 %v1142, %v1138
        %v1355 = vpack.c.b16 %v1143, %v1139
        %v1356 = vpack.c.b16 %v1144, %v1140
        %v1357 = vpack.c.b16 %v1145, %v1141
        %v1358 = vpack.c.b16 %v1150, %v1146
        %v1359 = vpack.c.b16 %v1151, %v1147
        %v1360 = vpack.c.b16 %v1152, %v1148
        %v1361 = vpack.c.b16 %v1153, %v1149
        %v1362 = vpack.c.b16 %v1158, %v1154
        %v1363 = vpack.c.b16 %v1159, %v1155
        %v1364 = vpack.c.b16 %v1160, %v1156
        %v1365 = vpack.c.b16 %v1161, %v1157
        %v1366 = vpack.c.b16 %v1166, %v1162
        %v1367 = vpack.c.b16 %v1167, %v1163
        %v1368 = vpack.c.b16 %v1168, %v1164
        %v1369 = vpack.c.b16 %v1169, %v1165
        %v1370 = vpack.c.b16 %v1174, %v1170
        %v1371 = vpack.c.b16 %v1175, %v1171
        %v1372 = vpack.c.b16 %v1176, %v1172
        %v1373 = vpack.c.b16 %v1177, %v1173
        %v1374 = vpack.c.b16 %v1182, %v1178
        %v1375 = vpack.c.b16 %v1183, %v1179
        %v1376 = vpack.c.b16 %v1184, %v1180
        %v1377 = vpack.c.b16 %v1185, %v1181
        %v1378 = vpack.c.b16 %v1190, %v1186
        %v1379 = vpack.c.b16 %v1191, %v1187
        %v1380 = vpack.c.b16 %v1192, %v1188
        %v1381 = vpack.c.b16 %v1193, %v1189
        %v1382 = vpack.c.b16 %v1198, %v1194
        %v1383 = vpack.c.b16 %v1199, %v1195
        %v1384 = vpack.c.b16 %v1200, %v1196
        %v1385 = vpack.c.b16 %v1201, %v1197
        %v1386 = vpack.c.b16 %v1206, %v1202
        %v1387 = vpack.c.b16 %v1207, %v1203
        %v1388 = vpack.c.b16 %v1208, %v1204
        %v1389 = vpack.c.b16 %v1209, %v1205
        %v1390 = vpack.c.b16 %v1214, %v1210
        %v1391 = vpack.c.b16 %v1215, %v1211
        %v1392 = vpack.c.b16 %v1216, %v1212
        %v1393 = vpack.c.b16 %v1217, %v1213
        %v1394 = vpack.c.b16 %v1222, %v1218
        %v1395 = vpack.c.b16 %v1223, %v1219
        %v1396 = vpack.c.b16 %v1224, %v1220
        %v1397 = vpack.c.b16 %v1225, %v1221
        %v1398 = vpack.c.b16 %v1230, %v1226
        %v1399 = vpack.c.b16 %v1231, %v1227
        %v1400 = vpack.c.b16 %v1232, %v1228
        %v1401 = vpack.c.b16 %v1233, %v1229
        %v1402 = vpack.c.b16 %v1238, %v1234
        %v1403 = vpack.c.b16 %v1239, %v1235
        %v1404 = vpack.c.b16 %v1240, %v1236
        %v1405 = vpack.c.b16 %v1241, %v1237
        %v1406 = vpack.c.b16 %v1246, %v1242
        %v1407 = vpack.c.b16 %v1247, %v1243
        %v1408 = vpack.c.b16 %v1248, %v1244
        %v1409 = vpack.c.b16 %v1249, %v1245
        %1570 = vmatprep.subr.bf16.mxu0 %v1279
        %1571 = vmatpush1.bf16.msra.mxu0 %v1278
        %1572 = vmatprep.subr.bf16.mxu0 %v1275
        %1573 = vmatpush1.bf16.msra.mxu0 %v1274
        %1574 = vmatprep.subr.bf16.mxu0 %v1271
        %1575 = vmatpush1.bf16.msra.mxu0 %v1270
        %1576 = vmatprep.subr.bf16.mxu0 %v1267
        %1577 = vmatpush1.bf16.msra.mxu0 %v1266
        %1578 = vmatprep.subr.bf16.mxu0 %v1263
        %1579 = vmatpush1.bf16.msra.mxu0 %v1262
        %1580 = vmatprep.subr.bf16.mxu0 %v1259
        %1581 = vmatpush1.bf16.msra.mxu0 %v1258
        %1582 = vmatprep.subr.bf16.mxu0 %v1255
        %1583 = vmatpush1.bf16.msra.mxu0 %v1254
        %1584 = vmatprep.subr.bf16.mxu0 %v1251
        %1585 = vmatpush1.bf16.msra.mxu0 %v1250
        %1586 = vmatprep.subr.bf16.mxu0 %v1311
        %1587 = vmatpush2.bf16.msra.mxu0 %v1310
        %1588 = vmatprep.subr.bf16.mxu0 %v1307
        %1589 = vmatpush2.bf16.msra.mxu0 %v1306
        %1590 = vmatprep.subr.bf16.mxu0 %v1303
        %1591 = vmatpush2.bf16.msra.mxu0 %v1302
        %1592 = vmatprep.subr.bf16.mxu0 %v1299
        %1593 = vmatpush2.bf16.msra.mxu0 %v1298
        %1594 = vmatprep.subr.bf16.mxu0 %v1295
        %1595 = vmatpush2.bf16.msra.mxu0 %v1294
        %1596 = vmatprep.subr.bf16.mxu0 %v1291
        %1597 = vmatpush2.bf16.msra.mxu0 %v1290
        %1598 = vmatprep.subr.bf16.mxu0 %v1287
        %1599 = vmatpush2.bf16.msra.mxu0 %v1286
        %1600 = vmatprep.subr.bf16.mxu0 %v1283
        %1601 = vmatpush2.bf16.msra.mxu0 %v1282
        %1602 = vmatprep.mubr.bf16.mxu0 %v606
        %1603 = vmatmul.mubr.bf16.gmra.mxu0 %v605
        %v1604 = vpop.f32.mrf.mxu0
        %v1605 = vadd.f32 0.0, %v1604
        %v1606 = vpop.f32.mrf.mxu0
        %v1607 = vadd.f32 0.0, %v1606
        %v1608 = vpop.f32.mrf.mxu0
        %v1609 = vpop.f32.mrf.mxu0
        %1610 = vdwg.mxu0
        %1611 = vmatprep.subr.bf16.mxu0 %v1343
        %1612 = vmatpush1.bf16.msra.mxu0 %v1342
        %1613 = vmatprep.subr.bf16.mxu0 %v1339
        %1614 = vmatpush1.bf16.msra.mxu0 %v1338
        %1615 = vmatprep.subr.bf16.mxu0 %v1335
        %1616 = vmatpush1.bf16.msra.mxu0 %v1334
        %1617 = vmatprep.subr.bf16.mxu0 %v1331
        %1618 = vmatpush1.bf16.msra.mxu0 %v1330
        %1619 = vmatprep.subr.bf16.mxu0 %v1327
        %1620 = vmatpush1.bf16.msra.mxu0 %v1326
        %1621 = vmatprep.subr.bf16.mxu0 %v1323
        %1622 = vmatpush1.bf16.msra.mxu0 %v1322
        %1623 = vmatprep.subr.bf16.mxu0 %v1319
        %1624 = vmatpush1.bf16.msra.mxu0 %v1318
        %1625 = vmatprep.subr.bf16.mxu0 %v1315
        %1626 = vmatpush1.bf16.msra.mxu0 %v1314
        %1627 = vmatprep.subr.bf16.mxu0 %v1375
        %1628 = vmatpush2.bf16.msra.mxu0 %v1374
        %1629 = vmatprep.subr.bf16.mxu0 %v1371
        %1630 = vmatpush2.bf16.msra.mxu0 %v1370
        %1631 = vmatprep.subr.bf16.mxu0 %v1367
        %1632 = vmatpush2.bf16.msra.mxu0 %v1366
        %1633 = vmatprep.subr.bf16.mxu0 %v1363
        %1634 = vmatpush2.bf16.msra.mxu0 %v1362
        %1635 = vmatprep.subr.bf16.mxu0 %v1359
        %1636 = vmatpush2.bf16.msra.mxu0 %v1358
        %1637 = vmatprep.subr.bf16.mxu0 %v1355
        %1638 = vmatpush2.bf16.msra.mxu0 %v1354
        %1639 = vmatprep.subr.bf16.mxu0 %v1351
        %1640 = vmatpush2.bf16.msra.mxu0 %v1350
        %1641 = vmatprep.subr.bf16.mxu0 %v1347
        %1642 = vmatpush2.bf16.msra.mxu0 %v1346
        %1643 = vmatprep.mubr.bf16.mxu0 %v608
        %1644 = vmatmul.mubr.bf16.gmra.mxu0 %v607
        %v1645 = vpop.f32.mrf.mxu0
        %v1646 = vadd.f32 %v1605, %v1645
        %v1647 = vpop.f32.mrf.mxu0
        %v1648 = vadd.f32 %v1607, %v1647
        %v1649 = vpop.f32.mrf.mxu0
        %v1650 = vpop.f32.mrf.mxu0
        %1651 = vdwg.mxu0
        %1652 = vmatprep.subr.bf16.mxu0 %v1407
        %1653 = vmatpush1.bf16.msra.mxu0 %v1406
        %1654 = vmatprep.subr.bf16.mxu0 %v1403
        %1655 = vmatpush1.bf16.msra.mxu0 %v1402
        %1656 = vmatprep.subr.bf16.mxu0 %v1399
        %1657 = vmatpush1.bf16.msra.mxu0 %v1398
        %1658 = vmatprep.subr.bf16.mxu0 %v1395
        %1659 = vmatpush1.bf16.msra.mxu0 %v1394
        %1660 = vmatprep.subr.bf16.mxu0 %v1391
        %1661 = vmatpush1.bf16.msra.mxu0 %v1390
        %1662 = vmatprep.subr.bf16.mxu0 %v1387
        %1663 = vmatpush1.bf16.msra.mxu0 %v1386
        %1664 = vmatprep.subr.bf16.mxu0 %v1383
        %1665 = vmatpush1.bf16.msra.mxu0 %v1382
        %1666 = vmatprep.subr.bf16.mxu0 %v1379
        %1667 = vmatpush1.bf16.msra.mxu0 %v1378
        %1668 = vmatprep.subr.bf16.mxu0 0
        %1669 = vmatpush2.bf16.msra.mxu0 0
        %1670 = vmatprep.subr.bf16.mxu0 0
        %1671 = vmatpush2.bf16.msra.mxu0 0
        %1672 = vmatprep.subr.bf16.mxu0 0
        %1673 = vmatpush2.bf16.msra.mxu0 0
        %1674 = vmatprep.subr.bf16.mxu0 0
        %1675 = vmatpush2.bf16.msra.mxu0 0
        %1676 = vmatprep.subr.bf16.mxu0 0
        %1677 = vmatpush2.bf16.msra.mxu0 0
        %1678 = vmatprep.subr.bf16.mxu0 0
        %1679 = vmatpush2.bf16.msra.mxu0 0
        %1680 = vmatprep.subr.bf16.mxu0 0
        %1681 = vmatpush2.bf16.msra.mxu0 0
        %1682 = vmatprep.subr.bf16.mxu0 0
        %1683 = vmatpush2.bf16.msra.mxu0 0
        %1684 = vmatprep.mubr.bf16.mxu0 0
        %1685 = vmatmul.mubr.bf16.gmra.mxu0 %v609
        %v1686 = vpop.f32.mrf.mxu0
        %v1687 = vadd.f32 %v1646, %v1686
        %v1688 = vpop.f32.mrf.mxu0
        %v1689 = vadd.f32 %v1648, %v1688
        %v1690 = vpop.f32.mrf.mxu0
        %v1691 = vpop.f32.mrf.mxu0
        %1692 = vdwg.mxu0
        %1693 = vmatprep.subr.bf16.mxu0 %v1281
        %1694 = vmatpush1.bf16.msra.mxu0 %v1280
        %1695 = vmatprep.subr.bf16.mxu0 %v1277
        %1696 = vmatpush1.bf16.msra.mxu0 %v1276
        %1697 = vmatprep.subr.bf16.mxu0 %v1273
        %1698 = vmatpush1.bf16.msra.mxu0 %v1272
        %1699 = vmatprep.subr.bf16.mxu0 %v1269
        %1700 = vmatpush1.bf16.msra.mxu0 %v1268
        %1701 = vmatprep.subr.bf16.mxu0 %v1265
        %1702 = vmatpush1.bf16.msra.mxu0 %v1264
        %1703 = vmatprep.subr.bf16.mxu0 %v1261
        %1704 = vmatpush1.bf16.msra.mxu0 %v1260
        %1705 = vmatprep.subr.bf16.mxu0 %v1257
        %1706 = vmatpush1.bf16.msra.mxu0 %v1256
        %1707 = vmatprep.subr.bf16.mxu0 %v1253
        %1708 = vmatpush1.bf16.msra.mxu0 %v1252
        %1709 = vmatprep.subr.bf16.mxu0 %v1313
        %1710 = vmatpush2.bf16.msra.mxu0 %v1312
        %1711 = vmatprep.subr.bf16.mxu0 %v1309
        %1712 = vmatpush2.bf16.msra.mxu0 %v1308
        %1713 = vmatprep.subr.bf16.mxu0 %v1305
        %1714 = vmatpush2.bf16.msra.mxu0 %v1304
        %1715 = vmatprep.subr.bf16.mxu0 %v1301
        %1716 = vmatpush2.bf16.msra.mxu0 %v1300
        %1717 = vmatprep.subr.bf16.mxu0 %v1297
        %1718 = vmatpush2.bf16.msra.mxu0 %v1296
        %1719 = vmatprep.subr.bf16.mxu0 %v1293
        %1720 = vmatpush2.bf16.msra.mxu0 %v1292
        %1721 = vmatprep.subr.bf16.mxu0 %v1289
        %1722 = vmatpush2.bf16.msra.mxu0 %v1288
        %1723 = vmatprep.subr.bf16.mxu0 %v1285
        %1724 = vmatpush2.bf16.msra.mxu0 %v1284
        %1725 = vmatprep.mubr.bf16.mxu0 %v606
        %1726 = vmatmul.mubr.bf16.gmra.mxu0 %v605
        %v1727 = vpop.f32.mrf.mxu0
        %v1728 = vadd.f32 0.0, %v1727
        %v1729 = vpop.f32.mrf.mxu0
        %v1730 = vadd.f32 0.0, %v1729
        %v1731 = vpop.f32.mrf.mxu0
        %v1732 = vpop.f32.mrf.mxu0
        %1733 = vdwg.mxu0
        %1734 = vmatprep.subr.bf16.mxu0 %v1345
        %1735 = vmatpush1.bf16.msra.mxu0 %v1344
        %1736 = vmatprep.subr.bf16.mxu0 %v1341
        %1737 = vmatpush1.bf16.msra.mxu0 %v1340
        %1738 = vmatprep.subr.bf16.mxu0 %v1337
        %1739 = vmatpush1.bf16.msra.mxu0 %v1336
        %1740 = vmatprep.subr.bf16.mxu0 %v1333
        %1741 = vmatpush1.bf16.msra.mxu0 %v1332
        %1742 = vmatprep.subr.bf16.mxu0 %v1329
        %1743 = vmatpush1.bf16.msra.mxu0 %v1328
        %1744 = vmatprep.subr.bf16.mxu0 %v1325
        %1745 = vmatpush1.bf16.msra.mxu0 %v1324
        %1746 = vmatprep.subr.bf16.mxu0 %v1321
        %1747 = vmatpush1.bf16.msra.mxu0 %v1320
        %1748 = vmatprep.subr.bf16.mxu0 %v1317
        %1749 = vmatpush1.bf16.msra.mxu0 %v1316
        %1750 = vmatprep.subr.bf16.mxu0 %v1377
        %1751 = vmatpush2.bf16.msra.mxu0 %v1376
        %1752 = vmatprep.subr.bf16.mxu0 %v1373
        %1753 = vmatpush2.bf16.msra.mxu0 %v1372
        %1754 = vmatprep.subr.bf16.mxu0 %v1369
        %1755 = vmatpush2.bf16.msra.mxu0 %v1368
        %1756 = vmatprep.subr.bf16.mxu0 %v1365
        %1757 = vmatpush2.bf16.msra.mxu0 %v1364
        %1758 = vmatprep.subr.bf16.mxu0 %v1361
        %1759 = vmatpush2.bf16.msra.mxu0 %v1360
        %1760 = vmatprep.subr.bf16.mxu0 %v1357
        %1761 = vmatpush2.bf16.msra.mxu0 %v1356
        %1762 = vmatprep.subr.bf16.mxu0 %v1353
        %1763 = vmatpush2.bf16.msra.mxu0 %v1352
        %1764 = vmatprep.subr.bf16.mxu0 %v1349
        %1765 = vmatpush2.bf16.msra.mxu0 %v1348
        %1766 = vmatprep.mubr.bf16.mxu0 %v608
        %1767 = vmatmul.mubr.bf16.gmra.mxu0 %v607
        %v1768 = vpop.f32.mrf.mxu0
        %v1769 = vadd.f32 %v1728, %v1768
        %v1770 = vpop.f32.mrf.mxu0
        %v1771 = vadd.f32 %v1730, %v1770
        %v1772 = vpop.f32.mrf.mxu0
        %v1773 = vpop.f32.mrf.mxu0
        %1774 = vdwg.mxu0
        %1775 = vmatprep.subr.bf16.mxu0 %v1409
        %1776 = vmatpush1.bf16.msra.mxu0 %v1408
        %1777 = vmatprep.subr.bf16.mxu0 %v1405
        %1778 = vmatpush1.bf16.msra.mxu0 %v1404
        %1779 = vmatprep.subr.bf16.mxu0 %v1401
        %1780 = vmatpush1.bf16.msra.mxu0 %v1400
        %1781 = vmatprep.subr.bf16.mxu0 %v1397
        %1782 = vmatpush1.bf16.msra.mxu0 %v1396
        %1783 = vmatprep.subr.bf16.mxu0 %v1393
        %1784 = vmatpush1.bf16.msra.mxu0 %v1392
        %1785 = vmatprep.subr.bf16.mxu0 %v1389
        %1786 = vmatpush1.bf16.msra.mxu0 %v1388
        %1787 = vmatprep.subr.bf16.mxu0 %v1385
        %1788 = vmatpush1.bf16.msra.mxu0 %v1384
        %1789 = vmatprep.subr.bf16.mxu0 %v1381
        %1790 = vmatpush1.bf16.msra.mxu0 %v1380
        %1791 = vmatprep.subr.bf16.mxu0 0
        %1792 = vmatpush2.bf16.msra.mxu0 0
        %1793 = vmatprep.subr.bf16.mxu0 0
        %1794 = vmatpush2.bf16.msra.mxu0 0
        %1795 = vmatprep.subr.bf16.mxu0 0
        %1796 = vmatpush2.bf16.msra.mxu0 0
        %1797 = vmatprep.subr.bf16.mxu0 0
        %1798 = vmatpush2.bf16.msra.mxu0 0
        %1799 = vmatprep.subr.bf16.mxu0 0
        %1800 = vmatpush2.bf16.msra.mxu0 0
        %1801 = vmatprep.subr.bf16.mxu0 0
        %1802 = vmatpush2.bf16.msra.mxu0 0
        %1803 = vmatprep.subr.bf16.mxu0 0
        %1804 = vmatpush2.bf16.msra.mxu0 0
        %1805 = vmatprep.subr.bf16.mxu0 0
        %1806 = vmatpush2.bf16.msra.mxu0 0
        %1807 = vmatprep.mubr.bf16.mxu0 0
        %1808 = vmatmul.mubr.bf16.gmra.mxu0 %v609
        %v1809 = vpop.f32.mrf.mxu0
        %v1810 = vadd.f32 %v1769, %v1809
        %v1811 = vpop.f32.mrf.mxu0
        %v1812 = vadd.f32 %v1771, %v1811
        %v1813 = vpop.f32.mrf.mxu0
        %v1814 = vpop.f32.mrf.mxu0
        %1815 = vdwg.mxu0
        %v1820 = vcombine.low %v1687, %v1689
        %v1821 = vcombine.low %v1810, %v1812
        %v1823 = vunpack.c.l.s4 1983009808
        %v1824 = vunpack.c.0.s8 %v1823
        %v1825 = vlaneseq
        %v1826 = vshrl.u32 %v1825, 7
        %v1827 = vsub.s32 %v1824, %v1826
        %v1828 = vrot.slane %v1820, %v1827
        %v1830 = vunpack.c.l.s4 1983009808
        %v1831 = vunpack.c.0.s8 %v1830
        %v1832 = vlaneseq
        %v1833 = vshrl.u32 %v1832, 7
        %v1834 = vsub.s32 %v1831, %v1833
        %v1835 = vrot.slane %v1821, %v1834
        %v1836 = vcombine.low %v1828, %v1835
        %v1838 = vadd.f32 %v571, %v1836
        %1839 = vst [vmem:[#allocation2] sm:$0xff] %v1838
        %p1840 = scmp.eq.s32.totalorder %s32, 1
        // Predicated region
        $region113: #{_lambda_.1} parent=67 // pred_check
          %p1841 = pneg %p1840
        $region114: #{_lambda_.1} parent=67 // pred_check_branch
          %1843 = sbr.rel (%p1841) target = $region116
        $region115: #{_lambda_.1} parent=67 // pred_region
          %v1844 = vld [vmem:[#allocation2] sm:$0xff]
          %v1845 = vld [vmem:[#allocation6] sm:$0xf]
          %v1847 = vlaneseq
          %v1848 = vshrl.u32 %v1847, 7
          %v1849 = vsub.s32 0, %v1848
          %v1850 = vrot.slane %v1845, %v1849
          %v1851 = vlaneseq
          %v1852 = vshrl.u32 %v1851, 7
          %v1853 = vsub.s32 1, %v1852
          %v1854 = vrot.slane %v1845, %v1853
          %v1855 = vlaneseq
          %v1856 = vshrl.u32 %v1855, 7
          %v1857 = vsub.s32 2, %v1856
          %v1858 = vrot.slane %v1845, %v1857
          %v1859 = vlaneseq
          %v1860 = vshrl.u32 %v1859, 7
          %v1861 = vsub.s32 3, %v1860
          %v1862 = vrot.slane %v1845, %v1861
          %v1863 = vcombine.low %v1850, %v1854
          %v1864 = vcombine.low %v1858, %v1862
          %v1866 = vunpack.c.l.s4 1983009808
          %v1867 = vunpack.c.0.s8 %v1866
          %v1868 = vlaneseq
          %v1869 = vshrl.u32 %v1868, 7
          %v1870 = vsub.s32 %v1867, %v1869
          %v1871 = vrot.slane %v1863, %v1870
          %v1873 = vunpack.c.l.s4 1983009808
          %v1874 = vunpack.c.0.s8 %v1873
          %v1875 = vlaneseq
          %v1876 = vshrl.u32 %v1875, 7
          %v1877 = vsub.s32 %v1874, %v1876
          %v1878 = vrot.slane %v1864, %v1877
          %v1879 = vcombine.low %v1871, %v1878
          %v1881 = vadd.f32 %v1844, %v1879
          %v1882 = vmax.f32 %v1881, 0.0
          %v1884 = vcombine.high %v1882, %v1882
          %v1886 = vunpack.c.l.s4 1983009808
          %v1887 = vunpack.c.0.s8 %v1886
          %v1888 = vlaneseq
          %v1889 = vshrl.u32 %v1888, 7
          %v1890 = vsub.s32 %v1887, %v1889
          %v1891 = vrot.slane %v1882, %v1890
          %v1893 = vunpack.c.l.s4 1983009808
          %v1894 = vunpack.c.0.s8 %v1893
          %v1895 = vlaneseq
          %v1896 = vshrl.u32 %v1895, 7
          %v1897 = vsub.s32 %v1894, %v1896
          %v1898 = vrot.slane %v1884, %v1897
          %v1899 = vcombine.high %v1891, %v1891
          %v1900 = vcombine.high %v1898, %v1898
          %v1905 = vpack.c.bf16 %v1891, %v1891
          %v1906 = vpack.c.bf16 %v1899, %v1899
          %v1907 = vpack.c.bf16 %v1898, %v1898
          %v1908 = vpack.c.bf16 %v1900, %v1900
          %v1909 = vld [vmem:[#allocation8] sm:$0xff]
          %v1910 = vld [vmem:[#allocation8 + $0x8] sm:$0xff]
          %v1911 = vld [vmem:[#allocation8 + $0x10] sm:$0xff]
          %v1912 = vld [vmem:[#allocation8 + $0x18] sm:$0xff]
          %v1913 = vld [vmem:[#allocation8 + $0x20] sm:$0xff]
          %v1914 = vld [vmem:[#allocation8 + $0x28] sm:$0xff]
          %v1915 = vld [vmem:[#allocation8 + $0x30] sm:$0xff]
          %v1916 = vld [vmem:[#allocation8 + $0x38] sm:$0xff]
          %v1917 = vld [vmem:[#allocation8 + $0x40] sm:$0xff]
          %v1918 = vld [vmem:[#allocation8 + $0x48] sm:$0xff]
          %v1919 = vld [vmem:[#allocation8 + $0x50] sm:$0xff]
          %v1920 = vld [vmem:[#allocation8 + $0x58] sm:$0xff]
          %v1921 = vld [vmem:[#allocation8 + $0x60] sm:$0xff]
          %v1922 = vld [vmem:[#allocation8 + $0x68] sm:$0xff]
          %v1923 = vld [vmem:[#allocation8 + $0x70] sm:$0xff]
          %v1924 = vld [vmem:[#allocation8 + $0x78] sm:$0xff]
          %v1925 = vld [vmem:[#allocation8 + $0x80] sm:$0xff]
          %v1926 = vld [vmem:[#allocation8 + $0x88] sm:$0xff]
          %v1927 = vld [vmem:[#allocation8 + $0x90] sm:$0xff]
          %v1928 = vld [vmem:[#allocation8 + $0x98] sm:$0xff]
          %v1929 = vld [vmem:[#allocation8 + $0xa0] sm:$0xff]
          %v1930 = vld [vmem:[#allocation8 + $0xa8] sm:$0xff]
          %v1931 = vld [vmem:[#allocation8 + $0xb0] sm:$0xff]
          %v1932 = vld [vmem:[#allocation8 + $0xb8] sm:$0xff]
          %v1933 = vld [vmem:[#allocation8 + $0xc0] sm:$0xff]
          %v1934 = vld [vmem:[#allocation8 + $0xc8] sm:$0xff]
          %v1935 = vld [vmem:[#allocation8 + $0xd0] sm:$0xff]
          %v1936 = vld [vmem:[#allocation8 + $0xd8] sm:$0xff]
          %v1937 = vld [vmem:[#allocation8 + $0xe0] sm:$0xff]
          %v1938 = vld [vmem:[#allocation8 + $0xe8] sm:$0xff]
          %v1939 = vld [vmem:[#allocation8 + $0xf0] sm:$0xff]
          %v1940 = vld [vmem:[#allocation8 + $0xf8] sm:$0xff]
          %v1941 = vld [vmem:[#allocation8 + $0x100] sm:$0xff]
          %v1942 = vld [vmem:[#allocation8 + $0x108] sm:$0xff]
          %v1943 = vld [vmem:[#allocation8 + $0x110] sm:$0xff]
          %v1944 = vld [vmem:[#allocation8 + $0x118] sm:$0xff]
          %v1945 = vld [vmem:[#allocation8 + $0x120] sm:$0xff]
          %v1946 = vld [vmem:[#allocation8 + $0x128] sm:$0xff]
          %v1947 = vld [vmem:[#allocation8 + $0x130] sm:$0xff]
          %v1948 = vld [vmem:[#allocation8 + $0x138] sm:$0xff]
          %v1949 = vld [vmem:[#allocation8 + $0x140] sm:$0xff]
          %v1950 = vld [vmem:[#allocation8 + $0x148] sm:$0xff]
          %v1951 = vld [vmem:[#allocation8 + $0x150] sm:$0xff]
          %v1952 = vld [vmem:[#allocation8 + $0x158] sm:$0xff]
          %v1953 = vld [vmem:[#allocation8 + $0x160] sm:$0xff]
          %v1954 = vld [vmem:[#allocation8 + $0x168] sm:$0xff]
          %v1955 = vld [vmem:[#allocation8 + $0x170] sm:$0xff]
          %v1956 = vld [vmem:[#allocation8 + $0x178] sm:$0xff]
          %v1957 = vld [vmem:[#allocation8 + $0x180] sm:$0xff]
          %v1958 = vld [vmem:[#allocation8 + $0x188] sm:$0xff]
          %v1959 = vld [vmem:[#allocation8 + $0x190] sm:$0xff]
          %v1960 = vld [vmem:[#allocation8 + $0x198] sm:$0xff]
          %v1961 = vld [vmem:[#allocation8 + $0x1a0] sm:$0xff]
          %v1962 = vld [vmem:[#allocation8 + $0x1a8] sm:$0xff]
          %v1963 = vld [vmem:[#allocation8 + $0x1b0] sm:$0xff]
          %v1964 = vld [vmem:[#allocation8 + $0x1b8] sm:$0xff]
          %v1965 = vld [vmem:[#allocation8 + $0x1c0] sm:$0xff]
          %v1966 = vld [vmem:[#allocation8 + $0x1c8] sm:$0xff]
          %v1967 = vld [vmem:[#allocation8 + $0x1d0] sm:$0xff]
          %v1968 = vld [vmem:[#allocation8 + $0x1d8] sm:$0xff]
          %v1969 = vld [vmem:[#allocation8 + $0x1e0] sm:$0xff]
          %v1970 = vld [vmem:[#allocation8 + $0x1e8] sm:$0xff]
          %v1971 = vld [vmem:[#allocation8 + $0x1f0] sm:$0xff]
          %v1972 = vld [vmem:[#allocation8 + $0x1f8] sm:$0xff]
          %v1973 = vld [vmem:[#allocation8 + $0x200] sm:$0xff]
          %v1974 = vld [vmem:[#allocation8 + $0x208] sm:$0xff]
          %v1975 = vld [vmem:[#allocation8 + $0x210] sm:$0xff]
          %v1976 = vld [vmem:[#allocation8 + $0x218] sm:$0xff]
          %v1977 = vld [vmem:[#allocation8 + $0x220] sm:$0xff]
          %v1978 = vld [vmem:[#allocation8 + $0x228] sm:$0xff]
          %v1979 = vld [vmem:[#allocation8 + $0x230] sm:$0xff]
          %v1980 = vld [vmem:[#allocation8 + $0x238] sm:$0xff]
          %v1981 = vld [vmem:[#allocation8 + $0x240] sm:$0xff]
          %v1982 = vld [vmem:[#allocation8 + $0x248] sm:$0xff]
          %v1983 = vld [vmem:[#allocation8 + $0x250] sm:$0xff]
          %v1984 = vld [vmem:[#allocation8 + $0x258] sm:$0xff]
          %v1985 = vld [vmem:[#allocation8 + $0x260] sm:$0xff]
          %v1986 = vld [vmem:[#allocation8 + $0x268] sm:$0xff]
          %v1987 = vld [vmem:[#allocation8 + $0x270] sm:$0xff]
          %v1988 = vld [vmem:[#allocation8 + $0x278] sm:$0xff]
          %v1989 = vld [vmem:[#allocation8 + $0x280] sm:$0xff]
          %v1990 = vld [vmem:[#allocation8 + $0x288] sm:$0xff]
          %v1991 = vld [vmem:[#allocation8 + $0x290] sm:$0xff]
          %v1992 = vld [vmem:[#allocation8 + $0x298] sm:$0xff]
          %v1993 = vld [vmem:[#allocation8 + $0x2a0] sm:$0xff]
          %v1994 = vld [vmem:[#allocation8 + $0x2a8] sm:$0xff]
          %v1995 = vld [vmem:[#allocation8 + $0x2b0] sm:$0xff]
          %v1996 = vld [vmem:[#allocation8 + $0x2b8] sm:$0xff]
          %v1997 = vld [vmem:[#allocation8 + $0x2c0] sm:$0xff]
          %v1998 = vld [vmem:[#allocation8 + $0x2c8] sm:$0xff]
          %v1999 = vld [vmem:[#allocation8 + $0x2d0] sm:$0xff]
          %v2000 = vld [vmem:[#allocation8 + $0x2d8] sm:$0xff]
          %v2001 = vld [vmem:[#allocation8 + $0x2e0] sm:$0xff]
          %v2002 = vld [vmem:[#allocation8 + $0x2e8] sm:$0xff]
          %v2003 = vld [vmem:[#allocation8 + $0x2f0] sm:$0xff]
          %v2004 = vld [vmem:[#allocation8 + $0x2f8] sm:$0xff]
          %v2005 = vld [vmem:[#allocation8 + $0x300] sm:$0xff]
          %v2006 = vld [vmem:[#allocation8 + $0x308] sm:$0xff]
          %v2007 = vld [vmem:[#allocation8 + $0x310] sm:$0xff]
          %v2008 = vld [vmem:[#allocation8 + $0x318] sm:$0xff]
          %v2009 = vld [vmem:[#allocation8 + $0x320] sm:$0xff]
          %v2010 = vld [vmem:[#allocation8 + $0x328] sm:$0xff]
          %v2011 = vld [vmem:[#allocation8 + $0x330] sm:$0xff]
          %v2012 = vld [vmem:[#allocation8 + $0x338] sm:$0xff]
          %v2013 = vld [vmem:[#allocation8 + $0x340] sm:$0xff]
          %v2014 = vld [vmem:[#allocation8 + $0x348] sm:$0xff]
          %v2015 = vld [vmem:[#allocation8 + $0x350] sm:$0xff]
          %v2016 = vld [vmem:[#allocation8 + $0x358] sm:$0xff]
          %v2017 = vld [vmem:[#allocation8 + $0x360] sm:$0xff]
          %v2018 = vld [vmem:[#allocation8 + $0x368] sm:$0xff]
          %v2019 = vld [vmem:[#allocation8 + $0x370] sm:$0xff]
          %v2020 = vld [vmem:[#allocation8 + $0x378] sm:$0xff]
          %v2021 = vld [vmem:[#allocation8 + $0x380] sm:$0xff]
          %v2022 = vld [vmem:[#allocation8 + $0x388] sm:$0xff]
          %v2023 = vld [vmem:[#allocation8 + $0x390] sm:$0xff]
          %v2024 = vld [vmem:[#allocation8 + $0x398] sm:$0xff]
          %v2025 = vld [vmem:[#allocation8 + $0x3a0] sm:$0xff]
          %v2026 = vld [vmem:[#allocation8 + $0x3a8] sm:$0xff]
          %v2027 = vld [vmem:[#allocation8 + $0x3b0] sm:$0xff]
          %v2028 = vld [vmem:[#allocation8 + $0x3b8] sm:$0xff]
          %v2029 = vld [vmem:[#allocation8 + $0x3c0] sm:$0xff]
          %v2030 = vld [vmem:[#allocation8 + $0x3c8] sm:$0xff]
          %v2031 = vld [vmem:[#allocation8 + $0x3d0] sm:$0xff]
          %v2032 = vld [vmem:[#allocation8 + $0x3d8] sm:$0xff]
          %v2033 = vld [vmem:[#allocation8 + $0x3e0] sm:$0xff]
          %v2034 = vld [vmem:[#allocation8 + $0x3e8] sm:$0xff]
          %v2035 = vld [vmem:[#allocation8 + $0x3f0] sm:$0xff]
          %v2036 = vld [vmem:[#allocation8 + $0x3f8] sm:$0xff]
          %v2037 = vld [vmem:[#allocation9] sm:$0xf]
          %v2039 = vlaneseq
          %v2040 = vshrl.u32 %v2039, 7
          %v2041 = vsub.s32 0, %v2040
          %v2042 = vrot.slane %v2037, %v2041
          %v2043 = vlaneseq
          %v2044 = vshrl.u32 %v2043, 7
          %v2045 = vsub.s32 1, %v2044
          %v2046 = vrot.slane %v2037, %v2045
          %v2047 = vlaneseq
          %v2048 = vshrl.u32 %v2047, 7
          %v2049 = vsub.s32 2, %v2048
          %v2050 = vrot.slane %v2037, %v2049
          %v2051 = vlaneseq
          %v2052 = vshrl.u32 %v2051, 7
          %v2053 = vsub.s32 3, %v2052
          %v2054 = vrot.slane %v2037, %v2053
          %v2187 = vunpack.c.l.b16 %v1909
          %v2188 = vunpack.c.h.b16 %v1909
          %v2189 = vunpack.c.l.b16 %v1910
          %v2190 = vunpack.c.h.b16 %v1910
          %v2191 = vunpack.c.l.b16 %v1911
          %v2192 = vunpack.c.h.b16 %v1911
          %v2193 = vunpack.c.l.b16 %v1912
          %v2194 = vunpack.c.h.b16 %v1912
          %v2195 = vunpack.c.l.b16 %v1913
          %v2196 = vunpack.c.h.b16 %v1913
          %v2197 = vunpack.c.l.b16 %v1914
          %v2198 = vunpack.c.h.b16 %v1914
          %v2199 = vunpack.c.l.b16 %v1915
          %v2200 = vunpack.c.h.b16 %v1915
          %v2201 = vunpack.c.l.b16 %v1916
          %v2202 = vunpack.c.h.b16 %v1916
          %v2203 = vunpack.c.l.b16 %v1917
          %v2204 = vunpack.c.h.b16 %v1917
          %v2205 = vunpack.c.l.b16 %v1918
          %v2206 = vunpack.c.h.b16 %v1918
          %v2207 = vunpack.c.l.b16 %v1919
          %v2208 = vunpack.c.h.b16 %v1919
          %v2209 = vunpack.c.l.b16 %v1920
          %v2210 = vunpack.c.h.b16 %v1920
          %v2211 = vunpack.c.l.b16 %v1921
          %v2212 = vunpack.c.h.b16 %v1921
          %v2213 = vunpack.c.l.b16 %v1922
          %v2214 = vunpack.c.h.b16 %v1922
          %v2215 = vunpack.c.l.b16 %v1923
          %v2216 = vunpack.c.h.b16 %v1923
          %v2217 = vunpack.c.l.b16 %v1924
          %v2218 = vunpack.c.h.b16 %v1924
          %v2219 = vunpack.c.l.b16 %v1925
          %v2220 = vunpack.c.h.b16 %v1925
          %v2221 = vunpack.c.l.b16 %v1926
          %v2222 = vunpack.c.h.b16 %v1926
          %v2223 = vunpack.c.l.b16 %v1927
          %v2224 = vunpack.c.h.b16 %v1927
          %v2225 = vunpack.c.l.b16 %v1928
          %v2226 = vunpack.c.h.b16 %v1928
          %v2227 = vunpack.c.l.b16 %v1929
          %v2228 = vunpack.c.h.b16 %v1929
          %v2229 = vunpack.c.l.b16 %v1930
          %v2230 = vunpack.c.h.b16 %v1930
          %v2231 = vunpack.c.l.b16 %v1931
          %v2232 = vunpack.c.h.b16 %v1931
          %v2233 = vunpack.c.l.b16 %v1932
          %v2234 = vunpack.c.h.b16 %v1932
          %v2235 = vunpack.c.l.b16 %v1933
          %v2236 = vunpack.c.h.b16 %v1933
          %v2237 = vunpack.c.l.b16 %v1934
          %v2238 = vunpack.c.h.b16 %v1934
          %v2239 = vunpack.c.l.b16 %v1935
          %v2240 = vunpack.c.h.b16 %v1935
          %v2241 = vunpack.c.l.b16 %v1936
          %v2242 = vunpack.c.h.b16 %v1936
          %v2243 = vunpack.c.l.b16 %v1937
          %v2244 = vunpack.c.h.b16 %v1937
          %v2245 = vunpack.c.l.b16 %v1938
          %v2246 = vunpack.c.h.b16 %v1938
          %v2247 = vunpack.c.l.b16 %v1939
          %v2248 = vunpack.c.h.b16 %v1939
          %v2249 = vunpack.c.l.b16 %v1940
          %v2250 = vunpack.c.h.b16 %v1940
          %v2251 = vunpack.c.l.b16 %v1941
          %v2252 = vunpack.c.h.b16 %v1941
          %v2253 = vunpack.c.l.b16 %v1942
          %v2254 = vunpack.c.h.b16 %v1942
          %v2255 = vunpack.c.l.b16 %v1943
          %v2256 = vunpack.c.h.b16 %v1943
          %v2257 = vunpack.c.l.b16 %v1944
          %v2258 = vunpack.c.h.b16 %v1944
          %v2259 = vunpack.c.l.b16 %v1945
          %v2260 = vunpack.c.h.b16 %v1945
          %v2261 = vunpack.c.l.b16 %v1946
          %v2262 = vunpack.c.h.b16 %v1946
          %v2263 = vunpack.c.l.b16 %v1947
          %v2264 = vunpack.c.h.b16 %v1947
          %v2265 = vunpack.c.l.b16 %v1948
          %v2266 = vunpack.c.h.b16 %v1948
          %v2267 = vunpack.c.l.b16 %v1949
          %v2268 = vunpack.c.h.b16 %v1949
          %v2269 = vunpack.c.l.b16 %v1950
          %v2270 = vunpack.c.h.b16 %v1950
          %v2271 = vunpack.c.l.b16 %v1951
          %v2272 = vunpack.c.h.b16 %v1951
          %v2273 = vunpack.c.l.b16 %v1952
          %v2274 = vunpack.c.h.b16 %v1952
          %v2275 = vunpack.c.l.b16 %v1953
          %v2276 = vunpack.c.h.b16 %v1953
          %v2277 = vunpack.c.l.b16 %v1954
          %v2278 = vunpack.c.h.b16 %v1954
          %v2279 = vunpack.c.l.b16 %v1955
          %v2280 = vunpack.c.h.b16 %v1955
          %v2281 = vunpack.c.l.b16 %v1956
          %v2282 = vunpack.c.h.b16 %v1956
          %v2283 = vunpack.c.l.b16 %v1957
          %v2284 = vunpack.c.h.b16 %v1957
          %v2285 = vunpack.c.l.b16 %v1958
          %v2286 = vunpack.c.h.b16 %v1958
          %v2287 = vunpack.c.l.b16 %v1959
          %v2288 = vunpack.c.h.b16 %v1959
          %v2289 = vunpack.c.l.b16 %v1960
          %v2290 = vunpack.c.h.b16 %v1960
          %v2291 = vunpack.c.l.b16 %v1961
          %v2292 = vunpack.c.h.b16 %v1961
          %v2293 = vunpack.c.l.b16 %v1962
          %v2294 = vunpack.c.h.b16 %v1962
          %v2295 = vunpack.c.l.b16 %v1963
          %v2296 = vunpack.c.h.b16 %v1963
          %v2297 = vunpack.c.l.b16 %v1964
          %v2298 = vunpack.c.h.b16 %v1964
          %v2299 = vunpack.c.l.b16 %v1965
          %v2300 = vunpack.c.h.b16 %v1965
          %v2301 = vunpack.c.l.b16 %v1966
          %v2302 = vunpack.c.h.b16 %v1966
          %v2303 = vunpack.c.l.b16 %v1967
          %v2304 = vunpack.c.h.b16 %v1967
          %v2305 = vunpack.c.l.b16 %v1968
          %v2306 = vunpack.c.h.b16 %v1968
          %v2307 = vunpack.c.l.b16 %v1969
          %v2308 = vunpack.c.h.b16 %v1969
          %v2309 = vunpack.c.l.b16 %v1970
          %v2310 = vunpack.c.h.b16 %v1970
          %v2311 = vunpack.c.l.b16 %v1971
          %v2312 = vunpack.c.h.b16 %v1971
          %v2313 = vunpack.c.l.b16 %v1972
          %v2314 = vunpack.c.h.b16 %v1972
          %v2315 = vunpack.c.l.b16 %v1973
          %v2316 = vunpack.c.h.b16 %v1973
          %v2317 = vunpack.c.l.b16 %v1974
          %v2318 = vunpack.c.h.b16 %v1974
          %v2319 = vunpack.c.l.b16 %v1975
          %v2320 = vunpack.c.h.b16 %v1975
          %v2321 = vunpack.c.l.b16 %v1976
          %v2322 = vunpack.c.h.b16 %v1976
          %v2323 = vunpack.c.l.b16 %v1977
          %v2324 = vunpack.c.h.b16 %v1977
          %v2325 = vunpack.c.l.b16 %v1978
          %v2326 = vunpack.c.h.b16 %v1978
          %v2327 = vunpack.c.l.b16 %v1979
          %v2328 = vunpack.c.h.b16 %v1979
          %v2329 = vunpack.c.l.b16 %v1980
          %v2330 = vunpack.c.h.b16 %v1980
          %v2331 = vunpack.c.l.b16 %v1981
          %v2332 = vunpack.c.h.b16 %v1981
          %v2333 = vunpack.c.l.b16 %v1982
          %v2334 = vunpack.c.h.b16 %v1982
          %v2335 = vunpack.c.l.b16 %v1983
          %v2336 = vunpack.c.h.b16 %v1983
          %v2337 = vunpack.c.l.b16 %v1984
          %v2338 = vunpack.c.h.b16 %v1984
          %v2339 = vunpack.c.l.b16 %v1985
          %v2340 = vunpack.c.h.b16 %v1985
          %v2341 = vunpack.c.l.b16 %v1986
          %v2342 = vunpack.c.h.b16 %v1986
          %v2343 = vunpack.c.l.b16 %v1987
          %v2344 = vunpack.c.h.b16 %v1987
          %v2345 = vunpack.c.l.b16 %v1988
          %v2346 = vunpack.c.h.b16 %v1988
          %v2347 = vunpack.c.l.b16 %v1989
          %v2348 = vunpack.c.h.b16 %v1989
          %v2349 = vunpack.c.l.b16 %v1990
          %v2350 = vunpack.c.h.b16 %v1990
          %v2351 = vunpack.c.l.b16 %v1991
          %v2352 = vunpack.c.h.b16 %v1991
          %v2353 = vunpack.c.l.b16 %v1992
          %v2354 = vunpack.c.h.b16 %v1992
          %v2355 = vunpack.c.l.b16 %v1993
          %v2356 = vunpack.c.h.b16 %v1993
          %v2357 = vunpack.c.l.b16 %v1994
          %v2358 = vunpack.c.h.b16 %v1994
          %v2359 = vunpack.c.l.b16 %v1995
          %v2360 = vunpack.c.h.b16 %v1995
          %v2361 = vunpack.c.l.b16 %v1996
          %v2362 = vunpack.c.h.b16 %v1996
          %v2363 = vunpack.c.l.b16 %v1997
          %v2364 = vunpack.c.h.b16 %v1997
          %v2365 = vunpack.c.l.b16 %v1998
          %v2366 = vunpack.c.h.b16 %v1998
          %v2367 = vunpack.c.l.b16 %v1999
          %v2368 = vunpack.c.h.b16 %v1999
          %v2369 = vunpack.c.l.b16 %v2000
          %v2370 = vunpack.c.h.b16 %v2000
          %v2371 = vunpack.c.l.b16 %v2001
          %v2372 = vunpack.c.h.b16 %v2001
          %v2373 = vunpack.c.l.b16 %v2002
          %v2374 = vunpack.c.h.b16 %v2002
          %v2375 = vunpack.c.l.b16 %v2003
          %v2376 = vunpack.c.h.b16 %v2003
          %v2377 = vunpack.c.l.b16 %v2004
          %v2378 = vunpack.c.h.b16 %v2004
          %v2379 = vunpack.c.l.b16 %v2005
          %v2380 = vunpack.c.h.b16 %v2005
          %v2381 = vunpack.c.l.b16 %v2006
          %v2382 = vunpack.c.h.b16 %v2006
          %v2383 = vunpack.c.l.b16 %v2007
          %v2384 = vunpack.c.h.b16 %v2007
          %v2385 = vunpack.c.l.b16 %v2008
          %v2386 = vunpack.c.h.b16 %v2008
          %v2387 = vunpack.c.l.b16 %v2009
          %v2388 = vunpack.c.h.b16 %v2009
          %v2389 = vunpack.c.l.b16 %v2010
          %v2390 = vunpack.c.h.b16 %v2010
          %v2391 = vunpack.c.l.b16 %v2011
          %v2392 = vunpack.c.h.b16 %v2011
          %v2393 = vunpack.c.l.b16 %v2012
          %v2394 = vunpack.c.h.b16 %v2012
          %v2395 = vunpack.c.l.b16 %v2013
          %v2396 = vunpack.c.h.b16 %v2013
          %v2397 = vunpack.c.l.b16 %v2014
          %v2398 = vunpack.c.h.b16 %v2014
          %v2399 = vunpack.c.l.b16 %v2015
          %v2400 = vunpack.c.h.b16 %v2015
          %v2401 = vunpack.c.l.b16 %v2016
          %v2402 = vunpack.c.h.b16 %v2016
          %v2403 = vunpack.c.l.b16 %v2017
          %v2404 = vunpack.c.h.b16 %v2017
          %v2405 = vunpack.c.l.b16 %v2018
          %v2406 = vunpack.c.h.b16 %v2018
          %v2407 = vunpack.c.l.b16 %v2019
          %v2408 = vunpack.c.h.b16 %v2019
          %v2409 = vunpack.c.l.b16 %v2020
          %v2410 = vunpack.c.h.b16 %v2020
          %v2411 = vunpack.c.l.b16 %v2021
          %v2412 = vunpack.c.h.b16 %v2021
          %v2413 = vunpack.c.l.b16 %v2022
          %v2414 = vunpack.c.h.b16 %v2022
          %v2415 = vunpack.c.l.b16 %v2023
          %v2416 = vunpack.c.h.b16 %v2023
          %v2417 = vunpack.c.l.b16 %v2024
          %v2418 = vunpack.c.h.b16 %v2024
          %v2419 = vunpack.c.l.b16 %v2025
          %v2420 = vunpack.c.h.b16 %v2025
          %v2421 = vunpack.c.l.b16 %v2026
          %v2422 = vunpack.c.h.b16 %v2026
          %v2423 = vunpack.c.l.b16 %v2027
          %v2424 = vunpack.c.h.b16 %v2027
          %v2425 = vunpack.c.l.b16 %v2028
          %v2426 = vunpack.c.h.b16 %v2028
          %v2427 = vunpack.c.l.b16 %v2029
          %v2428 = vunpack.c.h.b16 %v2029
          %v2429 = vunpack.c.l.b16 %v2030
          %v2430 = vunpack.c.h.b16 %v2030
          %v2431 = vunpack.c.l.b16 %v2031
          %v2432 = vunpack.c.h.b16 %v2031
          %v2433 = vunpack.c.l.b16 %v2032
          %v2434 = vunpack.c.h.b16 %v2032
          %v2435 = vunpack.c.l.b16 %v2033
          %v2436 = vunpack.c.h.b16 %v2033
          %v2437 = vunpack.c.l.b16 %v2034
          %v2438 = vunpack.c.h.b16 %v2034
          %v2439 = vunpack.c.l.b16 %v2035
          %v2440 = vunpack.c.h.b16 %v2035
          %v2441 = vunpack.c.l.b16 %v2036
          %v2442 = vunpack.c.h.b16 %v2036
          %v2443 = vpack.c.b16 %v2191, %v2187
          %v2444 = vpack.c.b16 %v2192, %v2188
          %v2445 = vpack.c.b16 %v2193, %v2189
          %v2446 = vpack.c.b16 %v2194, %v2190
          %v2447 = vpack.c.b16 %v2199, %v2195
          %v2448 = vpack.c.b16 %v2200, %v2196
          %v2449 = vpack.c.b16 %v2201, %v2197
          %v2450 = vpack.c.b16 %v2202, %v2198
          %v2451 = vpack.c.b16 %v2207, %v2203
          %v2452 = vpack.c.b16 %v2208, %v2204
          %v2453 = vpack.c.b16 %v2209, %v2205
          %v2454 = vpack.c.b16 %v2210, %v2206
          %v2455 = vpack.c.b16 %v2215, %v2211
          %v2456 = vpack.c.b16 %v2216, %v2212
          %v2457 = vpack.c.b16 %v2217, %v2213
          %v2458 = vpack.c.b16 %v2218, %v2214
          %v2459 = vpack.c.b16 %v2223, %v2219
          %v2460 = vpack.c.b16 %v2224, %v2220
          %v2461 = vpack.c.b16 %v2225, %v2221
          %v2462 = vpack.c.b16 %v2226, %v2222
          %v2463 = vpack.c.b16 %v2231, %v2227
          %v2464 = vpack.c.b16 %v2232, %v2228
          %v2465 = vpack.c.b16 %v2233, %v2229
          %v2466 = vpack.c.b16 %v2234, %v2230
          %v2467 = vpack.c.b16 %v2239, %v2235
          %v2468 = vpack.c.b16 %v2240, %v2236
          %v2469 = vpack.c.b16 %v2241, %v2237
          %v2470 = vpack.c.b16 %v2242, %v2238
          %v2471 = vpack.c.b16 %v2247, %v2243
          %v2472 = vpack.c.b16 %v2248, %v2244
          %v2473 = vpack.c.b16 %v2249, %v2245
          %v2474 = vpack.c.b16 %v2250, %v2246
          %v2475 = vpack.c.b16 %v2255, %v2251
          %v2476 = vpack.c.b16 %v2256, %v2252
          %v2477 = vpack.c.b16 %v2257, %v2253
          %v2478 = vpack.c.b16 %v2258, %v2254
          %v2479 = vpack.c.b16 %v2263, %v2259
          %v2480 = vpack.c.b16 %v2264, %v2260
          %v2481 = vpack.c.b16 %v2265, %v2261
          %v2482 = vpack.c.b16 %v2266, %v2262
          %v2483 = vpack.c.b16 %v2271, %v2267
          %v2484 = vpack.c.b16 %v2272, %v2268
          %v2485 = vpack.c.b16 %v2273, %v2269
          %v2486 = vpack.c.b16 %v2274, %v2270
          %v2487 = vpack.c.b16 %v2279, %v2275
          %v2488 = vpack.c.b16 %v2280, %v2276
          %v2489 = vpack.c.b16 %v2281, %v2277
          %v2490 = vpack.c.b16 %v2282, %v2278
          %v2491 = vpack.c.b16 %v2287, %v2283
          %v2492 = vpack.c.b16 %v2288, %v2284
          %v2493 = vpack.c.b16 %v2289, %v2285
          %v2494 = vpack.c.b16 %v2290, %v2286
          %v2495 = vpack.c.b16 %v2295, %v2291
          %v2496 = vpack.c.b16 %v2296, %v2292
          %v2497 = vpack.c.b16 %v2297, %v2293
          %v2498 = vpack.c.b16 %v2298, %v2294
          %v2499 = vpack.c.b16 %v2303, %v2299
          %v2500 = vpack.c.b16 %v2304, %v2300
          %v2501 = vpack.c.b16 %v2305, %v2301
          %v2502 = vpack.c.b16 %v2306, %v2302
          %v2503 = vpack.c.b16 %v2311, %v2307
          %v2504 = vpack.c.b16 %v2312, %v2308
          %v2505 = vpack.c.b16 %v2313, %v2309
          %v2506 = vpack.c.b16 %v2314, %v2310
          %v2507 = vpack.c.b16 %v2319, %v2315
          %v2508 = vpack.c.b16 %v2320, %v2316
          %v2509 = vpack.c.b16 %v2321, %v2317
          %v2510 = vpack.c.b16 %v2322, %v2318
          %v2511 = vpack.c.b16 %v2327, %v2323
          %v2512 = vpack.c.b16 %v2328, %v2324
          %v2513 = vpack.c.b16 %v2329, %v2325
          %v2514 = vpack.c.b16 %v2330, %v2326
          %v2515 = vpack.c.b16 %v2335, %v2331
          %v2516 = vpack.c.b16 %v2336, %v2332
          %v2517 = vpack.c.b16 %v2337, %v2333
          %v2518 = vpack.c.b16 %v2338, %v2334
          %v2519 = vpack.c.b16 %v2343, %v2339
          %v2520 = vpack.c.b16 %v2344, %v2340
          %v2521 = vpack.c.b16 %v2345, %v2341
          %v2522 = vpack.c.b16 %v2346, %v2342
          %v2523 = vpack.c.b16 %v2351, %v2347
          %v2524 = vpack.c.b16 %v2352, %v2348
          %v2525 = vpack.c.b16 %v2353, %v2349
          %v2526 = vpack.c.b16 %v2354, %v2350
          %v2527 = vpack.c.b16 %v2359, %v2355
          %v2528 = vpack.c.b16 %v2360, %v2356
          %v2529 = vpack.c.b16 %v2361, %v2357
          %v2530 = vpack.c.b16 %v2362, %v2358
          %v2531 = vpack.c.b16 %v2367, %v2363
          %v2532 = vpack.c.b16 %v2368, %v2364
          %v2533 = vpack.c.b16 %v2369, %v2365
          %v2534 = vpack.c.b16 %v2370, %v2366
          %v2535 = vpack.c.b16 %v2375, %v2371
          %v2536 = vpack.c.b16 %v2376, %v2372
          %v2537 = vpack.c.b16 %v2377, %v2373
          %v2538 = vpack.c.b16 %v2378, %v2374
          %v2539 = vpack.c.b16 %v2383, %v2379
          %v2540 = vpack.c.b16 %v2384, %v2380
          %v2541 = vpack.c.b16 %v2385, %v2381
          %v2542 = vpack.c.b16 %v2386, %v2382
          %v2543 = vpack.c.b16 %v2391, %v2387
          %v2544 = vpack.c.b16 %v2392, %v2388
          %v2545 = vpack.c.b16 %v2393, %v2389
          %v2546 = vpack.c.b16 %v2394, %v2390
          %v2547 = vpack.c.b16 %v2399, %v2395
          %v2548 = vpack.c.b16 %v2400, %v2396
          %v2549 = vpack.c.b16 %v2401, %v2397
          %v2550 = vpack.c.b16 %v2402, %v2398
          %v2551 = vpack.c.b16 %v2407, %v2403
          %v2552 = vpack.c.b16 %v2408, %v2404
          %v2553 = vpack.c.b16 %v2409, %v2405
          %v2554 = vpack.c.b16 %v2410, %v2406
          %v2555 = vpack.c.b16 %v2415, %v2411
          %v2556 = vpack.c.b16 %v2416, %v2412
          %v2557 = vpack.c.b16 %v2417, %v2413
          %v2558 = vpack.c.b16 %v2418, %v2414
          %v2559 = vpack.c.b16 %v2423, %v2419
          %v2560 = vpack.c.b16 %v2424, %v2420
          %v2561 = vpack.c.b16 %v2425, %v2421
          %v2562 = vpack.c.b16 %v2426, %v2422
          %v2563 = vpack.c.b16 %v2431, %v2427
          %v2564 = vpack.c.b16 %v2432, %v2428
          %v2565 = vpack.c.b16 %v2433, %v2429
          %v2566 = vpack.c.b16 %v2434, %v2430
          %v2567 = vpack.c.b16 %v2439, %v2435
          %v2568 = vpack.c.b16 %v2440, %v2436
          %v2569 = vpack.c.b16 %v2441, %v2437
          %v2570 = vpack.c.b16 %v2442, %v2438
          %2699 = vmatprep.subr.bf16.mxu0 %v2472
          %2700 = vmatpush1.bf16.msra.mxu0 %v2471
          %2701 = vmatprep.subr.bf16.mxu0 %v2468
          %2702 = vmatpush1.bf16.msra.mxu0 %v2467
          %2703 = vmatprep.subr.bf16.mxu0 %v2464
          %2704 = vmatpush1.bf16.msra.mxu0 %v2463
          %2705 = vmatprep.subr.bf16.mxu0 %v2460
          %2706 = vmatpush1.bf16.msra.mxu0 %v2459
          %2707 = vmatprep.subr.bf16.mxu0 %v2456
          %2708 = vmatpush1.bf16.msra.mxu0 %v2455
          %2709 = vmatprep.subr.bf16.mxu0 %v2452
          %2710 = vmatpush1.bf16.msra.mxu0 %v2451
          %2711 = vmatprep.subr.bf16.mxu0 %v2448
          %2712 = vmatpush1.bf16.msra.mxu0 %v2447
          %2713 = vmatprep.subr.bf16.mxu0 %v2444
          %2714 = vmatpush1.bf16.msra.mxu0 %v2443
          %2715 = vmatprep.subr.bf16.mxu0 %v2504
          %2716 = vmatpush2.bf16.msra.mxu0 %v2503
          %2717 = vmatprep.subr.bf16.mxu0 %v2500
          %2718 = vmatpush2.bf16.msra.mxu0 %v2499
          %2719 = vmatprep.subr.bf16.mxu0 %v2496
          %2720 = vmatpush2.bf16.msra.mxu0 %v2495
          %2721 = vmatprep.subr.bf16.mxu0 %v2492
          %2722 = vmatpush2.bf16.msra.mxu0 %v2491
          %2723 = vmatprep.subr.bf16.mxu0 %v2488
          %2724 = vmatpush2.bf16.msra.mxu0 %v2487
          %2725 = vmatprep.subr.bf16.mxu0 %v2484
          %2726 = vmatpush2.bf16.msra.mxu0 %v2483
          %2727 = vmatprep.subr.bf16.mxu0 %v2480
          %2728 = vmatpush2.bf16.msra.mxu0 %v2479
          %2729 = vmatprep.subr.bf16.mxu0 %v2476
          %2730 = vmatpush2.bf16.msra.mxu0 %v2475
          %2731 = vmatprep.mubr.bf16.mxu0 %v1906
          %2732 = vmatmul.mubr.bf16.gmra.mxu0 %v1905
          %v2733 = vpop.f32.mrf.mxu0
          %v2734 = vadd.f32 %v2042, %v2733
          %v2735 = vpop.f32.mrf.mxu0
          %v2736 = vadd.f32 %v2046, %v2735
          %v2737 = vpop.f32.mrf.mxu0
          %v2738 = vpop.f32.mrf.mxu0
          %2739 = vdwg.mxu0
          %2740 = vmatprep.subr.bf16.mxu0 %v2536
          %2741 = vmatpush1.bf16.msra.mxu0 %v2535
          %2742 = vmatprep.subr.bf16.mxu0 %v2532
          %2743 = vmatpush1.bf16.msra.mxu0 %v2531
          %2744 = vmatprep.subr.bf16.mxu0 %v2528
          %2745 = vmatpush1.bf16.msra.mxu0 %v2527
          %2746 = vmatprep.subr.bf16.mxu0 %v2524
          %2747 = vmatpush1.bf16.msra.mxu0 %v2523
          %2748 = vmatprep.subr.bf16.mxu0 %v2520
          %2749 = vmatpush1.bf16.msra.mxu0 %v2519
          %2750 = vmatprep.subr.bf16.mxu0 %v2516
          %2751 = vmatpush1.bf16.msra.mxu0 %v2515
          %2752 = vmatprep.subr.bf16.mxu0 %v2512
          %2753 = vmatpush1.bf16.msra.mxu0 %v2511
          %2754 = vmatprep.subr.bf16.mxu0 %v2508
          %2755 = vmatpush1.bf16.msra.mxu0 %v2507
          %2756 = vmatprep.subr.bf16.mxu0 %v2568
          %2757 = vmatpush2.bf16.msra.mxu0 %v2567
          %2758 = vmatprep.subr.bf16.mxu0 %v2564
          %2759 = vmatpush2.bf16.msra.mxu0 %v2563
          %2760 = vmatprep.subr.bf16.mxu0 %v2560
          %2761 = vmatpush2.bf16.msra.mxu0 %v2559
          %2762 = vmatprep.subr.bf16.mxu0 %v2556
          %2763 = vmatpush2.bf16.msra.mxu0 %v2555
          %2764 = vmatprep.subr.bf16.mxu0 %v2552
          %2765 = vmatpush2.bf16.msra.mxu0 %v2551
          %2766 = vmatprep.subr.bf16.mxu0 %v2548
          %2767 = vmatpush2.bf16.msra.mxu0 %v2547
          %2768 = vmatprep.subr.bf16.mxu0 %v2544
          %2769 = vmatpush2.bf16.msra.mxu0 %v2543
          %2770 = vmatprep.subr.bf16.mxu0 %v2540
          %2771 = vmatpush2.bf16.msra.mxu0 %v2539
          %2772 = vmatprep.mubr.bf16.mxu0 %v1908
          %2773 = vmatmul.mubr.bf16.gmra.mxu0 %v1907
          %v2774 = vpop.f32.mrf.mxu0
          %v2775 = vadd.f32 %v2734, %v2774
          %v2776 = vpop.f32.mrf.mxu0
          %v2777 = vadd.f32 %v2736, %v2776
          %v2778 = vpop.f32.mrf.mxu0
          %v2779 = vpop.f32.mrf.mxu0
          %2780 = vdwg.mxu0
          %2781 = vmatprep.subr.bf16.mxu0 %v2474
          %2782 = vmatpush1.bf16.msra.mxu0 %v2473
          %2783 = vmatprep.subr.bf16.mxu0 %v2470
          %2784 = vmatpush1.bf16.msra.mxu0 %v2469
          %2785 = vmatprep.subr.bf16.mxu0 %v2466
          %2786 = vmatpush1.bf16.msra.mxu0 %v2465
          %2787 = vmatprep.subr.bf16.mxu0 %v2462
          %2788 = vmatpush1.bf16.msra.mxu0 %v2461
          %2789 = vmatprep.subr.bf16.mxu0 %v2458
          %2790 = vmatpush1.bf16.msra.mxu0 %v2457
          %2791 = vmatprep.subr.bf16.mxu0 %v2454
          %2792 = vmatpush1.bf16.msra.mxu0 %v2453
          %2793 = vmatprep.subr.bf16.mxu0 %v2450
          %2794 = vmatpush1.bf16.msra.mxu0 %v2449
          %2795 = vmatprep.subr.bf16.mxu0 %v2446
          %2796 = vmatpush1.bf16.msra.mxu0 %v2445
          %2797 = vmatprep.subr.bf16.mxu0 %v2506
          %2798 = vmatpush2.bf16.msra.mxu0 %v2505
          %2799 = vmatprep.subr.bf16.mxu0 %v2502
          %2800 = vmatpush2.bf16.msra.mxu0 %v2501
          %2801 = vmatprep.subr.bf16.mxu0 %v2498
          %2802 = vmatpush2.bf16.msra.mxu0 %v2497
          %2803 = vmatprep.subr.bf16.mxu0 %v2494
          %2804 = vmatpush2.bf16.msra.mxu0 %v2493
          %2805 = vmatprep.subr.bf16.mxu0 %v2490
          %2806 = vmatpush2.bf16.msra.mxu0 %v2489
          %2807 = vmatprep.subr.bf16.mxu0 %v2486
          %2808 = vmatpush2.bf16.msra.mxu0 %v2485
          %2809 = vmatprep.subr.bf16.mxu0 %v2482
          %2810 = vmatpush2.bf16.msra.mxu0 %v2481
          %2811 = vmatprep.subr.bf16.mxu0 %v2478
          %2812 = vmatpush2.bf16.msra.mxu0 %v2477
          %2813 = vmatprep.mubr.bf16.mxu0 %v1906
          %2814 = vmatmul.mubr.bf16.gmra.mxu0 %v1905
          %v2815 = vpop.f32.mrf.mxu0
          %v2816 = vadd.f32 %v2050, %v2815
          %v2817 = vpop.f32.mrf.mxu0
          %v2818 = vadd.f32 %v2054, %v2817
          %v2819 = vpop.f32.mrf.mxu0
          %v2820 = vpop.f32.mrf.mxu0
          %2821 = vdwg.mxu0
          %2822 = vmatprep.subr.bf16.mxu0 %v2538
          %2823 = vmatpush1.bf16.msra.mxu0 %v2537
          %2824 = vmatprep.subr.bf16.mxu0 %v2534
          %2825 = vmatpush1.bf16.msra.mxu0 %v2533
          %2826 = vmatprep.subr.bf16.mxu0 %v2530
          %2827 = vmatpush1.bf16.msra.mxu0 %v2529
          %2828 = vmatprep.subr.bf16.mxu0 %v2526
          %2829 = vmatpush1.bf16.msra.mxu0 %v2525
          %2830 = vmatprep.subr.bf16.mxu0 %v2522
          %2831 = vmatpush1.bf16.msra.mxu0 %v2521
          %2832 = vmatprep.subr.bf16.mxu0 %v2518
          %2833 = vmatpush1.bf16.msra.mxu0 %v2517
          %2834 = vmatprep.subr.bf16.mxu0 %v2514
          %2835 = vmatpush1.bf16.msra.mxu0 %v2513
          %2836 = vmatprep.subr.bf16.mxu0 %v2510
          %2837 = vmatpush1.bf16.msra.mxu0 %v2509
          %2838 = vmatprep.subr.bf16.mxu0 %v2570
          %2839 = vmatpush2.bf16.msra.mxu0 %v2569
          %2840 = vmatprep.subr.bf16.mxu0 %v2566
          %2841 = vmatpush2.bf16.msra.mxu0 %v2565
          %2842 = vmatprep.subr.bf16.mxu0 %v2562
          %2843 = vmatpush2.bf16.msra.mxu0 %v2561
          %2844 = vmatprep.subr.bf16.mxu0 %v2558
          %2845 = vmatpush2.bf16.msra.mxu0 %v2557
          %2846 = vmatprep.subr.bf16.mxu0 %v2554
          %2847 = vmatpush2.bf16.msra.mxu0 %v2553
          %2848 = vmatprep.subr.bf16.mxu0 %v2550
          %2849 = vmatpush2.bf16.msra.mxu0 %v2549
          %2850 = vmatprep.subr.bf16.mxu0 %v2546
          %2851 = vmatpush2.bf16.msra.mxu0 %v2545
          %2852 = vmatprep.subr.bf16.mxu0 %v2542
          %2853 = vmatpush2.bf16.msra.mxu0 %v2541
          %2854 = vmatprep.mubr.bf16.mxu0 %v1908
          %2855 = vmatmul.mubr.bf16.gmra.mxu0 %v1907
          %v2856 = vpop.f32.mrf.mxu0
          %v2857 = vadd.f32 %v2816, %v2856
          %v2858 = vpop.f32.mrf.mxu0
          %v2859 = vadd.f32 %v2818, %v2858
          %v2860 = vpop.f32.mrf.mxu0
          %v2861 = vpop.f32.mrf.mxu0
          %2862 = vdwg.mxu0
          %v2863 = vmax.f32 %v2775, 0.0
          %v2864 = vmax.f32 %v2777, 0.0
          %v2865 = vmax.f32 %v2857, 0.0
          %v2866 = vmax.f32 %v2859, 0.0
          %v2867 = vpack.c.bf16 %v2863, %v2863
          %v2868 = vpack.c.bf16 %v2864, %v2864
          %v2869 = vpack.c.bf16 %v2865, %v2865
          %v2870 = vpack.c.bf16 %v2866, %v2866
          %v2871 = vld [vmem:[#allocation11] sm:$0xff]
          %v2872 = vld [vmem:[#allocation11 + $0x8] sm:$0xff]
          %v2873 = vld [vmem:[#allocation11 + $0x10] sm:$0xff]
          %v2874 = vld [vmem:[#allocation11 + $0x18] sm:$0xff]
          %v2875 = vld [vmem:[#allocation11 + $0x20] sm:$0xff]
          %v2876 = vld [vmem:[#allocation11 + $0x28] sm:$0xff]
          %v2877 = vld [vmem:[#allocation11 + $0x30] sm:$0xff]
          %v2878 = vld [vmem:[#allocation11 + $0x38] sm:$0xff]
          %v2879 = vld [vmem:[#allocation11 + $0x40] sm:$0xff]
          %v2880 = vld [vmem:[#allocation11 + $0x48] sm:$0xff]
          %v2881 = vld [vmem:[#allocation11 + $0x50] sm:$0xff]
          %v2882 = vld [vmem:[#allocation11 + $0x58] sm:$0xff]
          %v2883 = vld [vmem:[#allocation11 + $0x60] sm:$0xff]
          %v2884 = vld [vmem:[#allocation11 + $0x68] sm:$0xff]
          %v2885 = vld [vmem:[#allocation11 + $0x70] sm:$0xff]
          %v2886 = vld [vmem:[#allocation11 + $0x78] sm:$0xff]
          %v2887 = vld [vmem:[#allocation11 + $0x80] sm:$0xff]
          %v2888 = vld [vmem:[#allocation11 + $0x88] sm:$0xff]
          %v2889 = vld [vmem:[#allocation11 + $0x90] sm:$0xff]
          %v2890 = vld [vmem:[#allocation11 + $0x98] sm:$0xff]
          %v2891 = vld [vmem:[#allocation11 + $0xa0] sm:$0xff]
          %v2892 = vld [vmem:[#allocation11 + $0xa8] sm:$0xff]
          %v2893 = vld [vmem:[#allocation11 + $0xb0] sm:$0xff]
          %v2894 = vld [vmem:[#allocation11 + $0xb8] sm:$0xff]
          %v2895 = vld [vmem:[#allocation11 + $0xc0] sm:$0xff]
          %v2896 = vld [vmem:[#allocation11 + $0xc8] sm:$0xff]
          %v2897 = vld [vmem:[#allocation11 + $0xd0] sm:$0xff]
          %v2898 = vld [vmem:[#allocation11 + $0xd8] sm:$0xff]
          %v2899 = vld [vmem:[#allocation11 + $0xe0] sm:$0xff]
          %v2900 = vld [vmem:[#allocation11 + $0xe8] sm:$0xff]
          %v2901 = vld [vmem:[#allocation11 + $0xf0] sm:$0xff]
          %v2902 = vld [vmem:[#allocation11 + $0xf8] sm:$0xff]
          %v2903 = vld [vmem:[#allocation11 + $0x100] sm:$0xff]
          %v2904 = vld [vmem:[#allocation11 + $0x108] sm:$0xff]
          %v2905 = vld [vmem:[#allocation11 + $0x110] sm:$0xff]
          %v2906 = vld [vmem:[#allocation11 + $0x118] sm:$0xff]
          %v2907 = vld [vmem:[#allocation11 + $0x120] sm:$0xff]
          %v2908 = vld [vmem:[#allocation11 + $0x128] sm:$0xff]
          %v2909 = vld [vmem:[#allocation11 + $0x130] sm:$0xff]
          %v2910 = vld [vmem:[#allocation11 + $0x138] sm:$0xff]
          %v2911 = vld [vmem:[#allocation11 + $0x140] sm:$0xff]
          %v2912 = vld [vmem:[#allocation11 + $0x148] sm:$0xff]
          %v2913 = vld [vmem:[#allocation11 + $0x150] sm:$0xff]
          %v2914 = vld [vmem:[#allocation11 + $0x158] sm:$0xff]
          %v2915 = vld [vmem:[#allocation11 + $0x160] sm:$0xff]
          %v2916 = vld [vmem:[#allocation11 + $0x168] sm:$0xff]
          %v2917 = vld [vmem:[#allocation11 + $0x170] sm:$0xff]
          %v2918 = vld [vmem:[#allocation11 + $0x178] sm:$0xff]
          %v2919 = vld [vmem:[#allocation11 + $0x180] sm:$0xff]
          %v2920 = vld [vmem:[#allocation11 + $0x188] sm:$0xff]
          %v2921 = vld [vmem:[#allocation11 + $0x190] sm:$0xff]
          %v2922 = vld [vmem:[#allocation11 + $0x198] sm:$0xff]
          %v2923 = vld [vmem:[#allocation11 + $0x1a0] sm:$0xff]
          %v2924 = vld [vmem:[#allocation11 + $0x1a8] sm:$0xff]
          %v2925 = vld [vmem:[#allocation11 + $0x1b0] sm:$0xff]
          %v2926 = vld [vmem:[#allocation11 + $0x1b8] sm:$0xff]
          %v2927 = vld [vmem:[#allocation11 + $0x1c0] sm:$0xff]
          %v2928 = vld [vmem:[#allocation11 + $0x1c8] sm:$0xff]
          %v2929 = vld [vmem:[#allocation11 + $0x1d0] sm:$0xff]
          %v2930 = vld [vmem:[#allocation11 + $0x1d8] sm:$0xff]
          %v2931 = vld [vmem:[#allocation11 + $0x1e0] sm:$0xff]
          %v2932 = vld [vmem:[#allocation11 + $0x1e8] sm:$0xff]
          %v2933 = vld [vmem:[#allocation11 + $0x1f0] sm:$0xff]
          %v2934 = vld [vmem:[#allocation11 + $0x1f8] sm:$0xff]
          %v2935 = vld [vmem:[#allocation11 + $0x200] sm:$0xff]
          %v2936 = vld [vmem:[#allocation11 + $0x208] sm:$0xff]
          %v2937 = vld [vmem:[#allocation11 + $0x210] sm:$0xff]
          %v2938 = vld [vmem:[#allocation11 + $0x218] sm:$0xff]
          %v2939 = vld [vmem:[#allocation11 + $0x220] sm:$0xff]
          %v2940 = vld [vmem:[#allocation11 + $0x228] sm:$0xff]
          %v2941 = vld [vmem:[#allocation11 + $0x230] sm:$0xff]
          %v2942 = vld [vmem:[#allocation11 + $0x238] sm:$0xff]
          %v2943 = vld [vmem:[#allocation11 + $0x240] sm:$0xff]
          %v2944 = vld [vmem:[#allocation11 + $0x248] sm:$0xff]
          %v2945 = vld [vmem:[#allocation11 + $0x250] sm:$0xff]
          %v2946 = vld [vmem:[#allocation11 + $0x258] sm:$0xff]
          %v2947 = vld [vmem:[#allocation11 + $0x260] sm:$0xff]
          %v2948 = vld [vmem:[#allocation11 + $0x268] sm:$0xff]
          %v2949 = vld [vmem:[#allocation11 + $0x270] sm:$0xff]
          %v2950 = vld [vmem:[#allocation11 + $0x278] sm:$0xff]
          %v2951 = vld [vmem:[#allocation11 + $0x280] sm:$0xff]
          %v2952 = vld [vmem:[#allocation11 + $0x288] sm:$0xff]
          %v2953 = vld [vmem:[#allocation11 + $0x290] sm:$0xff]
          %v2954 = vld [vmem:[#allocation11 + $0x298] sm:$0xff]
          %v2955 = vld [vmem:[#allocation11 + $0x2a0] sm:$0xff]
          %v2956 = vld [vmem:[#allocation11 + $0x2a8] sm:$0xff]
          %v2957 = vld [vmem:[#allocation11 + $0x2b0] sm:$0xff]
          %v2958 = vld [vmem:[#allocation11 + $0x2b8] sm:$0xff]
          %v2959 = vld [vmem:[#allocation11 + $0x2c0] sm:$0xff]
          %v2960 = vld [vmem:[#allocation11 + $0x2c8] sm:$0xff]
          %v2961 = vld [vmem:[#allocation11 + $0x2d0] sm:$0xff]
          %v2962 = vld [vmem:[#allocation11 + $0x2d8] sm:$0xff]
          %v2963 = vld [vmem:[#allocation11 + $0x2e0] sm:$0xff]
          %v2964 = vld [vmem:[#allocation11 + $0x2e8] sm:$0xff]
          %v2965 = vld [vmem:[#allocation11 + $0x2f0] sm:$0xff]
          %v2966 = vld [vmem:[#allocation11 + $0x2f8] sm:$0xff]
          %v2967 = vld [vmem:[#allocation11 + $0x300] sm:$0xff]
          %v2968 = vld [vmem:[#allocation11 + $0x308] sm:$0xff]
          %v2969 = vld [vmem:[#allocation11 + $0x310] sm:$0xff]
          %v2970 = vld [vmem:[#allocation11 + $0x318] sm:$0xff]
          %v2971 = vld [vmem:[#allocation11 + $0x320] sm:$0xff]
          %v2972 = vld [vmem:[#allocation11 + $0x328] sm:$0xff]
          %v2973 = vld [vmem:[#allocation11 + $0x330] sm:$0xff]
          %v2974 = vld [vmem:[#allocation11 + $0x338] sm:$0xff]
          %v2975 = vld [vmem:[#allocation11 + $0x340] sm:$0xff]
          %v2976 = vld [vmem:[#allocation11 + $0x348] sm:$0xff]
          %v2977 = vld [vmem:[#allocation11 + $0x350] sm:$0xff]
          %v2978 = vld [vmem:[#allocation11 + $0x358] sm:$0xff]
          %v2979 = vld [vmem:[#allocation11 + $0x360] sm:$0xff]
          %v2980 = vld [vmem:[#allocation11 + $0x368] sm:$0xff]
          %v2981 = vld [vmem:[#allocation11 + $0x370] sm:$0xff]
          %v2982 = vld [vmem:[#allocation11 + $0x378] sm:$0xff]
          %v2983 = vld [vmem:[#allocation11 + $0x380] sm:$0xff]
          %v2984 = vld [vmem:[#allocation11 + $0x388] sm:$0xff]
          %v2985 = vld [vmem:[#allocation11 + $0x390] sm:$0xff]
          %v2986 = vld [vmem:[#allocation11 + $0x398] sm:$0xff]
          %v2987 = vld [vmem:[#allocation11 + $0x3a0] sm:$0xff]
          %v2988 = vld [vmem:[#allocation11 + $0x3a8] sm:$0xff]
          %v2989 = vld [vmem:[#allocation11 + $0x3b0] sm:$0xff]
          %v2990 = vld [vmem:[#allocation11 + $0x3b8] sm:$0xff]
          %v2991 = vld [vmem:[#allocation11 + $0x3c0] sm:$0xff]
          %v2992 = vld [vmem:[#allocation11 + $0x3c8] sm:$0xff]
          %v2993 = vld [vmem:[#allocation11 + $0x3d0] sm:$0xff]
          %v2994 = vld [vmem:[#allocation11 + $0x3d8] sm:$0xff]
          %v2995 = vld [vmem:[#allocation11 + $0x3e0] sm:$0xff]
          %v2996 = vld [vmem:[#allocation11 + $0x3e8] sm:$0xff]
          %v2997 = vld [vmem:[#allocation11 + $0x3f0] sm:$0xff]
          %v2998 = vld [vmem:[#allocation11 + $0x3f8] sm:$0xff]
          %v2999 = vld [vmem:[#allocation12] sm:$0xf]
          %v3001 = vlaneseq
          %v3002 = vshrl.u32 %v3001, 7
          %v3003 = vsub.s32 0, %v3002
          %v3004 = vrot.slane %v2999, %v3003
          %v3005 = vlaneseq
          %v3006 = vshrl.u32 %v3005, 7
          %v3007 = vsub.s32 1, %v3006
          %v3008 = vrot.slane %v2999, %v3007
          %v3009 = vlaneseq
          %v3010 = vshrl.u32 %v3009, 7
          %v3011 = vsub.s32 2, %v3010
          %v3012 = vrot.slane %v2999, %v3011
          %v3013 = vlaneseq
          %v3014 = vshrl.u32 %v3013, 7
          %v3015 = vsub.s32 3, %v3014
          %v3016 = vrot.slane %v2999, %v3015
          %v3149 = vunpack.c.l.b16 %v2871
          %v3150 = vunpack.c.h.b16 %v2871
          %v3151 = vunpack.c.l.b16 %v2872
          %v3152 = vunpack.c.h.b16 %v2872
          %v3153 = vunpack.c.l.b16 %v2873
          %v3154 = vunpack.c.h.b16 %v2873
          %v3155 = vunpack.c.l.b16 %v2874
          %v3156 = vunpack.c.h.b16 %v2874
          %v3157 = vunpack.c.l.b16 %v2875
          %v3158 = vunpack.c.h.b16 %v2875
          %v3159 = vunpack.c.l.b16 %v2876
          %v3160 = vunpack.c.h.b16 %v2876
          %v3161 = vunpack.c.l.b16 %v2877
          %v3162 = vunpack.c.h.b16 %v2877
          %v3163 = vunpack.c.l.b16 %v2878
          %v3164 = vunpack.c.h.b16 %v2878
          %v3165 = vunpack.c.l.b16 %v2879
          %v3166 = vunpack.c.h.b16 %v2879
          %v3167 = vunpack.c.l.b16 %v2880
          %v3168 = vunpack.c.h.b16 %v2880
          %v3169 = vunpack.c.l.b16 %v2881
          %v3170 = vunpack.c.h.b16 %v2881
          %v3171 = vunpack.c.l.b16 %v2882
          %v3172 = vunpack.c.h.b16 %v2882
          %v3173 = vunpack.c.l.b16 %v2883
          %v3174 = vunpack.c.h.b16 %v2883
          %v3175 = vunpack.c.l.b16 %v2884
          %v3176 = vunpack.c.h.b16 %v2884
          %v3177 = vunpack.c.l.b16 %v2885
          %v3178 = vunpack.c.h.b16 %v2885
          %v3179 = vunpack.c.l.b16 %v2886
          %v3180 = vunpack.c.h.b16 %v2886
          %v3181 = vunpack.c.l.b16 %v2887
          %v3182 = vunpack.c.h.b16 %v2887
          %v3183 = vunpack.c.l.b16 %v2888
          %v3184 = vunpack.c.h.b16 %v2888
          %v3185 = vunpack.c.l.b16 %v2889
          %v3186 = vunpack.c.h.b16 %v2889
          %v3187 = vunpack.c.l.b16 %v2890
          %v3188 = vunpack.c.h.b16 %v2890
          %v3189 = vunpack.c.l.b16 %v2891
          %v3190 = vunpack.c.h.b16 %v2891
          %v3191 = vunpack.c.l.b16 %v2892
          %v3192 = vunpack.c.h.b16 %v2892
          %v3193 = vunpack.c.l.b16 %v2893
          %v3194 = vunpack.c.h.b16 %v2893
          %v3195 = vunpack.c.l.b16 %v2894
          %v3196 = vunpack.c.h.b16 %v2894
          %v3197 = vunpack.c.l.b16 %v2895
          %v3198 = vunpack.c.h.b16 %v2895
          %v3199 = vunpack.c.l.b16 %v2896
          %v3200 = vunpack.c.h.b16 %v2896
          %v3201 = vunpack.c.l.b16 %v2897
          %v3202 = vunpack.c.h.b16 %v2897
          %v3203 = vunpack.c.l.b16 %v2898
          %v3204 = vunpack.c.h.b16 %v2898
          %v3205 = vunpack.c.l.b16 %v2899
          %v3206 = vunpack.c.h.b16 %v2899
          %v3207 = vunpack.c.l.b16 %v2900
          %v3208 = vunpack.c.h.b16 %v2900
          %v3209 = vunpack.c.l.b16 %v2901
          %v3210 = vunpack.c.h.b16 %v2901
          %v3211 = vunpack.c.l.b16 %v2902
          %v3212 = vunpack.c.h.b16 %v2902
          %v3213 = vunpack.c.l.b16 %v2903
          %v3214 = vunpack.c.h.b16 %v2903
          %v3215 = vunpack.c.l.b16 %v2904
          %v3216 = vunpack.c.h.b16 %v2904
          %v3217 = vunpack.c.l.b16 %v2905
          %v3218 = vunpack.c.h.b16 %v2905
          %v3219 = vunpack.c.l.b16 %v2906
          %v3220 = vunpack.c.h.b16 %v2906
          %v3221 = vunpack.c.l.b16 %v2907
          %v3222 = vunpack.c.h.b16 %v2907
          %v3223 = vunpack.c.l.b16 %v2908
          %v3224 = vunpack.c.h.b16 %v2908
          %v3225 = vunpack.c.l.b16 %v2909
          %v3226 = vunpack.c.h.b16 %v2909
          %v3227 = vunpack.c.l.b16 %v2910
          %v3228 = vunpack.c.h.b16 %v2910
          %v3229 = vunpack.c.l.b16 %v2911
          %v3230 = vunpack.c.h.b16 %v2911
          %v3231 = vunpack.c.l.b16 %v2912
          %v3232 = vunpack.c.h.b16 %v2912
          %v3233 = vunpack.c.l.b16 %v2913
          %v3234 = vunpack.c.h.b16 %v2913
          %v3235 = vunpack.c.l.b16 %v2914
          %v3236 = vunpack.c.h.b16 %v2914
          %v3237 = vunpack.c.l.b16 %v2915
          %v3238 = vunpack.c.h.b16 %v2915
          %v3239 = vunpack.c.l.b16 %v2916
          %v3240 = vunpack.c.h.b16 %v2916
          %v3241 = vunpack.c.l.b16 %v2917
          %v3242 = vunpack.c.h.b16 %v2917
          %v3243 = vunpack.c.l.b16 %v2918
          %v3244 = vunpack.c.h.b16 %v2918
          %v3245 = vunpack.c.l.b16 %v2919
          %v3246 = vunpack.c.h.b16 %v2919
          %v3247 = vunpack.c.l.b16 %v2920
          %v3248 = vunpack.c.h.b16 %v2920
          %v3249 = vunpack.c.l.b16 %v2921
          %v3250 = vunpack.c.h.b16 %v2921
          %v3251 = vunpack.c.l.b16 %v2922
          %v3252 = vunpack.c.h.b16 %v2922
          %v3253 = vunpack.c.l.b16 %v2923
          %v3254 = vunpack.c.h.b16 %v2923
          %v3255 = vunpack.c.l.b16 %v2924
          %v3256 = vunpack.c.h.b16 %v2924
          %v3257 = vunpack.c.l.b16 %v2925
          %v3258 = vunpack.c.h.b16 %v2925
          %v3259 = vunpack.c.l.b16 %v2926
          %v3260 = vunpack.c.h.b16 %v2926
          %v3261 = vunpack.c.l.b16 %v2927
          %v3262 = vunpack.c.h.b16 %v2927
          %v3263 = vunpack.c.l.b16 %v2928
          %v3264 = vunpack.c.h.b16 %v2928
          %v3265 = vunpack.c.l.b16 %v2929
          %v3266 = vunpack.c.h.b16 %v2929
          %v3267 = vunpack.c.l.b16 %v2930
          %v3268 = vunpack.c.h.b16 %v2930
          %v3269 = vunpack.c.l.b16 %v2931
          %v3270 = vunpack.c.h.b16 %v2931
          %v3271 = vunpack.c.l.b16 %v2932
          %v3272 = vunpack.c.h.b16 %v2932
          %v3273 = vunpack.c.l.b16 %v2933
          %v3274 = vunpack.c.h.b16 %v2933
          %v3275 = vunpack.c.l.b16 %v2934
          %v3276 = vunpack.c.h.b16 %v2934
          %v3277 = vunpack.c.l.b16 %v2935
          %v3278 = vunpack.c.h.b16 %v2935
          %v3279 = vunpack.c.l.b16 %v2936
          %v3280 = vunpack.c.h.b16 %v2936
          %v3281 = vunpack.c.l.b16 %v2937
          %v3282 = vunpack.c.h.b16 %v2937
          %v3283 = vunpack.c.l.b16 %v2938
          %v3284 = vunpack.c.h.b16 %v2938
          %v3285 = vunpack.c.l.b16 %v2939
          %v3286 = vunpack.c.h.b16 %v2939
          %v3287 = vunpack.c.l.b16 %v2940
          %v3288 = vunpack.c.h.b16 %v2940
          %v3289 = vunpack.c.l.b16 %v2941
          %v3290 = vunpack.c.h.b16 %v2941
          %v3291 = vunpack.c.l.b16 %v2942
          %v3292 = vunpack.c.h.b16 %v2942
          %v3293 = vunpack.c.l.b16 %v2943
          %v3294 = vunpack.c.h.b16 %v2943
          %v3295 = vunpack.c.l.b16 %v2944
          %v3296 = vunpack.c.h.b16 %v2944
          %v3297 = vunpack.c.l.b16 %v2945
          %v3298 = vunpack.c.h.b16 %v2945
          %v3299 = vunpack.c.l.b16 %v2946
          %v3300 = vunpack.c.h.b16 %v2946
          %v3301 = vunpack.c.l.b16 %v2947
          %v3302 = vunpack.c.h.b16 %v2947
          %v3303 = vunpack.c.l.b16 %v2948
          %v3304 = vunpack.c.h.b16 %v2948
          %v3305 = vunpack.c.l.b16 %v2949
          %v3306 = vunpack.c.h.b16 %v2949
          %v3307 = vunpack.c.l.b16 %v2950
          %v3308 = vunpack.c.h.b16 %v2950
          %v3309 = vunpack.c.l.b16 %v2951
          %v3310 = vunpack.c.h.b16 %v2951
          %v3311 = vunpack.c.l.b16 %v2952
          %v3312 = vunpack.c.h.b16 %v2952
          %v3313 = vunpack.c.l.b16 %v2953
          %v3314 = vunpack.c.h.b16 %v2953
          %v3315 = vunpack.c.l.b16 %v2954
          %v3316 = vunpack.c.h.b16 %v2954
          %v3317 = vunpack.c.l.b16 %v2955
          %v3318 = vunpack.c.h.b16 %v2955
          %v3319 = vunpack.c.l.b16 %v2956
          %v3320 = vunpack.c.h.b16 %v2956
          %v3321 = vunpack.c.l.b16 %v2957
          %v3322 = vunpack.c.h.b16 %v2957
          %v3323 = vunpack.c.l.b16 %v2958
          %v3324 = vunpack.c.h.b16 %v2958
          %v3325 = vunpack.c.l.b16 %v2959
          %v3326 = vunpack.c.h.b16 %v2959
          %v3327 = vunpack.c.l.b16 %v2960
          %v3328 = vunpack.c.h.b16 %v2960
          %v3329 = vunpack.c.l.b16 %v2961
          %v3330 = vunpack.c.h.b16 %v2961
          %v3331 = vunpack.c.l.b16 %v2962
          %v3332 = vunpack.c.h.b16 %v2962
          %v3333 = vunpack.c.l.b16 %v2963
          %v3334 = vunpack.c.h.b16 %v2963
          %v3335 = vunpack.c.l.b16 %v2964
          %v3336 = vunpack.c.h.b16 %v2964
          %v3337 = vunpack.c.l.b16 %v2965
          %v3338 = vunpack.c.h.b16 %v2965
          %v3339 = vunpack.c.l.b16 %v2966
          %v3340 = vunpack.c.h.b16 %v2966
          %v3341 = vunpack.c.l.b16 %v2967
          %v3342 = vunpack.c.h.b16 %v2967
          %v3343 = vunpack.c.l.b16 %v2968
          %v3344 = vunpack.c.h.b16 %v2968
          %v3345 = vunpack.c.l.b16 %v2969
          %v3346 = vunpack.c.h.b16 %v2969
          %v3347 = vunpack.c.l.b16 %v2970
          %v3348 = vunpack.c.h.b16 %v2970
          %v3349 = vunpack.c.l.b16 %v2971
          %v3350 = vunpack.c.h.b16 %v2971
          %v3351 = vunpack.c.l.b16 %v2972
          %v3352 = vunpack.c.h.b16 %v2972
          %v3353 = vunpack.c.l.b16 %v2973
          %v3354 = vunpack.c.h.b16 %v2973
          %v3355 = vunpack.c.l.b16 %v2974
          %v3356 = vunpack.c.h.b16 %v2974
          %v3357 = vunpack.c.l.b16 %v2975
          %v3358 = vunpack.c.h.b16 %v2975
          %v3359 = vunpack.c.l.b16 %v2976
          %v3360 = vunpack.c.h.b16 %v2976
          %v3361 = vunpack.c.l.b16 %v2977
          %v3362 = vunpack.c.h.b16 %v2977
          %v3363 = vunpack.c.l.b16 %v2978
          %v3364 = vunpack.c.h.b16 %v2978
          %v3365 = vunpack.c.l.b16 %v2979
          %v3366 = vunpack.c.h.b16 %v2979
          %v3367 = vunpack.c.l.b16 %v2980
          %v3368 = vunpack.c.h.b16 %v2980
          %v3369 = vunpack.c.l.b16 %v2981
          %v3370 = vunpack.c.h.b16 %v2981
          %v3371 = vunpack.c.l.b16 %v2982
          %v3372 = vunpack.c.h.b16 %v2982
          %v3373 = vunpack.c.l.b16 %v2983
          %v3374 = vunpack.c.h.b16 %v2983
          %v3375 = vunpack.c.l.b16 %v2984
          %v3376 = vunpack.c.h.b16 %v2984
          %v3377 = vunpack.c.l.b16 %v2985
          %v3378 = vunpack.c.h.b16 %v2985
          %v3379 = vunpack.c.l.b16 %v2986
          %v3380 = vunpack.c.h.b16 %v2986
          %v3381 = vunpack.c.l.b16 %v2987
          %v3382 = vunpack.c.h.b16 %v2987
          %v3383 = vunpack.c.l.b16 %v2988
          %v3384 = vunpack.c.h.b16 %v2988
          %v3385 = vunpack.c.l.b16 %v2989
          %v3386 = vunpack.c.h.b16 %v2989
          %v3387 = vunpack.c.l.b16 %v2990
          %v3388 = vunpack.c.h.b16 %v2990
          %v3389 = vunpack.c.l.b16 %v2991
          %v3390 = vunpack.c.h.b16 %v2991
          %v3391 = vunpack.c.l.b16 %v2992
          %v3392 = vunpack.c.h.b16 %v2992
          %v3393 = vunpack.c.l.b16 %v2993
          %v3394 = vunpack.c.h.b16 %v2993
          %v3395 = vunpack.c.l.b16 %v2994
          %v3396 = vunpack.c.h.b16 %v2994
          %v3397 = vunpack.c.l.b16 %v2995
          %v3398 = vunpack.c.h.b16 %v2995
          %v3399 = vunpack.c.l.b16 %v2996
          %v3400 = vunpack.c.h.b16 %v2996
          %v3401 = vunpack.c.l.b16 %v2997
          %v3402 = vunpack.c.h.b16 %v2997
          %v3403 = vunpack.c.l.b16 %v2998
          %v3404 = vunpack.c.h.b16 %v2998
          %v3405 = vpack.c.b16 %v3153, %v3149
          %v3406 = vpack.c.b16 %v3154, %v3150
          %v3407 = vpack.c.b16 %v3155, %v3151
          %v3408 = vpack.c.b16 %v3156, %v3152
          %v3409 = vpack.c.b16 %v3161, %v3157
          %v3410 = vpack.c.b16 %v3162, %v3158
          %v3411 = vpack.c.b16 %v3163, %v3159
          %v3412 = vpack.c.b16 %v3164, %v3160
          %v3413 = vpack.c.b16 %v3169, %v3165
          %v3414 = vpack.c.b16 %v3170, %v3166
          %v3415 = vpack.c.b16 %v3171, %v3167
          %v3416 = vpack.c.b16 %v3172, %v3168
          %v3417 = vpack.c.b16 %v3177, %v3173
          %v3418 = vpack.c.b16 %v3178, %v3174
          %v3419 = vpack.c.b16 %v3179, %v3175
          %v3420 = vpack.c.b16 %v3180, %v3176
          %v3421 = vpack.c.b16 %v3185, %v3181
          %v3422 = vpack.c.b16 %v3186, %v3182
          %v3423 = vpack.c.b16 %v3187, %v3183
          %v3424 = vpack.c.b16 %v3188, %v3184
          %v3425 = vpack.c.b16 %v3193, %v3189
          %v3426 = vpack.c.b16 %v3194, %v3190
          %v3427 = vpack.c.b16 %v3195, %v3191
          %v3428 = vpack.c.b16 %v3196, %v3192
          %v3429 = vpack.c.b16 %v3201, %v3197
          %v3430 = vpack.c.b16 %v3202, %v3198
          %v3431 = vpack.c.b16 %v3203, %v3199
          %v3432 = vpack.c.b16 %v3204, %v3200
          %v3433 = vpack.c.b16 %v3209, %v3205
          %v3434 = vpack.c.b16 %v3210, %v3206
          %v3435 = vpack.c.b16 %v3211, %v3207
          %v3436 = vpack.c.b16 %v3212, %v3208
          %v3437 = vpack.c.b16 %v3217, %v3213
          %v3438 = vpack.c.b16 %v3218, %v3214
          %v3439 = vpack.c.b16 %v3219, %v3215
          %v3440 = vpack.c.b16 %v3220, %v3216
          %v3441 = vpack.c.b16 %v3225, %v3221
          %v3442 = vpack.c.b16 %v3226, %v3222
          %v3443 = vpack.c.b16 %v3227, %v3223
          %v3444 = vpack.c.b16 %v3228, %v3224
          %v3445 = vpack.c.b16 %v3233, %v3229
          %v3446 = vpack.c.b16 %v3234, %v3230
          %v3447 = vpack.c.b16 %v3235, %v3231
          %v3448 = vpack.c.b16 %v3236, %v3232
          %v3449 = vpack.c.b16 %v3241, %v3237
          %v3450 = vpack.c.b16 %v3242, %v3238
          %v3451 = vpack.c.b16 %v3243, %v3239
          %v3452 = vpack.c.b16 %v3244, %v3240
          %v3453 = vpack.c.b16 %v3249, %v3245
          %v3454 = vpack.c.b16 %v3250, %v3246
          %v3455 = vpack.c.b16 %v3251, %v3247
          %v3456 = vpack.c.b16 %v3252, %v3248
          %v3457 = vpack.c.b16 %v3257, %v3253
          %v3458 = vpack.c.b16 %v3258, %v3254
          %v3459 = vpack.c.b16 %v3259, %v3255
          %v3460 = vpack.c.b16 %v3260, %v3256
          %v3461 = vpack.c.b16 %v3265, %v3261
          %v3462 = vpack.c.b16 %v3266, %v3262
          %v3463 = vpack.c.b16 %v3267, %v3263
          %v3464 = vpack.c.b16 %v3268, %v3264
          %v3465 = vpack.c.b16 %v3273, %v3269
          %v3466 = vpack.c.b16 %v3274, %v3270
          %v3467 = vpack.c.b16 %v3275, %v3271
          %v3468 = vpack.c.b16 %v3276, %v3272
          %v3469 = vpack.c.b16 %v3281, %v3277
          %v3470 = vpack.c.b16 %v3282, %v3278
          %v3471 = vpack.c.b16 %v3283, %v3279
          %v3472 = vpack.c.b16 %v3284, %v3280
          %v3473 = vpack.c.b16 %v3289, %v3285
          %v3474 = vpack.c.b16 %v3290, %v3286
          %v3475 = vpack.c.b16 %v3291, %v3287
          %v3476 = vpack.c.b16 %v3292, %v3288
          %v3477 = vpack.c.b16 %v3297, %v3293
          %v3478 = vpack.c.b16 %v3298, %v3294
          %v3479 = vpack.c.b16 %v3299, %v3295
          %v3480 = vpack.c.b16 %v3300, %v3296
          %v3481 = vpack.c.b16 %v3305, %v3301
          %v3482 = vpack.c.b16 %v3306, %v3302
          %v3483 = vpack.c.b16 %v3307, %v3303
          %v3484 = vpack.c.b16 %v3308, %v3304
          %v3485 = vpack.c.b16 %v3313, %v3309
          %v3486 = vpack.c.b16 %v3314, %v3310
          %v3487 = vpack.c.b16 %v3315, %v3311
          %v3488 = vpack.c.b16 %v3316, %v3312
          %v3489 = vpack.c.b16 %v3321, %v3317
          %v3490 = vpack.c.b16 %v3322, %v3318
          %v3491 = vpack.c.b16 %v3323, %v3319
          %v3492 = vpack.c.b16 %v3324, %v3320
          %v3493 = vpack.c.b16 %v3329, %v3325
          %v3494 = vpack.c.b16 %v3330, %v3326
          %v3495 = vpack.c.b16 %v3331, %v3327
          %v3496 = vpack.c.b16 %v3332, %v3328
          %v3497 = vpack.c.b16 %v3337, %v3333
          %v3498 = vpack.c.b16 %v3338, %v3334
          %v3499 = vpack.c.b16 %v3339, %v3335
          %v3500 = vpack.c.b16 %v3340, %v3336
          %v3501 = vpack.c.b16 %v3345, %v3341
          %v3502 = vpack.c.b16 %v3346, %v3342
          %v3503 = vpack.c.b16 %v3347, %v3343
          %v3504 = vpack.c.b16 %v3348, %v3344
          %v3505 = vpack.c.b16 %v3353, %v3349
          %v3506 = vpack.c.b16 %v3354, %v3350
          %v3507 = vpack.c.b16 %v3355, %v3351
          %v3508 = vpack.c.b16 %v3356, %v3352
          %v3509 = vpack.c.b16 %v3361, %v3357
          %v3510 = vpack.c.b16 %v3362, %v3358
          %v3511 = vpack.c.b16 %v3363, %v3359
          %v3512 = vpack.c.b16 %v3364, %v3360
          %v3513 = vpack.c.b16 %v3369, %v3365
          %v3514 = vpack.c.b16 %v3370, %v3366
          %v3515 = vpack.c.b16 %v3371, %v3367
          %v3516 = vpack.c.b16 %v3372, %v3368
          %v3517 = vpack.c.b16 %v3377, %v3373
          %v3518 = vpack.c.b16 %v3378, %v3374
          %v3519 = vpack.c.b16 %v3379, %v3375
          %v3520 = vpack.c.b16 %v3380, %v3376
          %v3521 = vpack.c.b16 %v3385, %v3381
          %v3522 = vpack.c.b16 %v3386, %v3382
          %v3523 = vpack.c.b16 %v3387, %v3383
          %v3524 = vpack.c.b16 %v3388, %v3384
          %v3525 = vpack.c.b16 %v3393, %v3389
          %v3526 = vpack.c.b16 %v3394, %v3390
          %v3527 = vpack.c.b16 %v3395, %v3391
          %v3528 = vpack.c.b16 %v3396, %v3392
          %v3529 = vpack.c.b16 %v3401, %v3397
          %v3530 = vpack.c.b16 %v3402, %v3398
          %v3531 = vpack.c.b16 %v3403, %v3399
          %v3532 = vpack.c.b16 %v3404, %v3400
          %3661 = vmatprep.subr.bf16.mxu0 %v3434
          %3662 = vmatpush1.bf16.msra.mxu0 %v3433
          %3663 = vmatprep.subr.bf16.mxu0 %v3430
          %3664 = vmatpush1.bf16.msra.mxu0 %v3429
          %3665 = vmatprep.subr.bf16.mxu0 %v3426
          %3666 = vmatpush1.bf16.msra.mxu0 %v3425
          %3667 = vmatprep.subr.bf16.mxu0 %v3422
          %3668 = vmatpush1.bf16.msra.mxu0 %v3421
          %3669 = vmatprep.subr.bf16.mxu0 %v3418
          %3670 = vmatpush1.bf16.msra.mxu0 %v3417
          %3671 = vmatprep.subr.bf16.mxu0 %v3414
          %3672 = vmatpush1.bf16.msra.mxu0 %v3413
          %3673 = vmatprep.subr.bf16.mxu0 %v3410
          %3674 = vmatpush1.bf16.msra.mxu0 %v3409
          %3675 = vmatprep.subr.bf16.mxu0 %v3406
          %3676 = vmatpush1.bf16.msra.mxu0 %v3405
          %3677 = vmatprep.subr.bf16.mxu0 %v3466
          %3678 = vmatpush2.bf16.msra.mxu0 %v3465
          %3679 = vmatprep.subr.bf16.mxu0 %v3462
          %3680 = vmatpush2.bf16.msra.mxu0 %v3461
          %3681 = vmatprep.subr.bf16.mxu0 %v3458
          %3682 = vmatpush2.bf16.msra.mxu0 %v3457
          %3683 = vmatprep.subr.bf16.mxu0 %v3454
          %3684 = vmatpush2.bf16.msra.mxu0 %v3453
          %3685 = vmatprep.subr.bf16.mxu0 %v3450
          %3686 = vmatpush2.bf16.msra.mxu0 %v3449
          %3687 = vmatprep.subr.bf16.mxu0 %v3446
          %3688 = vmatpush2.bf16.msra.mxu0 %v3445
          %3689 = vmatprep.subr.bf16.mxu0 %v3442
          %3690 = vmatpush2.bf16.msra.mxu0 %v3441
          %3691 = vmatprep.subr.bf16.mxu0 %v3438
          %3692 = vmatpush2.bf16.msra.mxu0 %v3437
          %3693 = vmatprep.mubr.bf16.mxu0 %v2868
          %3694 = vmatmul.mubr.bf16.gmra.mxu0 %v2867
          %v3695 = vpop.f32.mrf.mxu0
          %v3696 = vadd.f32 %v3004, %v3695
          %v3697 = vpop.f32.mrf.mxu0
          %v3698 = vadd.f32 %v3008, %v3697
          %v3699 = vpop.f32.mrf.mxu0
          %v3700 = vpop.f32.mrf.mxu0
          %3701 = vdwg.mxu0
          %3702 = vmatprep.subr.bf16.mxu0 %v3498
          %3703 = vmatpush1.bf16.msra.mxu0 %v3497
          %3704 = vmatprep.subr.bf16.mxu0 %v3494
          %3705 = vmatpush1.bf16.msra.mxu0 %v3493
          %3706 = vmatprep.subr.bf16.mxu0 %v3490
          %3707 = vmatpush1.bf16.msra.mxu0 %v3489
          %3708 = vmatprep.subr.bf16.mxu0 %v3486
          %3709 = vmatpush1.bf16.msra.mxu0 %v3485
          %3710 = vmatprep.subr.bf16.mxu0 %v3482
          %3711 = vmatpush1.bf16.msra.mxu0 %v3481
          %3712 = vmatprep.subr.bf16.mxu0 %v3478
          %3713 = vmatpush1.bf16.msra.mxu0 %v3477
          %3714 = vmatprep.subr.bf16.mxu0 %v3474
          %3715 = vmatpush1.bf16.msra.mxu0 %v3473
          %3716 = vmatprep.subr.bf16.mxu0 %v3470
          %3717 = vmatpush1.bf16.msra.mxu0 %v3469
          %3718 = vmatprep.subr.bf16.mxu0 %v3530
          %3719 = vmatpush2.bf16.msra.mxu0 %v3529
          %3720 = vmatprep.subr.bf16.mxu0 %v3526
          %3721 = vmatpush2.bf16.msra.mxu0 %v3525
          %3722 = vmatprep.subr.bf16.mxu0 %v3522
          %3723 = vmatpush2.bf16.msra.mxu0 %v3521
          %3724 = vmatprep.subr.bf16.mxu0 %v3518
          %3725 = vmatpush2.bf16.msra.mxu0 %v3517
          %3726 = vmatprep.subr.bf16.mxu0 %v3514
          %3727 = vmatpush2.bf16.msra.mxu0 %v3513
          %3728 = vmatprep.subr.bf16.mxu0 %v3510
          %3729 = vmatpush2.bf16.msra.mxu0 %v3509
          %3730 = vmatprep.subr.bf16.mxu0 %v3506
          %3731 = vmatpush2.bf16.msra.mxu0 %v3505
          %3732 = vmatprep.subr.bf16.mxu0 %v3502
          %3733 = vmatpush2.bf16.msra.mxu0 %v3501
          %3734 = vmatprep.mubr.bf16.mxu0 %v2870
          %3735 = vmatmul.mubr.bf16.gmra.mxu0 %v2869
          %v3736 = vpop.f32.mrf.mxu0
          %v3737 = vadd.f32 %v3696, %v3736
          %v3738 = vpop.f32.mrf.mxu0
          %v3739 = vadd.f32 %v3698, %v3738
          %v3740 = vpop.f32.mrf.mxu0
          %v3741 = vpop.f32.mrf.mxu0
          %3742 = vdwg.mxu0
          %3743 = vmatprep.subr.bf16.mxu0 %v3436
          %3744 = vmatpush1.bf16.msra.mxu0 %v3435
          %3745 = vmatprep.subr.bf16.mxu0 %v3432
          %3746 = vmatpush1.bf16.msra.mxu0 %v3431
          %3747 = vmatprep.subr.bf16.mxu0 %v3428
          %3748 = vmatpush1.bf16.msra.mxu0 %v3427
          %3749 = vmatprep.subr.bf16.mxu0 %v3424
          %3750 = vmatpush1.bf16.msra.mxu0 %v3423
          %3751 = vmatprep.subr.bf16.mxu0 %v3420
          %3752 = vmatpush1.bf16.msra.mxu0 %v3419
          %3753 = vmatprep.subr.bf16.mxu0 %v3416
          %3754 = vmatpush1.bf16.msra.mxu0 %v3415
          %3755 = vmatprep.subr.bf16.mxu0 %v3412
          %3756 = vmatpush1.bf16.msra.mxu0 %v3411
          %3757 = vmatprep.subr.bf16.mxu0 %v3408
          %3758 = vmatpush1.bf16.msra.mxu0 %v3407
          %3759 = vmatprep.subr.bf16.mxu0 %v3468
          %3760 = vmatpush2.bf16.msra.mxu0 %v3467
          %3761 = vmatprep.subr.bf16.mxu0 %v3464
          %3762 = vmatpush2.bf16.msra.mxu0 %v3463
          %3763 = vmatprep.subr.bf16.mxu0 %v3460
          %3764 = vmatpush2.bf16.msra.mxu0 %v3459
          %3765 = vmatprep.subr.bf16.mxu0 %v3456
          %3766 = vmatpush2.bf16.msra.mxu0 %v3455
          %3767 = vmatprep.subr.bf16.mxu0 %v3452
          %3768 = vmatpush2.bf16.msra.mxu0 %v3451
          %3769 = vmatprep.subr.bf16.mxu0 %v3448
          %3770 = vmatpush2.bf16.msra.mxu0 %v3447
          %3771 = vmatprep.subr.bf16.mxu0 %v3444
          %3772 = vmatpush2.bf16.msra.mxu0 %v3443
          %3773 = vmatprep.subr.bf16.mxu0 %v3440
          %3774 = vmatpush2.bf16.msra.mxu0 %v3439
          %3775 = vmatprep.mubr.bf16.mxu0 %v2868
          %3776 = vmatmul.mubr.bf16.gmra.mxu0 %v2867
          %v3777 = vpop.f32.mrf.mxu0
          %v3778 = vadd.f32 %v3012, %v3777
          %v3779 = vpop.f32.mrf.mxu0
          %v3780 = vadd.f32 %v3016, %v3779
          %v3781 = vpop.f32.mrf.mxu0
          %v3782 = vpop.f32.mrf.mxu0
          %3783 = vdwg.mxu0
          %3784 = vmatprep.subr.bf16.mxu0 %v3500
          %3785 = vmatpush1.bf16.msra.mxu0 %v3499
          %3786 = vmatprep.subr.bf16.mxu0 %v3496
          %3787 = vmatpush1.bf16.msra.mxu0 %v3495
          %3788 = vmatprep.subr.bf16.mxu0 %v3492
          %3789 = vmatpush1.bf16.msra.mxu0 %v3491
          %3790 = vmatprep.subr.bf16.mxu0 %v3488
          %3791 = vmatpush1.bf16.msra.mxu0 %v3487
          %3792 = vmatprep.subr.bf16.mxu0 %v3484
          %3793 = vmatpush1.bf16.msra.mxu0 %v3483
          %3794 = vmatprep.subr.bf16.mxu0 %v3480
          %3795 = vmatpush1.bf16.msra.mxu0 %v3479
          %3796 = vmatprep.subr.bf16.mxu0 %v3476
          %3797 = vmatpush1.bf16.msra.mxu0 %v3475
          %3798 = vmatprep.subr.bf16.mxu0 %v3472
          %3799 = vmatpush1.bf16.msra.mxu0 %v3471
          %3800 = vmatprep.subr.bf16.mxu0 %v3532
          %3801 = vmatpush2.bf16.msra.mxu0 %v3531
          %3802 = vmatprep.subr.bf16.mxu0 %v3528
          %3803 = vmatpush2.bf16.msra.mxu0 %v3527
          %3804 = vmatprep.subr.bf16.mxu0 %v3524
          %3805 = vmatpush2.bf16.msra.mxu0 %v3523
          %3806 = vmatprep.subr.bf16.mxu0 %v3520
          %3807 = vmatpush2.bf16.msra.mxu0 %v3519
          %3808 = vmatprep.subr.bf16.mxu0 %v3516
          %3809 = vmatpush2.bf16.msra.mxu0 %v3515
          %3810 = vmatprep.subr.bf16.mxu0 %v3512
          %3811 = vmatpush2.bf16.msra.mxu0 %v3511
          %3812 = vmatprep.subr.bf16.mxu0 %v3508
          %3813 = vmatpush2.bf16.msra.mxu0 %v3507
          %3814 = vmatprep.subr.bf16.mxu0 %v3504
          %3815 = vmatpush2.bf16.msra.mxu0 %v3503
          %3816 = vmatprep.mubr.bf16.mxu0 %v2870
          %3817 = vmatmul.mubr.bf16.gmra.mxu0 %v2869
          %v3818 = vpop.f32.mrf.mxu0
          %v3819 = vadd.f32 %v3778, %v3818
          %v3820 = vpop.f32.mrf.mxu0
          %v3821 = vadd.f32 %v3780, %v3820
          %v3822 = vpop.f32.mrf.mxu0
          %v3823 = vpop.f32.mrf.mxu0
          %3824 = vdwg.mxu0
          %v3825 = vmax.f32 %v3737, 0.0
          %v3826 = vmax.f32 %v3739, 0.0
          %v3827 = vmax.f32 %v3819, 0.0
          %v3828 = vmax.f32 %v3821, 0.0
          %v3829 = vpack.c.bf16 %v3825, %v3825
          %v3830 = vpack.c.bf16 %v3826, %v3826
          %v3831 = vpack.c.bf16 %v3827, %v3827
          %v3832 = vpack.c.bf16 %v3828, %v3828
          %v3833 = vld [vmem:[#allocation14] sm:$0xff]
          %v3834 = vld [vmem:[#allocation14 + $0x8] sm:$0xff]
          %v3835 = vld [vmem:[#allocation14 + $0x10] sm:$0xff]
          %v3836 = vld [vmem:[#allocation14 + $0x18] sm:$0xff]
          %v3837 = vld [vmem:[#allocation14 + $0x20] sm:$0xff]
          %v3838 = vld [vmem:[#allocation14 + $0x28] sm:$0xff]
          %v3839 = vld [vmem:[#allocation14 + $0x30] sm:$0xff]
          %v3840 = vld [vmem:[#allocation14 + $0x38] sm:$0xff]
          %v3841 = vld [vmem:[#allocation14 + $0x40] sm:$0xff]
          %v3842 = vld [vmem:[#allocation14 + $0x48] sm:$0xff]
          %v3843 = vld [vmem:[#allocation14 + $0x50] sm:$0xff]
          %v3844 = vld [vmem:[#allocation14 + $0x58] sm:$0xff]
          %v3845 = vld [vmem:[#allocation14 + $0x60] sm:$0xff]
          %v3846 = vld [vmem:[#allocation14 + $0x68] sm:$0xff]
          %v3847 = vld [vmem:[#allocation14 + $0x70] sm:$0xff]
          %v3848 = vld [vmem:[#allocation14 + $0x78] sm:$0xff]
          %v3849 = vld [vmem:[#allocation14 + $0x80] sm:$0xff]
          %v3850 = vld [vmem:[#allocation14 + $0x88] sm:$0xff]
          %v3851 = vld [vmem:[#allocation14 + $0x90] sm:$0xff]
          %v3852 = vld [vmem:[#allocation14 + $0x98] sm:$0xff]
          %v3853 = vld [vmem:[#allocation14 + $0xa0] sm:$0xff]
          %v3854 = vld [vmem:[#allocation14 + $0xa8] sm:$0xff]
          %v3855 = vld [vmem:[#allocation14 + $0xb0] sm:$0xff]
          %v3856 = vld [vmem:[#allocation14 + $0xb8] sm:$0xff]
          %v3857 = vld [vmem:[#allocation14 + $0xc0] sm:$0xff]
          %v3858 = vld [vmem:[#allocation14 + $0xc8] sm:$0xff]
          %v3859 = vld [vmem:[#allocation14 + $0xd0] sm:$0xff]
          %v3860 = vld [vmem:[#allocation14 + $0xd8] sm:$0xff]
          %v3861 = vld [vmem:[#allocation14 + $0xe0] sm:$0xff]
          %v3862 = vld [vmem:[#allocation14 + $0xe8] sm:$0xff]
          %v3863 = vld [vmem:[#allocation14 + $0xf0] sm:$0xff]
          %v3864 = vld [vmem:[#allocation14 + $0xf8] sm:$0xff]
          %v3865 = vld [vmem:[#allocation14 + $0x100] sm:$0xff]
          %v3866 = vld [vmem:[#allocation14 + $0x108] sm:$0xff]
          %v3867 = vld [vmem:[#allocation14 + $0x110] sm:$0xff]
          %v3868 = vld [vmem:[#allocation14 + $0x118] sm:$0xff]
          %v3869 = vld [vmem:[#allocation14 + $0x120] sm:$0xff]
          %v3870 = vld [vmem:[#allocation14 + $0x128] sm:$0xff]
          %v3871 = vld [vmem:[#allocation14 + $0x130] sm:$0xff]
          %v3872 = vld [vmem:[#allocation14 + $0x138] sm:$0xff]
          %v3873 = vld [vmem:[#allocation14 + $0x140] sm:$0xff]
          %v3874 = vld [vmem:[#allocation14 + $0x148] sm:$0xff]
          %v3875 = vld [vmem:[#allocation14 + $0x150] sm:$0xff]
          %v3876 = vld [vmem:[#allocation14 + $0x158] sm:$0xff]
          %v3877 = vld [vmem:[#allocation14 + $0x160] sm:$0xff]
          %v3878 = vld [vmem:[#allocation14 + $0x168] sm:$0xff]
          %v3879 = vld [vmem:[#allocation14 + $0x170] sm:$0xff]
          %v3880 = vld [vmem:[#allocation14 + $0x178] sm:$0xff]
          %v3881 = vld [vmem:[#allocation14 + $0x180] sm:$0xff]
          %v3882 = vld [vmem:[#allocation14 + $0x188] sm:$0xff]
          %v3883 = vld [vmem:[#allocation14 + $0x190] sm:$0xff]
          %v3884 = vld [vmem:[#allocation14 + $0x198] sm:$0xff]
          %v3885 = vld [vmem:[#allocation14 + $0x1a0] sm:$0xff]
          %v3886 = vld [vmem:[#allocation14 + $0x1a8] sm:$0xff]
          %v3887 = vld [vmem:[#allocation14 + $0x1b0] sm:$0xff]
          %v3888 = vld [vmem:[#allocation14 + $0x1b8] sm:$0xff]
          %v3889 = vld [vmem:[#allocation14 + $0x1c0] sm:$0xff]
          %v3890 = vld [vmem:[#allocation14 + $0x1c8] sm:$0xff]
          %v3891 = vld [vmem:[#allocation14 + $0x1d0] sm:$0xff]
          %v3892 = vld [vmem:[#allocation14 + $0x1d8] sm:$0xff]
          %v3893 = vld [vmem:[#allocation14 + $0x1e0] sm:$0xff]
          %v3894 = vld [vmem:[#allocation14 + $0x1e8] sm:$0xff]
          %v3895 = vld [vmem:[#allocation14 + $0x1f0] sm:$0xff]
          %v3896 = vld [vmem:[#allocation14 + $0x1f8] sm:$0xff]
          %v3897 = vld [vmem:[#allocation14 + $0x200] sm:$0xff]
          %v3898 = vld [vmem:[#allocation14 + $0x208] sm:$0xff]
          %v3899 = vld [vmem:[#allocation14 + $0x210] sm:$0xff]
          %v3900 = vld [vmem:[#allocation14 + $0x218] sm:$0xff]
          %v3901 = vld [vmem:[#allocation14 + $0x220] sm:$0xff]
          %v3902 = vld [vmem:[#allocation14 + $0x228] sm:$0xff]
          %v3903 = vld [vmem:[#allocation14 + $0x230] sm:$0xff]
          %v3904 = vld [vmem:[#allocation14 + $0x238] sm:$0xff]
          %v3905 = vld [vmem:[#allocation14 + $0x240] sm:$0xff]
          %v3906 = vld [vmem:[#allocation14 + $0x248] sm:$0xff]
          %v3907 = vld [vmem:[#allocation14 + $0x250] sm:$0xff]
          %v3908 = vld [vmem:[#allocation14 + $0x258] sm:$0xff]
          %v3909 = vld [vmem:[#allocation14 + $0x260] sm:$0xff]
          %v3910 = vld [vmem:[#allocation14 + $0x268] sm:$0xff]
          %v3911 = vld [vmem:[#allocation14 + $0x270] sm:$0xff]
          %v3912 = vld [vmem:[#allocation14 + $0x278] sm:$0xff]
          %v3913 = vld [vmem:[#allocation14 + $0x280] sm:$0xff]
          %v3914 = vld [vmem:[#allocation14 + $0x288] sm:$0xff]
          %v3915 = vld [vmem:[#allocation14 + $0x290] sm:$0xff]
          %v3916 = vld [vmem:[#allocation14 + $0x298] sm:$0xff]
          %v3917 = vld [vmem:[#allocation14 + $0x2a0] sm:$0xff]
          %v3918 = vld [vmem:[#allocation14 + $0x2a8] sm:$0xff]
          %v3919 = vld [vmem:[#allocation14 + $0x2b0] sm:$0xff]
          %v3920 = vld [vmem:[#allocation14 + $0x2b8] sm:$0xff]
          %v3921 = vld [vmem:[#allocation14 + $0x2c0] sm:$0xff]
          %v3922 = vld [vmem:[#allocation14 + $0x2c8] sm:$0xff]
          %v3923 = vld [vmem:[#allocation14 + $0x2d0] sm:$0xff]
          %v3924 = vld [vmem:[#allocation14 + $0x2d8] sm:$0xff]
          %v3925 = vld [vmem:[#allocation14 + $0x2e0] sm:$0xff]
          %v3926 = vld [vmem:[#allocation14 + $0x2e8] sm:$0xff]
          %v3927 = vld [vmem:[#allocation14 + $0x2f0] sm:$0xff]
          %v3928 = vld [vmem:[#allocation14 + $0x2f8] sm:$0xff]
          %v3929 = vld [vmem:[#allocation14 + $0x300] sm:$0xff]
          %v3930 = vld [vmem:[#allocation14 + $0x308] sm:$0xff]
          %v3931 = vld [vmem:[#allocation14 + $0x310] sm:$0xff]
          %v3932 = vld [vmem:[#allocation14 + $0x318] sm:$0xff]
          %v3933 = vld [vmem:[#allocation14 + $0x320] sm:$0xff]
          %v3934 = vld [vmem:[#allocation14 + $0x328] sm:$0xff]
          %v3935 = vld [vmem:[#allocation14 + $0x330] sm:$0xff]
          %v3936 = vld [vmem:[#allocation14 + $0x338] sm:$0xff]
          %v3937 = vld [vmem:[#allocation14 + $0x340] sm:$0xff]
          %v3938 = vld [vmem:[#allocation14 + $0x348] sm:$0xff]
          %v3939 = vld [vmem:[#allocation14 + $0x350] sm:$0xff]
          %v3940 = vld [vmem:[#allocation14 + $0x358] sm:$0xff]
          %v3941 = vld [vmem:[#allocation14 + $0x360] sm:$0xff]
          %v3942 = vld [vmem:[#allocation14 + $0x368] sm:$0xff]
          %v3943 = vld [vmem:[#allocation14 + $0x370] sm:$0xff]
          %v3944 = vld [vmem:[#allocation14 + $0x378] sm:$0xff]
          %v3945 = vld [vmem:[#allocation14 + $0x380] sm:$0xff]
          %v3946 = vld [vmem:[#allocation14 + $0x388] sm:$0xff]
          %v3947 = vld [vmem:[#allocation14 + $0x390] sm:$0xff]
          %v3948 = vld [vmem:[#allocation14 + $0x398] sm:$0xff]
          %v3949 = vld [vmem:[#allocation14 + $0x3a0] sm:$0xff]
          %v3950 = vld [vmem:[#allocation14 + $0x3a8] sm:$0xff]
          %v3951 = vld [vmem:[#allocation14 + $0x3b0] sm:$0xff]
          %v3952 = vld [vmem:[#allocation14 + $0x3b8] sm:$0xff]
          %v3953 = vld [vmem:[#allocation14 + $0x3c0] sm:$0xff]
          %v3954 = vld [vmem:[#allocation14 + $0x3c8] sm:$0xff]
          %v3955 = vld [vmem:[#allocation14 + $0x3d0] sm:$0xff]
          %v3956 = vld [vmem:[#allocation14 + $0x3d8] sm:$0xff]
          %v3957 = vld [vmem:[#allocation14 + $0x3e0] sm:$0xff]
          %v3958 = vld [vmem:[#allocation14 + $0x3e8] sm:$0xff]
          %v3959 = vld [vmem:[#allocation14 + $0x3f0] sm:$0xff]
          %v3960 = vld [vmem:[#allocation14 + $0x3f8] sm:$0xff]
          %v3961 = vld [vmem:[#allocation15] sm:$0xf]
          %v3963 = vlaneseq
          %v3964 = vshrl.u32 %v3963, 7
          %v3965 = vsub.s32 0, %v3964
          %v3966 = vrot.slane %v3961, %v3965
          %v3967 = vlaneseq
          %v3968 = vshrl.u32 %v3967, 7
          %v3969 = vsub.s32 1, %v3968
          %v3970 = vrot.slane %v3961, %v3969
          %v3971 = vlaneseq
          %v3972 = vshrl.u32 %v3971, 7
          %v3973 = vsub.s32 2, %v3972
          %v3974 = vrot.slane %v3961, %v3973
          %v3975 = vlaneseq
          %v3976 = vshrl.u32 %v3975, 7
          %v3977 = vsub.s32 3, %v3976
          %v3978 = vrot.slane %v3961, %v3977
          %v4111 = vunpack.c.l.b16 %v3833
          %v4112 = vunpack.c.h.b16 %v3833
          %v4113 = vunpack.c.l.b16 %v3834
          %v4114 = vunpack.c.h.b16 %v3834
          %v4115 = vunpack.c.l.b16 %v3835
          %v4116 = vunpack.c.h.b16 %v3835
          %v4117 = vunpack.c.l.b16 %v3836
          %v4118 = vunpack.c.h.b16 %v3836
          %v4119 = vunpack.c.l.b16 %v3837
          %v4120 = vunpack.c.h.b16 %v3837
          %v4121 = vunpack.c.l.b16 %v3838
          %v4122 = vunpack.c.h.b16 %v3838
          %v4123 = vunpack.c.l.b16 %v3839
          %v4124 = vunpack.c.h.b16 %v3839
          %v4125 = vunpack.c.l.b16 %v3840
          %v4126 = vunpack.c.h.b16 %v3840
          %v4127 = vunpack.c.l.b16 %v3841
          %v4128 = vunpack.c.h.b16 %v3841
          %v4129 = vunpack.c.l.b16 %v3842
          %v4130 = vunpack.c.h.b16 %v3842
          %v4131 = vunpack.c.l.b16 %v3843
          %v4132 = vunpack.c.h.b16 %v3843
          %v4133 = vunpack.c.l.b16 %v3844
          %v4134 = vunpack.c.h.b16 %v3844
          %v4135 = vunpack.c.l.b16 %v3845
          %v4136 = vunpack.c.h.b16 %v3845
          %v4137 = vunpack.c.l.b16 %v3846
          %v4138 = vunpack.c.h.b16 %v3846
          %v4139 = vunpack.c.l.b16 %v3847
          %v4140 = vunpack.c.h.b16 %v3847
          %v4141 = vunpack.c.l.b16 %v3848
          %v4142 = vunpack.c.h.b16 %v3848
          %v4143 = vunpack.c.l.b16 %v3849
          %v4144 = vunpack.c.h.b16 %v3849
          %v4145 = vunpack.c.l.b16 %v3850
          %v4146 = vunpack.c.h.b16 %v3850
          %v4147 = vunpack.c.l.b16 %v3851
          %v4148 = vunpack.c.h.b16 %v3851
          %v4149 = vunpack.c.l.b16 %v3852
          %v4150 = vunpack.c.h.b16 %v3852
          %v4151 = vunpack.c.l.b16 %v3853
          %v4152 = vunpack.c.h.b16 %v3853
          %v4153 = vunpack.c.l.b16 %v3854
          %v4154 = vunpack.c.h.b16 %v3854
          %v4155 = vunpack.c.l.b16 %v3855
          %v4156 = vunpack.c.h.b16 %v3855
          %v4157 = vunpack.c.l.b16 %v3856
          %v4158 = vunpack.c.h.b16 %v3856
          %v4159 = vunpack.c.l.b16 %v3857
          %v4160 = vunpack.c.h.b16 %v3857
          %v4161 = vunpack.c.l.b16 %v3858
          %v4162 = vunpack.c.h.b16 %v3858
          %v4163 = vunpack.c.l.b16 %v3859
          %v4164 = vunpack.c.h.b16 %v3859
          %v4165 = vunpack.c.l.b16 %v3860
          %v4166 = vunpack.c.h.b16 %v3860
          %v4167 = vunpack.c.l.b16 %v3861
          %v4168 = vunpack.c.h.b16 %v3861
          %v4169 = vunpack.c.l.b16 %v3862
          %v4170 = vunpack.c.h.b16 %v3862
          %v4171 = vunpack.c.l.b16 %v3863
          %v4172 = vunpack.c.h.b16 %v3863
          %v4173 = vunpack.c.l.b16 %v3864
          %v4174 = vunpack.c.h.b16 %v3864
          %v4175 = vunpack.c.l.b16 %v3865
          %v4176 = vunpack.c.h.b16 %v3865
          %v4177 = vunpack.c.l.b16 %v3866
          %v4178 = vunpack.c.h.b16 %v3866
          %v4179 = vunpack.c.l.b16 %v3867
          %v4180 = vunpack.c.h.b16 %v3867
          %v4181 = vunpack.c.l.b16 %v3868
          %v4182 = vunpack.c.h.b16 %v3868
          %v4183 = vunpack.c.l.b16 %v3869
          %v4184 = vunpack.c.h.b16 %v3869
          %v4185 = vunpack.c.l.b16 %v3870
          %v4186 = vunpack.c.h.b16 %v3870
          %v4187 = vunpack.c.l.b16 %v3871
          %v4188 = vunpack.c.h.b16 %v3871
          %v4189 = vunpack.c.l.b16 %v3872
          %v4190 = vunpack.c.h.b16 %v3872
          %v4191 = vunpack.c.l.b16 %v3873
          %v4192 = vunpack.c.h.b16 %v3873
          %v4193 = vunpack.c.l.b16 %v3874
          %v4194 = vunpack.c.h.b16 %v3874
          %v4195 = vunpack.c.l.b16 %v3875
          %v4196 = vunpack.c.h.b16 %v3875
          %v4197 = vunpack.c.l.b16 %v3876
          %v4198 = vunpack.c.h.b16 %v3876
          %v4199 = vunpack.c.l.b16 %v3877
          %v4200 = vunpack.c.h.b16 %v3877
          %v4201 = vunpack.c.l.b16 %v3878
          %v4202 = vunpack.c.h.b16 %v3878
          %v4203 = vunpack.c.l.b16 %v3879
          %v4204 = vunpack.c.h.b16 %v3879
          %v4205 = vunpack.c.l.b16 %v3880
          %v4206 = vunpack.c.h.b16 %v3880
          %v4207 = vunpack.c.l.b16 %v3881
          %v4208 = vunpack.c.h.b16 %v3881
          %v4209 = vunpack.c.l.b16 %v3882
          %v4210 = vunpack.c.h.b16 %v3882
          %v4211 = vunpack.c.l.b16 %v3883
          %v4212 = vunpack.c.h.b16 %v3883
          %v4213 = vunpack.c.l.b16 %v3884
          %v4214 = vunpack.c.h.b16 %v3884
          %v4215 = vunpack.c.l.b16 %v3885
          %v4216 = vunpack.c.h.b16 %v3885
          %v4217 = vunpack.c.l.b16 %v3886
          %v4218 = vunpack.c.h.b16 %v3886
          %v4219 = vunpack.c.l.b16 %v3887
          %v4220 = vunpack.c.h.b16 %v3887
          %v4221 = vunpack.c.l.b16 %v3888
          %v4222 = vunpack.c.h.b16 %v3888
          %v4223 = vunpack.c.l.b16 %v3889
          %v4224 = vunpack.c.h.b16 %v3889
          %v4225 = vunpack.c.l.b16 %v3890
          %v4226 = vunpack.c.h.b16 %v3890
          %v4227 = vunpack.c.l.b16 %v3891
          %v4228 = vunpack.c.h.b16 %v3891
          %v4229 = vunpack.c.l.b16 %v3892
          %v4230 = vunpack.c.h.b16 %v3892
          %v4231 = vunpack.c.l.b16 %v3893
          %v4232 = vunpack.c.h.b16 %v3893
          %v4233 = vunpack.c.l.b16 %v3894
          %v4234 = vunpack.c.h.b16 %v3894
          %v4235 = vunpack.c.l.b16 %v3895
          %v4236 = vunpack.c.h.b16 %v3895
          %v4237 = vunpack.c.l.b16 %v3896
          %v4238 = vunpack.c.h.b16 %v3896
          %v4239 = vunpack.c.l.b16 %v3897
          %v4240 = vunpack.c.h.b16 %v3897
          %v4241 = vunpack.c.l.b16 %v3898
          %v4242 = vunpack.c.h.b16 %v3898
          %v4243 = vunpack.c.l.b16 %v3899
          %v4244 = vunpack.c.h.b16 %v3899
          %v4245 = vunpack.c.l.b16 %v3900
          %v4246 = vunpack.c.h.b16 %v3900
          %v4247 = vunpack.c.l.b16 %v3901
          %v4248 = vunpack.c.h.b16 %v3901
          %v4249 = vunpack.c.l.b16 %v3902
          %v4250 = vunpack.c.h.b16 %v3902
          %v4251 = vunpack.c.l.b16 %v3903
          %v4252 = vunpack.c.h.b16 %v3903
          %v4253 = vunpack.c.l.b16 %v3904
          %v4254 = vunpack.c.h.b16 %v3904
          %v4255 = vunpack.c.l.b16 %v3905
          %v4256 = vunpack.c.h.b16 %v3905
          %v4257 = vunpack.c.l.b16 %v3906
          %v4258 = vunpack.c.h.b16 %v3906
          %v4259 = vunpack.c.l.b16 %v3907
          %v4260 = vunpack.c.h.b16 %v3907
          %v4261 = vunpack.c.l.b16 %v3908
          %v4262 = vunpack.c.h.b16 %v3908
          %v4263 = vunpack.c.l.b16 %v3909
          %v4264 = vunpack.c.h.b16 %v3909
          %v4265 = vunpack.c.l.b16 %v3910
          %v4266 = vunpack.c.h.b16 %v3910
          %v4267 = vunpack.c.l.b16 %v3911
          %v4268 = vunpack.c.h.b16 %v3911
          %v4269 = vunpack.c.l.b16 %v3912
          %v4270 = vunpack.c.h.b16 %v3912
          %v4271 = vunpack.c.l.b16 %v3913
          %v4272 = vunpack.c.h.b16 %v3913
          %v4273 = vunpack.c.l.b16 %v3914
          %v4274 = vunpack.c.h.b16 %v3914
          %v4275 = vunpack.c.l.b16 %v3915
          %v4276 = vunpack.c.h.b16 %v3915
          %v4277 = vunpack.c.l.b16 %v3916
          %v4278 = vunpack.c.h.b16 %v3916
          %v4279 = vunpack.c.l.b16 %v3917
          %v4280 = vunpack.c.h.b16 %v3917
          %v4281 = vunpack.c.l.b16 %v3918
          %v4282 = vunpack.c.h.b16 %v3918
          %v4283 = vunpack.c.l.b16 %v3919
          %v4284 = vunpack.c.h.b16 %v3919
          %v4285 = vunpack.c.l.b16 %v3920
          %v4286 = vunpack.c.h.b16 %v3920
          %v4287 = vunpack.c.l.b16 %v3921
          %v4288 = vunpack.c.h.b16 %v3921
          %v4289 = vunpack.c.l.b16 %v3922
          %v4290 = vunpack.c.h.b16 %v3922
          %v4291 = vunpack.c.l.b16 %v3923
          %v4292 = vunpack.c.h.b16 %v3923
          %v4293 = vunpack.c.l.b16 %v3924
          %v4294 = vunpack.c.h.b16 %v3924
          %v4295 = vunpack.c.l.b16 %v3925
          %v4296 = vunpack.c.h.b16 %v3925
          %v4297 = vunpack.c.l.b16 %v3926
          %v4298 = vunpack.c.h.b16 %v3926
          %v4299 = vunpack.c.l.b16 %v3927
          %v4300 = vunpack.c.h.b16 %v3927
          %v4301 = vunpack.c.l.b16 %v3928
          %v4302 = vunpack.c.h.b16 %v3928
          %v4303 = vunpack.c.l.b16 %v3929
          %v4304 = vunpack.c.h.b16 %v3929
          %v4305 = vunpack.c.l.b16 %v3930
          %v4306 = vunpack.c.h.b16 %v3930
          %v4307 = vunpack.c.l.b16 %v3931
          %v4308 = vunpack.c.h.b16 %v3931
          %v4309 = vunpack.c.l.b16 %v3932
          %v4310 = vunpack.c.h.b16 %v3932
          %v4311 = vunpack.c.l.b16 %v3933
          %v4312 = vunpack.c.h.b16 %v3933
          %v4313 = vunpack.c.l.b16 %v3934
          %v4314 = vunpack.c.h.b16 %v3934
          %v4315 = vunpack.c.l.b16 %v3935
          %v4316 = vunpack.c.h.b16 %v3935
          %v4317 = vunpack.c.l.b16 %v3936
          %v4318 = vunpack.c.h.b16 %v3936
          %v4319 = vunpack.c.l.b16 %v3937
          %v4320 = vunpack.c.h.b16 %v3937
          %v4321 = vunpack.c.l.b16 %v3938
          %v4322 = vunpack.c.h.b16 %v3938
          %v4323 = vunpack.c.l.b16 %v3939
          %v4324 = vunpack.c.h.b16 %v3939
          %v4325 = vunpack.c.l.b16 %v3940
          %v4326 = vunpack.c.h.b16 %v3940
          %v4327 = vunpack.c.l.b16 %v3941
          %v4328 = vunpack.c.h.b16 %v3941
          %v4329 = vunpack.c.l.b16 %v3942
          %v4330 = vunpack.c.h.b16 %v3942
          %v4331 = vunpack.c.l.b16 %v3943
          %v4332 = vunpack.c.h.b16 %v3943
          %v4333 = vunpack.c.l.b16 %v3944
          %v4334 = vunpack.c.h.b16 %v3944
          %v4335 = vunpack.c.l.b16 %v3945
          %v4336 = vunpack.c.h.b16 %v3945
          %v4337 = vunpack.c.l.b16 %v3946
          %v4338 = vunpack.c.h.b16 %v3946
          %v4339 = vunpack.c.l.b16 %v3947
          %v4340 = vunpack.c.h.b16 %v3947
          %v4341 = vunpack.c.l.b16 %v3948
          %v4342 = vunpack.c.h.b16 %v3948
          %v4343 = vunpack.c.l.b16 %v3949
          %v4344 = vunpack.c.h.b16 %v3949
          %v4345 = vunpack.c.l.b16 %v3950
          %v4346 = vunpack.c.h.b16 %v3950
          %v4347 = vunpack.c.l.b16 %v3951
          %v4348 = vunpack.c.h.b16 %v3951
          %v4349 = vunpack.c.l.b16 %v3952
          %v4350 = vunpack.c.h.b16 %v3952
          %v4351 = vunpack.c.l.b16 %v3953
          %v4352 = vunpack.c.h.b16 %v3953
          %v4353 = vunpack.c.l.b16 %v3954
          %v4354 = vunpack.c.h.b16 %v3954
          %v4355 = vunpack.c.l.b16 %v3955
          %v4356 = vunpack.c.h.b16 %v3955
          %v4357 = vunpack.c.l.b16 %v3956
          %v4358 = vunpack.c.h.b16 %v3956
          %v4359 = vunpack.c.l.b16 %v3957
          %v4360 = vunpack.c.h.b16 %v3957
          %v4361 = vunpack.c.l.b16 %v3958
          %v4362 = vunpack.c.h.b16 %v3958
          %v4363 = vunpack.c.l.b16 %v3959
          %v4364 = vunpack.c.h.b16 %v3959
          %v4365 = vunpack.c.l.b16 %v3960
          %v4366 = vunpack.c.h.b16 %v3960
          %v4367 = vpack.c.b16 %v4115, %v4111
          %v4368 = vpack.c.b16 %v4116, %v4112
          %v4369 = vpack.c.b16 %v4117, %v4113
          %v4370 = vpack.c.b16 %v4118, %v4114
          %v4371 = vpack.c.b16 %v4123, %v4119
          %v4372 = vpack.c.b16 %v4124, %v4120
          %v4373 = vpack.c.b16 %v4125, %v4121
          %v4374 = vpack.c.b16 %v4126, %v4122
          %v4375 = vpack.c.b16 %v4131, %v4127
          %v4376 = vpack.c.b16 %v4132, %v4128
          %v4377 = vpack.c.b16 %v4133, %v4129
          %v4378 = vpack.c.b16 %v4134, %v4130
          %v4379 = vpack.c.b16 %v4139, %v4135
          %v4380 = vpack.c.b16 %v4140, %v4136
          %v4381 = vpack.c.b16 %v4141, %v4137
          %v4382 = vpack.c.b16 %v4142, %v4138
          %v4383 = vpack.c.b16 %v4147, %v4143
          %v4384 = vpack.c.b16 %v4148, %v4144
          %v4385 = vpack.c.b16 %v4149, %v4145
          %v4386 = vpack.c.b16 %v4150, %v4146
          %v4387 = vpack.c.b16 %v4155, %v4151
          %v4388 = vpack.c.b16 %v4156, %v4152
          %v4389 = vpack.c.b16 %v4157, %v4153
          %v4390 = vpack.c.b16 %v4158, %v4154
          %v4391 = vpack.c.b16 %v4163, %v4159
          %v4392 = vpack.c.b16 %v4164, %v4160
          %v4393 = vpack.c.b16 %v4165, %v4161
          %v4394 = vpack.c.b16 %v4166, %v4162
          %v4395 = vpack.c.b16 %v4171, %v4167
          %v4396 = vpack.c.b16 %v4172, %v4168
          %v4397 = vpack.c.b16 %v4173, %v4169
          %v4398 = vpack.c.b16 %v4174, %v4170
          %v4399 = vpack.c.b16 %v4179, %v4175
          %v4400 = vpack.c.b16 %v4180, %v4176
          %v4401 = vpack.c.b16 %v4181, %v4177
          %v4402 = vpack.c.b16 %v4182, %v4178
          %v4403 = vpack.c.b16 %v4187, %v4183
          %v4404 = vpack.c.b16 %v4188, %v4184
          %v4405 = vpack.c.b16 %v4189, %v4185
          %v4406 = vpack.c.b16 %v4190, %v4186
          %v4407 = vpack.c.b16 %v4195, %v4191
          %v4408 = vpack.c.b16 %v4196, %v4192
          %v4409 = vpack.c.b16 %v4197, %v4193
          %v4410 = vpack.c.b16 %v4198, %v4194
          %v4411 = vpack.c.b16 %v4203, %v4199
          %v4412 = vpack.c.b16 %v4204, %v4200
          %v4413 = vpack.c.b16 %v4205, %v4201
          %v4414 = vpack.c.b16 %v4206, %v4202
          %v4415 = vpack.c.b16 %v4211, %v4207
          %v4416 = vpack.c.b16 %v4212, %v4208
          %v4417 = vpack.c.b16 %v4213, %v4209
          %v4418 = vpack.c.b16 %v4214, %v4210
          %v4419 = vpack.c.b16 %v4219, %v4215
          %v4420 = vpack.c.b16 %v4220, %v4216
          %v4421 = vpack.c.b16 %v4221, %v4217
          %v4422 = vpack.c.b16 %v4222, %v4218
          %v4423 = vpack.c.b16 %v4227, %v4223
          %v4424 = vpack.c.b16 %v4228, %v4224
          %v4425 = vpack.c.b16 %v4229, %v4225
          %v4426 = vpack.c.b16 %v4230, %v4226
          %v4427 = vpack.c.b16 %v4235, %v4231
          %v4428 = vpack.c.b16 %v4236, %v4232
          %v4429 = vpack.c.b16 %v4237, %v4233
          %v4430 = vpack.c.b16 %v4238, %v4234
          %v4431 = vpack.c.b16 %v4243, %v4239
          %v4432 = vpack.c.b16 %v4244, %v4240
          %v4433 = vpack.c.b16 %v4245, %v4241
          %v4434 = vpack.c.b16 %v4246, %v4242
          %v4435 = vpack.c.b16 %v4251, %v4247
          %v4436 = vpack.c.b16 %v4252, %v4248
          %v4437 = vpack.c.b16 %v4253, %v4249
          %v4438 = vpack.c.b16 %v4254, %v4250
          %v4439 = vpack.c.b16 %v4259, %v4255
          %v4440 = vpack.c.b16 %v4260, %v4256
          %v4441 = vpack.c.b16 %v4261, %v4257
          %v4442 = vpack.c.b16 %v4262, %v4258
          %v4443 = vpack.c.b16 %v4267, %v4263
          %v4444 = vpack.c.b16 %v4268, %v4264
          %v4445 = vpack.c.b16 %v4269, %v4265
          %v4446 = vpack.c.b16 %v4270, %v4266
          %v4447 = vpack.c.b16 %v4275, %v4271
          %v4448 = vpack.c.b16 %v4276, %v4272
          %v4449 = vpack.c.b16 %v4277, %v4273
          %v4450 = vpack.c.b16 %v4278, %v4274
          %v4451 = vpack.c.b16 %v4283, %v4279
          %v4452 = vpack.c.b16 %v4284, %v4280
          %v4453 = vpack.c.b16 %v4285, %v4281
          %v4454 = vpack.c.b16 %v4286, %v4282
          %v4455 = vpack.c.b16 %v4291, %v4287
          %v4456 = vpack.c.b16 %v4292, %v4288
          %v4457 = vpack.c.b16 %v4293, %v4289
          %v4458 = vpack.c.b16 %v4294, %v4290
          %v4459 = vpack.c.b16 %v4299, %v4295
          %v4460 = vpack.c.b16 %v4300, %v4296
          %v4461 = vpack.c.b16 %v4301, %v4297
          %v4462 = vpack.c.b16 %v4302, %v4298
          %v4463 = vpack.c.b16 %v4307, %v4303
          %v4464 = vpack.c.b16 %v4308, %v4304
          %v4465 = vpack.c.b16 %v4309, %v4305
          %v4466 = vpack.c.b16 %v4310, %v4306
          %v4467 = vpack.c.b16 %v4315, %v4311
          %v4468 = vpack.c.b16 %v4316, %v4312
          %v4469 = vpack.c.b16 %v4317, %v4313
          %v4470 = vpack.c.b16 %v4318, %v4314
          %v4471 = vpack.c.b16 %v4323, %v4319
          %v4472 = vpack.c.b16 %v4324, %v4320
          %v4473 = vpack.c.b16 %v4325, %v4321
          %v4474 = vpack.c.b16 %v4326, %v4322
          %v4475 = vpack.c.b16 %v4331, %v4327
          %v4476 = vpack.c.b16 %v4332, %v4328
          %v4477 = vpack.c.b16 %v4333, %v4329
          %v4478 = vpack.c.b16 %v4334, %v4330
          %v4479 = vpack.c.b16 %v4339, %v4335
          %v4480 = vpack.c.b16 %v4340, %v4336
          %v4481 = vpack.c.b16 %v4341, %v4337
          %v4482 = vpack.c.b16 %v4342, %v4338
          %v4483 = vpack.c.b16 %v4347, %v4343
          %v4484 = vpack.c.b16 %v4348, %v4344
          %v4485 = vpack.c.b16 %v4349, %v4345
          %v4486 = vpack.c.b16 %v4350, %v4346
          %v4487 = vpack.c.b16 %v4355, %v4351
          %v4488 = vpack.c.b16 %v4356, %v4352
          %v4489 = vpack.c.b16 %v4357, %v4353
          %v4490 = vpack.c.b16 %v4358, %v4354
          %v4491 = vpack.c.b16 %v4363, %v4359
          %v4492 = vpack.c.b16 %v4364, %v4360
          %v4493 = vpack.c.b16 %v4365, %v4361
          %v4494 = vpack.c.b16 %v4366, %v4362
          %4623 = vmatprep.subr.bf16.mxu0 %v4396
          %4624 = vmatpush1.bf16.msra.mxu0 %v4395
          %4625 = vmatprep.subr.bf16.mxu0 %v4392
          %4626 = vmatpush1.bf16.msra.mxu0 %v4391
          %4627 = vmatprep.subr.bf16.mxu0 %v4388
          %4628 = vmatpush1.bf16.msra.mxu0 %v4387
          %4629 = vmatprep.subr.bf16.mxu0 %v4384
          %4630 = vmatpush1.bf16.msra.mxu0 %v4383
          %4631 = vmatprep.subr.bf16.mxu0 %v4380
          %4632 = vmatpush1.bf16.msra.mxu0 %v4379
          %4633 = vmatprep.subr.bf16.mxu0 %v4376
          %4634 = vmatpush1.bf16.msra.mxu0 %v4375
          %4635 = vmatprep.subr.bf16.mxu0 %v4372
          %4636 = vmatpush1.bf16.msra.mxu0 %v4371
          %4637 = vmatprep.subr.bf16.mxu0 %v4368
          %4638 = vmatpush1.bf16.msra.mxu0 %v4367
          %4639 = vmatprep.subr.bf16.mxu0 %v4428
          %4640 = vmatpush2.bf16.msra.mxu0 %v4427
          %4641 = vmatprep.subr.bf16.mxu0 %v4424
          %4642 = vmatpush2.bf16.msra.mxu0 %v4423
          %4643 = vmatprep.subr.bf16.mxu0 %v4420
          %4644 = vmatpush2.bf16.msra.mxu0 %v4419
          %4645 = vmatprep.subr.bf16.mxu0 %v4416
          %4646 = vmatpush2.bf16.msra.mxu0 %v4415
          %4647 = vmatprep.subr.bf16.mxu0 %v4412
          %4648 = vmatpush2.bf16.msra.mxu0 %v4411
          %4649 = vmatprep.subr.bf16.mxu0 %v4408
          %4650 = vmatpush2.bf16.msra.mxu0 %v4407
          %4651 = vmatprep.subr.bf16.mxu0 %v4404
          %4652 = vmatpush2.bf16.msra.mxu0 %v4403
          %4653 = vmatprep.subr.bf16.mxu0 %v4400
          %4654 = vmatpush2.bf16.msra.mxu0 %v4399
          %4655 = vmatprep.mubr.bf16.mxu0 %v3830
          %4656 = vmatmul.mubr.bf16.gmra.mxu0 %v3829
          %v4657 = vpop.f32.mrf.mxu0
          %v4658 = vadd.f32 %v3966, %v4657
          %v4659 = vpop.f32.mrf.mxu0
          %v4660 = vadd.f32 %v3970, %v4659
          %v4661 = vpop.f32.mrf.mxu0
          %v4662 = vpop.f32.mrf.mxu0
          %4663 = vdwg.mxu0
          %4664 = vmatprep.subr.bf16.mxu0 %v4460
          %4665 = vmatpush1.bf16.msra.mxu0 %v4459
          %4666 = vmatprep.subr.bf16.mxu0 %v4456
          %4667 = vmatpush1.bf16.msra.mxu0 %v4455
          %4668 = vmatprep.subr.bf16.mxu0 %v4452
          %4669 = vmatpush1.bf16.msra.mxu0 %v4451
          %4670 = vmatprep.subr.bf16.mxu0 %v4448
          %4671 = vmatpush1.bf16.msra.mxu0 %v4447
          %4672 = vmatprep.subr.bf16.mxu0 %v4444
          %4673 = vmatpush1.bf16.msra.mxu0 %v4443
          %4674 = vmatprep.subr.bf16.mxu0 %v4440
          %4675 = vmatpush1.bf16.msra.mxu0 %v4439
          %4676 = vmatprep.subr.bf16.mxu0 %v4436
          %4677 = vmatpush1.bf16.msra.mxu0 %v4435
          %4678 = vmatprep.subr.bf16.mxu0 %v4432
          %4679 = vmatpush1.bf16.msra.mxu0 %v4431
          %4680 = vmatprep.subr.bf16.mxu0 %v4492
          %4681 = vmatpush2.bf16.msra.mxu0 %v4491
          %4682 = vmatprep.subr.bf16.mxu0 %v4488
          %4683 = vmatpush2.bf16.msra.mxu0 %v4487
          %4684 = vmatprep.subr.bf16.mxu0 %v4484
          %4685 = vmatpush2.bf16.msra.mxu0 %v4483
          %4686 = vmatprep.subr.bf16.mxu0 %v4480
          %4687 = vmatpush2.bf16.msra.mxu0 %v4479
          %4688 = vmatprep.subr.bf16.mxu0 %v4476
          %4689 = vmatpush2.bf16.msra.mxu0 %v4475
          %4690 = vmatprep.subr.bf16.mxu0 %v4472
          %4691 = vmatpush2.bf16.msra.mxu0 %v4471
          %4692 = vmatprep.subr.bf16.mxu0 %v4468
          %4693 = vmatpush2.bf16.msra.mxu0 %v4467
          %4694 = vmatprep.subr.bf16.mxu0 %v4464
          %4695 = vmatpush2.bf16.msra.mxu0 %v4463
          %4696 = vmatprep.mubr.bf16.mxu0 %v3832
          %4697 = vmatmul.mubr.bf16.gmra.mxu0 %v3831
          %v4698 = vpop.f32.mrf.mxu0
          %v4699 = vadd.f32 %v4658, %v4698
          %v4700 = vpop.f32.mrf.mxu0
          %v4701 = vadd.f32 %v4660, %v4700
          %v4702 = vpop.f32.mrf.mxu0
          %v4703 = vpop.f32.mrf.mxu0
          %4704 = vdwg.mxu0
          %4705 = vmatprep.subr.bf16.mxu0 %v4398
          %4706 = vmatpush1.bf16.msra.mxu0 %v4397
          %4707 = vmatprep.subr.bf16.mxu0 %v4394
          %4708 = vmatpush1.bf16.msra.mxu0 %v4393
          %4709 = vmatprep.subr.bf16.mxu0 %v4390
          %4710 = vmatpush1.bf16.msra.mxu0 %v4389
          %4711 = vmatprep.subr.bf16.mxu0 %v4386
          %4712 = vmatpush1.bf16.msra.mxu0 %v4385
          %4713 = vmatprep.subr.bf16.mxu0 %v4382
          %4714 = vmatpush1.bf16.msra.mxu0 %v4381
          %4715 = vmatprep.subr.bf16.mxu0 %v4378
          %4716 = vmatpush1.bf16.msra.mxu0 %v4377
          %4717 = vmatprep.subr.bf16.mxu0 %v4374
          %4718 = vmatpush1.bf16.msra.mxu0 %v4373
          %4719 = vmatprep.subr.bf16.mxu0 %v4370
          %4720 = vmatpush1.bf16.msra.mxu0 %v4369
          %4721 = vmatprep.subr.bf16.mxu0 %v4430
          %4722 = vmatpush2.bf16.msra.mxu0 %v4429
          %4723 = vmatprep.subr.bf16.mxu0 %v4426
          %4724 = vmatpush2.bf16.msra.mxu0 %v4425
          %4725 = vmatprep.subr.bf16.mxu0 %v4422
          %4726 = vmatpush2.bf16.msra.mxu0 %v4421
          %4727 = vmatprep.subr.bf16.mxu0 %v4418
          %4728 = vmatpush2.bf16.msra.mxu0 %v4417
          %4729 = vmatprep.subr.bf16.mxu0 %v4414
          %4730 = vmatpush2.bf16.msra.mxu0 %v4413
          %4731 = vmatprep.subr.bf16.mxu0 %v4410
          %4732 = vmatpush2.bf16.msra.mxu0 %v4409
          %4733 = vmatprep.subr.bf16.mxu0 %v4406
          %4734 = vmatpush2.bf16.msra.mxu0 %v4405
          %4735 = vmatprep.subr.bf16.mxu0 %v4402
          %4736 = vmatpush2.bf16.msra.mxu0 %v4401
          %4737 = vmatprep.mubr.bf16.mxu0 %v3830
          %4738 = vmatmul.mubr.bf16.gmra.mxu0 %v3829
          %v4739 = vpop.f32.mrf.mxu0
          %v4740 = vadd.f32 %v3974, %v4739
          %v4741 = vpop.f32.mrf.mxu0
          %v4742 = vadd.f32 %v3978, %v4741
          %v4743 = vpop.f32.mrf.mxu0
          %v4744 = vpop.f32.mrf.mxu0
          %4745 = vdwg.mxu0
          %4746 = vmatprep.subr.bf16.mxu0 %v4462
          %4747 = vmatpush1.bf16.msra.mxu0 %v4461
          %4748 = vmatprep.subr.bf16.mxu0 %v4458
          %4749 = vmatpush1.bf16.msra.mxu0 %v4457
          %4750 = vmatprep.subr.bf16.mxu0 %v4454
          %4751 = vmatpush1.bf16.msra.mxu0 %v4453
          %4752 = vmatprep.subr.bf16.mxu0 %v4450
          %4753 = vmatpush1.bf16.msra.mxu0 %v4449
          %4754 = vmatprep.subr.bf16.mxu0 %v4446
          %4755 = vmatpush1.bf16.msra.mxu0 %v4445
          %4756 = vmatprep.subr.bf16.mxu0 %v4442
          %4757 = vmatpush1.bf16.msra.mxu0 %v4441
          %4758 = vmatprep.subr.bf16.mxu0 %v4438
          %4759 = vmatpush1.bf16.msra.mxu0 %v4437
          %4760 = vmatprep.subr.bf16.mxu0 %v4434
          %4761 = vmatpush1.bf16.msra.mxu0 %v4433
          %4762 = vmatprep.subr.bf16.mxu0 %v4494
          %4763 = vmatpush2.bf16.msra.mxu0 %v4493
          %4764 = vmatprep.subr.bf16.mxu0 %v4490
          %4765 = vmatpush2.bf16.msra.mxu0 %v4489
          %4766 = vmatprep.subr.bf16.mxu0 %v4486
          %4767 = vmatpush2.bf16.msra.mxu0 %v4485
          %4768 = vmatprep.subr.bf16.mxu0 %v4482
          %4769 = vmatpush2.bf16.msra.mxu0 %v4481
          %4770 = vmatprep.subr.bf16.mxu0 %v4478
          %4771 = vmatpush2.bf16.msra.mxu0 %v4477
          %4772 = vmatprep.subr.bf16.mxu0 %v4474
          %4773 = vmatpush2.bf16.msra.mxu0 %v4473
          %4774 = vmatprep.subr.bf16.mxu0 %v4470
          %4775 = vmatpush2.bf16.msra.mxu0 %v4469
          %4776 = vmatprep.subr.bf16.mxu0 %v4466
          %4777 = vmatpush2.bf16.msra.mxu0 %v4465
          %4778 = vmatprep.mubr.bf16.mxu0 %v3832
          %4779 = vmatmul.mubr.bf16.gmra.mxu0 %v3831
          %v4780 = vpop.f32.mrf.mxu0
          %v4781 = vadd.f32 %v4740, %v4780
          %v4782 = vpop.f32.mrf.mxu0
          %v4783 = vadd.f32 %v4742, %v4782
          %v4784 = vpop.f32.mrf.mxu0
          %v4785 = vpop.f32.mrf.mxu0
          %4786 = vdwg.mxu0
          %v4787 = vmax.f32 %v4699, 0.0
          %v4788 = vmax.f32 %v4701, 0.0
          %v4789 = vmax.f32 %v4781, 0.0
          %v4790 = vmax.f32 %v4783, 0.0
          %v4791 = vpack.c.bf16 %v4787, %v4787
          %v4792 = vpack.c.bf16 %v4788, %v4788
          %v4793 = vpack.c.bf16 %v4789, %v4789
          %v4794 = vpack.c.bf16 %v4790, %v4790
          %v4795 = vld [vmem:[#allocation17] sm:$0xf]
          %v4796 = vld [vmem:[#allocation17 + $0x4] sm:$0xf]
          %v4797 = vld [vmem:[#allocation17 + $0x8] sm:$0xf]
          %v4798 = vld [vmem:[#allocation17 + $0xc] sm:$0xf]
          %v4799 = vld [vmem:[#allocation17 + $0x10] sm:$0xf]
          %v4800 = vld [vmem:[#allocation17 + $0x14] sm:$0xf]
          %v4801 = vld [vmem:[#allocation17 + $0x18] sm:$0xf]
          %v4802 = vld [vmem:[#allocation17 + $0x1c] sm:$0xf]
          %v4803 = vld [vmem:[#allocation17 + $0x20] sm:$0xf]
          %v4804 = vld [vmem:[#allocation17 + $0x24] sm:$0xf]
          %v4805 = vld [vmem:[#allocation17 + $0x28] sm:$0xf]
          %v4806 = vld [vmem:[#allocation17 + $0x2c] sm:$0xf]
          %v4807 = vld [vmem:[#allocation17 + $0x30] sm:$0xf]
          %v4808 = vld [vmem:[#allocation17 + $0x34] sm:$0xf]
          %v4809 = vld [vmem:[#allocation17 + $0x38] sm:$0xf]
          %v4810 = vld [vmem:[#allocation17 + $0x3c] sm:$0xf]
          %v4811 = vld [vmem:[#allocation17 + $0x40] sm:$0xf]
          %v4812 = vld [vmem:[#allocation17 + $0x44] sm:$0xf]
          %v4813 = vld [vmem:[#allocation17 + $0x48] sm:$0xf]
          %v4814 = vld [vmem:[#allocation17 + $0x4c] sm:$0xf]
          %v4815 = vld [vmem:[#allocation17 + $0x50] sm:$0xf]
          %v4816 = vld [vmem:[#allocation17 + $0x54] sm:$0xf]
          %v4817 = vld [vmem:[#allocation17 + $0x58] sm:$0xf]
          %v4818 = vld [vmem:[#allocation17 + $0x5c] sm:$0xf]
          %v4819 = vld [vmem:[#allocation17 + $0x60] sm:$0xf]
          %v4820 = vld [vmem:[#allocation17 + $0x64] sm:$0xf]
          %v4821 = vld [vmem:[#allocation17 + $0x68] sm:$0xf]
          %v4822 = vld [vmem:[#allocation17 + $0x6c] sm:$0xf]
          %v4823 = vld [vmem:[#allocation17 + $0x70] sm:$0xf]
          %v4824 = vld [vmem:[#allocation17 + $0x74] sm:$0xf]
          %v4825 = vld [vmem:[#allocation17 + $0x78] sm:$0xf]
          %v4826 = vld [vmem:[#allocation17 + $0x7c] sm:$0xf]
          %v4827 = vld [vmem:[#allocation17 + $0x80] sm:$0xf]
          %v4828 = vld [vmem:[#allocation17 + $0x84] sm:$0xf]
          %v4829 = vld [vmem:[#allocation17 + $0x88] sm:$0xf]
          %v4830 = vld [vmem:[#allocation17 + $0x8c] sm:$0xf]
          %v4831 = vld [vmem:[#allocation17 + $0x90] sm:$0xf]
          %v4832 = vld [vmem:[#allocation17 + $0x94] sm:$0xf]
          %v4833 = vld [vmem:[#allocation17 + $0x98] sm:$0xf]
          %v4834 = vld [vmem:[#allocation17 + $0x9c] sm:$0xf]
          %v4835 = vld [vmem:[#allocation17 + $0xa0] sm:$0xf]
          %v4836 = vld [vmem:[#allocation17 + $0xa4] sm:$0xf]
          %v4837 = vld [vmem:[#allocation17 + $0xa8] sm:$0xf]
          %v4838 = vld [vmem:[#allocation17 + $0xac] sm:$0xf]
          %v4839 = vld [vmem:[#allocation17 + $0xb0] sm:$0xf]
          %v4840 = vld [vmem:[#allocation17 + $0xb4] sm:$0xf]
          %v4841 = vld [vmem:[#allocation17 + $0xb8] sm:$0xf]
          %v4842 = vld [vmem:[#allocation17 + $0xbc] sm:$0xf]
          %v4843 = vld [vmem:[#allocation17 + $0xc0] sm:$0xf]
          %v4844 = vld [vmem:[#allocation17 + $0xc4] sm:$0xf]
          %v4845 = vld [vmem:[#allocation17 + $0xc8] sm:$0xf]
          %v4846 = vld [vmem:[#allocation17 + $0xcc] sm:$0xf]
          %v4847 = vld [vmem:[#allocation17 + $0xd0] sm:$0xf]
          %v4848 = vld [vmem:[#allocation17 + $0xd4] sm:$0xf]
          %v4849 = vld [vmem:[#allocation17 + $0xd8] sm:$0xf]
          %v4850 = vld [vmem:[#allocation17 + $0xdc] sm:$0xf]
          %v4851 = vld [vmem:[#allocation17 + $0xe0] sm:$0xf]
          %v4852 = vld [vmem:[#allocation17 + $0xe4] sm:$0xf]
          %v4853 = vld [vmem:[#allocation17 + $0xe8] sm:$0xf]
          %v4854 = vld [vmem:[#allocation17 + $0xec] sm:$0xf]
          %v4855 = vld [vmem:[#allocation17 + $0xf0] sm:$0xf]
          %v4856 = vld [vmem:[#allocation17 + $0xf4] sm:$0xf]
          %v4857 = vld [vmem:[#allocation17 + $0xf8] sm:$0xf]
          %v4858 = vld [vmem:[#allocation17 + $0xfc] sm:$0xf]
          %v4859 = vld [vmem:[#allocation18] sm:$0x1]
          %v4861 = vlaneseq
          %v4862 = vshrl.u32 %v4861, 7
          %v4863 = vsub.s32 0, %v4862
          %v4864 = vrot.slane %v4859, %v4863
          %v4930 = vunpack.c.l.b16 %v4795
          %v4931 = vunpack.c.l.b16 %v4796
          %v4932 = vunpack.c.l.b16 %v4797
          %v4933 = vunpack.c.l.b16 %v4798
          %v4934 = vunpack.c.l.b16 %v4799
          %v4935 = vunpack.c.l.b16 %v4800
          %v4936 = vunpack.c.l.b16 %v4801
          %v4937 = vunpack.c.l.b16 %v4802
          %v4938 = vunpack.c.l.b16 %v4803
          %v4939 = vunpack.c.l.b16 %v4804
          %v4940 = vunpack.c.l.b16 %v4805
          %v4941 = vunpack.c.l.b16 %v4806
          %v4942 = vunpack.c.l.b16 %v4807
          %v4943 = vunpack.c.l.b16 %v4808
          %v4944 = vunpack.c.l.b16 %v4809
          %v4945 = vunpack.c.l.b16 %v4810
          %v4946 = vunpack.c.l.b16 %v4811
          %v4947 = vunpack.c.l.b16 %v4812
          %v4948 = vunpack.c.l.b16 %v4813
          %v4949 = vunpack.c.l.b16 %v4814
          %v4950 = vunpack.c.l.b16 %v4815
          %v4951 = vunpack.c.l.b16 %v4816
          %v4952 = vunpack.c.l.b16 %v4817
          %v4953 = vunpack.c.l.b16 %v4818
          %v4954 = vunpack.c.l.b16 %v4819
          %v4955 = vunpack.c.l.b16 %v4820
          %v4956 = vunpack.c.l.b16 %v4821
          %v4957 = vunpack.c.l.b16 %v4822
          %v4958 = vunpack.c.l.b16 %v4823
          %v4959 = vunpack.c.l.b16 %v4824
          %v4960 = vunpack.c.l.b16 %v4825
          %v4961 = vunpack.c.l.b16 %v4826
          %v4962 = vunpack.c.l.b16 %v4827
          %v4963 = vunpack.c.l.b16 %v4828
          %v4964 = vunpack.c.l.b16 %v4829
          %v4965 = vunpack.c.l.b16 %v4830
          %v4966 = vunpack.c.l.b16 %v4831
          %v4967 = vunpack.c.l.b16 %v4832
          %v4968 = vunpack.c.l.b16 %v4833
          %v4969 = vunpack.c.l.b16 %v4834
          %v4970 = vunpack.c.l.b16 %v4835
          %v4971 = vunpack.c.l.b16 %v4836
          %v4972 = vunpack.c.l.b16 %v4837
          %v4973 = vunpack.c.l.b16 %v4838
          %v4974 = vunpack.c.l.b16 %v4839
          %v4975 = vunpack.c.l.b16 %v4840
          %v4976 = vunpack.c.l.b16 %v4841
          %v4977 = vunpack.c.l.b16 %v4842
          %v4978 = vunpack.c.l.b16 %v4843
          %v4979 = vunpack.c.l.b16 %v4844
          %v4980 = vunpack.c.l.b16 %v4845
          %v4981 = vunpack.c.l.b16 %v4846
          %v4982 = vunpack.c.l.b16 %v4847
          %v4983 = vunpack.c.l.b16 %v4848
          %v4984 = vunpack.c.l.b16 %v4849
          %v4985 = vunpack.c.l.b16 %v4850
          %v4986 = vunpack.c.l.b16 %v4851
          %v4987 = vunpack.c.l.b16 %v4852
          %v4988 = vunpack.c.l.b16 %v4853
          %v4989 = vunpack.c.l.b16 %v4854
          %v4990 = vunpack.c.l.b16 %v4855
          %v4991 = vunpack.c.l.b16 %v4856
          %v4992 = vunpack.c.l.b16 %v4857
          %v4993 = vunpack.c.l.b16 %v4858
          %v4994 = vpack.c.b16 %v4931, %v4930
          %v4995 = vpack.c.b16 %v4933, %v4932
          %v4996 = vpack.c.b16 %v4935, %v4934
          %v4997 = vpack.c.b16 %v4937, %v4936
          %v4998 = vpack.c.b16 %v4939, %v4938
          %v4999 = vpack.c.b16 %v4941, %v4940
          %v5000 = vpack.c.b16 %v4943, %v4942
          %v5001 = vpack.c.b16 %v4945, %v4944
          %v5002 = vpack.c.b16 %v4947, %v4946
          %v5003 = vpack.c.b16 %v4949, %v4948
          %v5004 = vpack.c.b16 %v4951, %v4950
          %v5005 = vpack.c.b16 %v4953, %v4952
          %v5006 = vpack.c.b16 %v4955, %v4954
          %v5007 = vpack.c.b16 %v4957, %v4956
          %v5008 = vpack.c.b16 %v4959, %v4958
          %v5009 = vpack.c.b16 %v4961, %v4960
          %v5010 = vpack.c.b16 %v4963, %v4962
          %v5011 = vpack.c.b16 %v4965, %v4964
          %v5012 = vpack.c.b16 %v4967, %v4966
          %v5013 = vpack.c.b16 %v4969, %v4968
          %v5014 = vpack.c.b16 %v4971, %v4970
          %v5015 = vpack.c.b16 %v4973, %v4972
          %v5016 = vpack.c.b16 %v4975, %v4974
          %v5017 = vpack.c.b16 %v4977, %v4976
          %v5018 = vpack.c.b16 %v4979, %v4978
          %v5019 = vpack.c.b16 %v4981, %v4980
          %v5020 = vpack.c.b16 %v4983, %v4982
          %v5021 = vpack.c.b16 %v4985, %v4984
          %v5022 = vpack.c.b16 %v4987, %v4986
          %v5023 = vpack.c.b16 %v4989, %v4988
          %v5024 = vpack.c.b16 %v4991, %v4990
          %v5025 = vpack.c.b16 %v4993, %v4992
          %5058 = vmatprep.subr.bf16.mxu0 0
          %5059 = vmatpush1.bf16.msra.mxu0 %v5001
          %5060 = vmatprep.subr.bf16.mxu0 0
          %5061 = vmatpush1.bf16.msra.mxu0 %v5000
          %5062 = vmatprep.subr.bf16.mxu0 0
          %5063 = vmatpush1.bf16.msra.mxu0 %v4999
          %5064 = vmatprep.subr.bf16.mxu0 0
          %5065 = vmatpush1.bf16.msra.mxu0 %v4998
          %5066 = vmatprep.subr.bf16.mxu0 0
          %5067 = vmatpush1.bf16.msra.mxu0 %v4997
          %5068 = vmatprep.subr.bf16.mxu0 0
          %5069 = vmatpush1.bf16.msra.mxu0 %v4996
          %5070 = vmatprep.subr.bf16.mxu0 0
          %5071 = vmatpush1.bf16.msra.mxu0 %v4995
          %5072 = vmatprep.subr.bf16.mxu0 0
          %5073 = vmatpush1.bf16.msra.mxu0 %v4994
          %5074 = vmatprep.subr.bf16.mxu0 0
          %5075 = vmatpush2.bf16.msra.mxu0 %v5009
          %5076 = vmatprep.subr.bf16.mxu0 0
          %5077 = vmatpush2.bf16.msra.mxu0 %v5008
          %5078 = vmatprep.subr.bf16.mxu0 0
          %5079 = vmatpush2.bf16.msra.mxu0 %v5007
          %5080 = vmatprep.subr.bf16.mxu0 0
          %5081 = vmatpush2.bf16.msra.mxu0 %v5006
          %5082 = vmatprep.subr.bf16.mxu0 0
          %5083 = vmatpush2.bf16.msra.mxu0 %v5005
          %5084 = vmatprep.subr.bf16.mxu0 0
          %5085 = vmatpush2.bf16.msra.mxu0 %v5004
          %5086 = vmatprep.subr.bf16.mxu0 0
          %5087 = vmatpush2.bf16.msra.mxu0 %v5003
          %5088 = vmatprep.subr.bf16.mxu0 0
          %5089 = vmatpush2.bf16.msra.mxu0 %v5002
          %5090 = vmatprep.mubr.bf16.mxu0 %v4792
          %5091 = vmatmul.mubr.bf16.gmra.mxu0 %v4791
          %v5092 = vpop.f32.mrf.mxu0
          %v5093 = vadd.f32 %v4864, %v5092
          %v5094 = vpop.f32.mrf.mxu0
          %v5095 = vpop.f32.mrf.mxu0
          %v5096 = vpop.f32.mrf.mxu0
          %5097 = vdwg.mxu0
          %5098 = vmatprep.subr.bf16.mxu0 0
          %5099 = vmatpush1.bf16.msra.mxu0 %v5017
          %5100 = vmatprep.subr.bf16.mxu0 0
          %5101 = vmatpush1.bf16.msra.mxu0 %v5016
          %5102 = vmatprep.subr.bf16.mxu0 0
          %5103 = vmatpush1.bf16.msra.mxu0 %v5015
          %5104 = vmatprep.subr.bf16.mxu0 0
          %5105 = vmatpush1.bf16.msra.mxu0 %v5014
          %5106 = vmatprep.subr.bf16.mxu0 0
          %5107 = vmatpush1.bf16.msra.mxu0 %v5013
          %5108 = vmatprep.subr.bf16.mxu0 0
          %5109 = vmatpush1.bf16.msra.mxu0 %v5012
          %5110 = vmatprep.subr.bf16.mxu0 0
          %5111 = vmatpush1.bf16.msra.mxu0 %v5011
          %5112 = vmatprep.subr.bf16.mxu0 0
          %5113 = vmatpush1.bf16.msra.mxu0 %v5010
          %5114 = vmatprep.subr.bf16.mxu0 0
          %5115 = vmatpush2.bf16.msra.mxu0 %v5025
          %5116 = vmatprep.subr.bf16.mxu0 0
          %5117 = vmatpush2.bf16.msra.mxu0 %v5024
          %5118 = vmatprep.subr.bf16.mxu0 0
          %5119 = vmatpush2.bf16.msra.mxu0 %v5023
          %5120 = vmatprep.subr.bf16.mxu0 0
          %5121 = vmatpush2.bf16.msra.mxu0 %v5022
          %5122 = vmatprep.subr.bf16.mxu0 0
          %5123 = vmatpush2.bf16.msra.mxu0 %v5021
          %5124 = vmatprep.subr.bf16.mxu0 0
          %5125 = vmatpush2.bf16.msra.mxu0 %v5020
          %5126 = vmatprep.subr.bf16.mxu0 0
          %5127 = vmatpush2.bf16.msra.mxu0 %v5019
          %5128 = vmatprep.subr.bf16.mxu0 0
          %5129 = vmatpush2.bf16.msra.mxu0 %v5018
          %5130 = vmatprep.mubr.bf16.mxu0 %v4794
          %5131 = vmatmul.mubr.bf16.gmra.mxu0 %v4793
          %v5132 = vpop.f32.mrf.mxu0
          %v5133 = vadd.f32 %v5093, %v5132
          %v5134 = vpop.f32.mrf.mxu0
          %v5135 = vpop.f32.mrf.mxu0
          %v5136 = vpop.f32.mrf.mxu0
          %5137 = vdwg.mxu0
          %v5138 = vmax.f32 %v5133, 0.0
          %v5139 = vand.u32 2147483647, %v5133
          %v5140 = vsub.f32 0.0, %v5139
          %v5141 = vmul.f32 %v5140, 1.442695
          %v5142 = vpow.pop %v5141
          %v5143 = vadd.f32 %v5142, 1.0
          %v5144 = vlog2.pop %v5143
          %v5145 = vmul.f32 %v5144, 0.6931472
          %v5146 = vmul.f32 -0.5, %v5142
          %v5147 = vadd.f32 %v5146, 1.0
          %v5148 = vmul.f32 %v5147, %v5142
          %v5149 = vand.u32 2147483647, %v5142
          %vm5150 = vcmp.lt.f32.partialorder %v5149, 0.0004427343
          %v5151 = vsel %vm5150, %v5148, %v5145
          %v5152 = vadd.f32 %v5138, %v5151
          %vm5153 = vcmask 254976
          %v5154 = vsel %vm5153, %v5152, -inf
          %5155 = vmax.xlane.f32.xlu0 %v5154
          %v5156 = vpop.xlane.xlu0 %5155
          %v5157 = vrcp.pop %v5156
          %v5158 = vmul.f32 %v5152, %v5157
          %v5159 = vld [vmem:[%s1] sm:$0x3]
          %v5160 = vmul.f32 %v5158, %v5159
          %5161 = vst.msk [vmem:[#allocation20] sm:$0x3] %vm5153, %v5160
        $region116: #{_lambda_.1} parent=67 // pred_fallthru
          _
        // Predicated region
        $region117: #{_lambda_.1} parent=67 // pred_check
          %p5162 = pneg %p307
        $region118: #{_lambda_.1} parent=67 // pred_check_branch
          %5164 = sbr.rel (%p5162) target = $region120
        $region119: #{_lambda_.1} parent=67 // pred_region
          %s5166 = ssub.s32 32, 32
          %5167 = vsyncadd [#allocation5], %s5166
          %s5169 = sshll.u32 [#allocation20], 4
          %s5170 = int_to_ptr.vmem [resolvable:$true] %s5169
          %5172 = dma.vmem_to_hbm [thread:$0]  %s5170, 32, %s12, [#allocation5]
        $region120: #{_lambda_.1} parent=67 // pred_fallthru
          _
        // Predicated region
        $region121: #{_lambda_.1} parent=67 // pred_check
          %p5173 = pneg %p307
        $region122: #{_lambda_.1} parent=67 // pred_check_branch
          %5175 = sbr.rel (%p5173) target = $region124
        $region123: #{_lambda_.1} parent=67 // pred_region
          %5176 = dma.done [#allocation5], 32
        $region124: #{_lambda_.1} parent=67 // pred_fallthru
          _
      $region68: #{_lambda_.1} parent=5 // pred_fallthru
        _
      %p5177 = scmp.le.s32.totalorder 2, %s27
      // Predicated region
      $region125: #{_lambda_.1} parent=5 // pred_check
        %p5178 = pneg %p5177
      $region126: #{_lambda_.1} parent=5 // pred_check_branch
        %5180 = sbr.rel (%p5178) target = $region128
      $region127: #{_lambda_.1} parent=5 // pred_region
        %s5181 = ssub.s32 %s27, 2
      $region128: #{_lambda_.1} parent=5 // pred_fallthru
        _
    $region6: #{_lambda_.1} parent=1 // loop_footer
      %s31 = sadd.s32 1, %s27
    $region7: #{_lambda_.1} parent=1 // loop_footer_branch
      %26 = sbr.rel target = $region3
    $region8: #{_lambda_.1} parent=1 // loop_exit
      _
    %5182 = vsyncpa [#allocation4], 1
    %s5183 = scalar_lea.sflag [#allocation4], 1
    %5184 = vsyncpa %s5183, 1
    %5185 = vsyncpa [#allocation7], 1
    %5186 = vsyncpa [#allocation10], 1
    %5187 = vsyncpa [#allocation13], 1
    %5188 = vsyncpa [#allocation16], 1
    %5189 = vsyncpa [#allocation19], 1
    %5190 = vsyncpa [#allocation5], 1
    %s5191 = scalar_lea.sflag [#allocation5], 1
    %5192 = vsyncpa %s5191, 1

</llo_original>
